<compile_context>
chip_gen: v6e
topology: v6e:2x2x1
jax: 0.10.0
libtpu: 0.0.40
codegen_flags: <defaults>
</compile_context>

<pallas_src>
import functools

import jax
import jax.numpy as jnp
from jax.experimental import pallas as pl
from jax.experimental.pallas import tpu as pltpu

BN_EPS = 1e-3                      # torchvision BasicConv2d: BatchNorm2d(eps=0.001)
ACT_DTYPE = jnp.bfloat16           # activations / MXU operands (f32 accumulation)
_VMEM_LIMIT = 44 * 1024 * 1024     # <= ~48 MiB budget (v7x has 64 MiB/TC total)
_TM = 256                          # row-tile (multiple of 8 sublanes)


def _round_up(x, m):
    return (x + m - 1) // m * m


def _row_tiling(m, tile=_TM):
    tm = min(tile, _round_up(m, 8))
    return tm, _round_up(m, tm)


def _compiler_params(dimension_semantics=None):
    return pltpu.CompilerParams(dimension_semantics=dimension_semantics,
                                vmem_limit_bytes=_VMEM_LIMIT)


# ----------------------------- Pallas kernels ------------------------------

def _matmul_kernel(a_ref, w_ref, b_ref, o_ref, acc_ref, *, relu):
    """(tm, tk) @ (tk, cout), accumulated over the K grid axis into f32 scratch."""
    @pl.when(pl.program_id(2) == 0)
    def _init():
        acc_ref[...] = jnp.zeros_like(acc_ref)

    acc_ref[...] += jnp.dot(a_ref[...], w_ref[...],
                            preferred_element_type=jnp.float32)

    @pl.when(pl.program_id(2) == pl.num_programs(2) - 1)
    def _finalize():
        out = acc_ref[...] + b_ref[...]
        if relu:
            out = jnp.maximum(out, 0.0)
        o_ref[...] = out.astype(o_ref.dtype)


def _tapconv_kernel(*refs, n_taps, relu):
    """sum_t taps[t] @ w[t] + bias (+ReLU).  Tap reduction done in-register."""
    w_ref = refs[n_taps]
    b_ref = refs[n_taps + 1]
    o_ref = refs[n_taps + 2]
    acc = jnp.dot(refs[0][...], w_ref[0], preferred_element_type=jnp.float32)
    for t in range(1, n_taps):
        acc += jnp.dot(refs[t][...], w_ref[t],
                       preferred_element_type=jnp.float32)
    acc = acc + b_ref[...]
    if relu:
        acc = jnp.maximum(acc, 0.0)
    o_ref[...] = acc.astype(o_ref.dtype)


def _pool9_kernel(*refs, op):
    """Elementwise 9-way max / mean of 9 shifted-window operands."""
    o_ref = refs[-1]
    if op == "max":
        r = refs[0][...]
        for t in range(1, 9):
            r = jnp.maximum(r, refs[t][...])
        o_ref[...] = r
    else:  # average pool, count_include_pad=True (always divide by 9)
        r = refs[0][...].astype(jnp.float32)
        for t in range(1, 9):
            r = r + refs[t][...].astype(jnp.float32)
        o_ref[...] = (r * (1.0 / 9.0)).astype(o_ref.dtype)


def _head_kernel(x_ref, w_ref, b_ref, o_ref):
    """Adaptive avg-pool to 1x1 + Linear(2048 -> 1), fused."""
    pooled = jnp.mean(x_ref[...].astype(jnp.float32), axis=1)        # (N, C)
    o_ref[...] = (jnp.dot(pooled, w_ref[...],
                          preferred_element_type=jnp.float32) + b_ref[...])


# ------------------------------ op wrappers --------------------------------

@functools.partial(jax.jit, static_argnames=("relu",))
def _conv_1x1(x, w, b, *, relu=True):
    """Pointwise conv (+folded BN, +ReLU) as a tiled MXU matmul."""
    n, h, wd, cin = x.shape
    cout = w.shape[-1]
    m = n * h * wd
    a = x.reshape(m, cin).astype(ACT_DTYPE)
    w2 = w.reshape(cin, cout).astype(ACT_DTYPE)

    # K tiling (reduction axis is the last grid axis).
    if cin <= 512:
        tk, kpad = cin, cin
    else:
        tk = next((c for c in (512, 256, 128) if cin % c == 0), 128)
        kpad = _round_up(cin, tk)
    if kpad != cin:
        a = jnp.pad(a, ((0, 0), (0, kpad - cin)))
        w2 = jnp.pad(w2, ((0, kpad - cin), (0, 0)))

    tm, mpad = _row_tiling(m)
    if mpad != m:
        a = jnp.pad(a, ((0, mpad - m), (0, 0)))

    out = pl.pallas_call(
        functools.partial(_matmul_kernel, relu=relu),
        out_shape=jax.ShapeDtypeStruct((mpad, cout), ACT_DTYPE),
        grid_spec=pltpu.PrefetchScalarGridSpec(
            num_scalar_prefetch=0,
            grid=(mpad // tm, 1, kpad // tk),
            in_specs=[
                pl.BlockSpec((tm, tk), lambda i, j, k: (i, k)),
                pl.BlockSpec((tk, cout), lambda i, j, k: (k, j)),
                pl.BlockSpec((1, cout), lambda i, j, k: (0, j)),
            ],
            out_specs=pl.BlockSpec((tm, cout), lambda i, j, k: (i, j)),
            scratch_shapes=[pltpu.VMEM((tm, cout), jnp.float32)]),
        compiler_params=_compiler_params(("parallel", "parallel", "arbitrary")),
    )(a, w2, b.reshape(1, cout).astype(jnp.float32))
    return out[:m].reshape(n, h, wd, cout)


@functools.partial(jax.jit, static_argnames=("stride", "pad", "relu"))
def _conv_taps(x, w, b, *, stride, pad, relu=True):
    """k>1 conv: each of the kh*kw taps is a shifted/strided slice passed as its
    own operand; the tap reduction runs on the MXU inside one kernel invocation,
    so the (M, kh*kw*cin) im2col concat buffer never round-trips through HBM."""
    n, h, wd, cin = x.shape
    kh, kw, _, cout = w.shape
    sh, sw = stride
    ph, pw = pad
    oh = (h + 2 * ph - kh) // sh + 1
    ow = (wd + 2 * pw - kw) // sw + 1

    xp = jnp.pad(x, ((0, 0), (ph, ph), (pw, pw), (0, 0))) if (ph or pw) else x
    cin_p = _round_up(cin, 8)          # e.g. stem cin=3 -> 8: clean vreg tiles
    if cin_p != cin:
        xp = jnp.pad(xp, ((0, 0), (0, 0), (0, 0), (0, cin_p - cin)))
        w = jnp.pad(w, ((0, 0), (0, 0), (0, cin_p - cin), (0, 0)))

    m = n * oh * ow
    tm, mpad = _row_tiling(m)

    taps = []
    for i in range(kh):
        for j in range(kw):
            sl = jax.lax.slice(
                xp, (0, i, j, 0),
                (n, i + (oh - 1) * sh + 1, j + (ow - 1) * sw + 1, cin_p),
                (1, sh, sw, 1)).reshape(m, cin_p).astype(ACT_DTYPE)
            if mpad != m:
                sl = jnp.pad(sl, ((0, mpad - m), (0, 0)))
            taps.append(sl)

    n_taps = kh * kw
    wt = w.reshape(n_taps, cin_p, cout).astype(ACT_DTYPE)
    b2 = b.reshape(1, cout).astype(jnp.float32)

    tap_spec = pl.BlockSpec((tm, cin_p), lambda i, j: (i, 0))
    out = pl.pallas_call(
        functools.partial(_tapconv_kernel, n_taps=n_taps, relu=relu),
        out_shape=jax.ShapeDtypeStruct((mpad, cout), ACT_DTYPE),
        grid_spec=pltpu.PrefetchScalarGridSpec(
            num_scalar_prefetch=0,
            grid=(mpad // tm, 1),
            in_specs=[tap_spec] * n_taps + [
                pl.BlockSpec((n_taps, cin_p, cout), lambda i, j: (0, 0, 0)),
                pl.BlockSpec((1, cout), lambda i, j: (0, 0)),
            ],
            out_specs=pl.BlockSpec((tm, cout), lambda i, j: (i, j))),
        compiler_params=_compiler_params(("parallel", "parallel")),
    )(*taps, wt, b2)
    return out[:m].reshape(n, oh, ow, cout)


def conv_bn_relu(x, wb, *, stride=1, pad=0, relu=True):
    w, b = wb
    kh, kw = w.shape[0], w.shape[1]
    if isinstance(stride, int):
        stride = (stride, stride)
    if isinstance(pad, int):
        pad = (pad, pad)
    if kh == 1 and kw == 1 and stride == (1, 1) and pad == (0, 0):
        return _conv_1x1(x, w, b, relu=relu)
    return _conv_taps(x, w, b, stride=stride, pad=pad, relu=relu)


@functools.partial(jax.jit, static_argnames=("stride", "pad", "op"))
def _pool_3x3(x, *, stride, pad, op):
    n, h, wd, c = x.shape
    oh = (h + 2 * pad - 3) // stride + 1
    ow = (wd + 2 * pad - 3) // stride + 1
    # zero padding is only ever used by the avg pool (count_include_pad=True)
    xp = jnp.pad(x, ((0, 0), (pad, pad), (pad, pad), (0, 0))) if pad else x
    m = n * oh * ow
    tm, mpad = _row_tiling(m)
    wins = []
    for i in range(3):
        for j in range(3):
            sl = jax.lax.slice(
                xp, (0, i, j, 0),
                (n, i + (oh - 1) * stride + 1, j + (ow - 1) * stride + 1, c),
                (1, stride, stride, 1)).reshape(m, c)
            if mpad != m:
                sl = jnp.pad(sl, ((0, mpad - m), (0, 0)))
            wins.append(sl)
    out = pl.pallas_call(
        functools.partial(_pool9_kernel, op=op),
        out_shape=jax.ShapeDtypeStruct((mpad, c), x.dtype),
        grid_spec=pltpu.PrefetchScalarGridSpec(
            num_scalar_prefetch=0,
            grid=(mpad // tm,),
            in_specs=[pl.BlockSpec((tm, c), lambda i: (i, 0))] * 9,
            out_specs=pl.BlockSpec((tm, c), lambda i: (i, 0))),
        compiler_params=_compiler_params(("parallel",)),
    )(*wins)
    return out[:m].reshape(n, oh, ow, c)


def maxpool_3x3_s2(x):
    return _pool_3x3(x, stride=2, pad=0, op="max")


def avgpool_3x3_s1_p1(x):
    return _pool_3x3(x, stride=1, pad=1, op="avg")


@jax.jit
def avgpool_fc(x, fc_w, fc_b):
    """Global average pool + Linear(2048, 1), fused in one kernel."""
    n, h, wd, c = x.shape
    x2 = x.reshape(n, h * wd, c).astype(ACT_DTYPE)
    return pl.pallas_call(
        _head_kernel,
        out_shape=jax.ShapeDtypeStruct((n, 1), jnp.float32),
        compiler_params=_compiler_params(),
    )(x2, fc_w.reshape(c, 1).astype(jnp.float32),
      fc_b.reshape(1, 1).astype(jnp.float32))


# ----------------------------- parameter setup -----------------------------

def _bn_params(c):
    return dict(gamma=jnp.ones((c,), jnp.float32),
                beta=jnp.zeros((c,), jnp.float32),
                mean=jnp.zeros((c,), jnp.float32),
                var=jnp.ones((c,), jnp.float32))


def _fold_bn(w, bn):
    scale = bn["gamma"] / jnp.sqrt(bn["var"] + BN_EPS)
    return w * scale, bn["beta"] - bn["mean"] * scale


def _conv_w(key, kh, kw, cin, cout):
    fan_in = kh * kw * cin
    std = (2.0 / fan_in) ** 0.5
    return jax.random.normal(key, (kh, kw, cin, cout), jnp.float32) * std


def init_inception_v3_params(key):
    cnt = [0]

    def conv_p(cin, cout, k):
        cnt[0] += 1
        w = _conv_w(jax.random.fold_in(key, cnt[0]), k[0], k[1], cin, cout)
        return _fold_bn(w, _bn_params(cout))

    def block_a(cin, pool_feat):
        return {"b1x1": conv_p(cin, 64, (1, 1)),
                "b5x5_1": conv_p(cin, 48, (1, 1)),
                "b5x5_2": conv_p(48, 64, (5, 5)),
                "b3x3dbl_1": conv_p(cin, 64, (1, 1)),
                "b3x3dbl_2": conv_p(64, 96, (3, 3)),
                "b3x3dbl_3": conv_p(96, 96, (3, 3)),
                "bpool": conv_p(cin, pool_feat, (1, 1))}

    def block_b(cin):
        return {"b3x3": conv_p(cin, 384, (3, 3)),
                "b3x3dbl_1": conv_p(cin, 64, (1, 1)),
                "b3x3dbl_2": conv_p(64, 96, (3, 3)),
                "b3x3dbl_3": conv_p(96, 96, (3, 3))}

    def block_c(cin, c7):
        return {"b1x1": conv_p(cin, 192, (1, 1)),
                "b7x7_1": conv_p(cin, c7, (1, 1)),
                "b7x7_2": conv_p(c7, c7, (1, 7)),
                "b7x7_3": conv_p(c7, 192, (7, 1)),
                "b7x7dbl_1": conv_p(cin, c7, (1, 1)),
                "b7x7dbl_2": conv_p(c7, c7, (7, 1)),
                "b7x7dbl_3": conv_p(c7, c7, (1, 7)),
                "b7x7dbl_4": conv_p(c7, c7, (7, 1)),
                "b7x7dbl_5": conv_p(c7, 192, (1, 7)),
                "bpool": conv_p(cin, 192, (1, 1))}

    def block_d(cin):
        return {"b3x3_1": conv_p(cin, 192, (1, 1)),
                "b3x3_2": conv_p(192, 320, (3, 3)),
                "b7x7x3_1": conv_p(cin, 192, (1, 1)),
                "b7x7x3_2": conv_p(192, 192, (1, 7)),
                "b7x7x3_3": conv_p(192, 192, (7, 1)),
                "b7x7x3_4": conv_p(192, 192, (3, 3))}

    def block_e(cin):
        return {"b1x1": conv_p(cin, 320, (1, 1)),
                "b3x3_1": conv_p(cin, 384, (1, 1)),
                "b3x3_2a": conv_p(384, 384, (1, 3)),
                "b3x3_2b": conv_p(384, 384, (3, 1)),
                "b3x3dbl_1": conv_p(cin, 448, (1, 1)),
                "b3x3dbl_2": conv_p(448, 384, (3, 3)),
                "b3x3dbl_3a": conv_p(384, 384, (1, 3)),
                "b3x3dbl_3b": conv_p(384, 384, (3, 1)),
                "bpool": conv_p(cin, 192, (1, 1))}

    p = {}
    p["Conv2d_1a_3x3"] = conv_p(3, 32, (3, 3))
    p["Conv2d_2a_3x3"] = conv_p(32, 32, (3, 3))
    p["Conv2d_2b_3x3"] = conv_p(32, 64, (3, 3))
    p["Conv2d_3b_1x1"] = conv_p(64, 80, (1, 1))
    p["Conv2d_4a_3x3"] = conv_p(80, 192, (3, 3))
    p["Mixed_5b"] = block_a(192, 32)
    p["Mixed_5c"] = block_a(256, 64)
    p["Mixed_5d"] = block_a(288, 64)
    p["Mixed_6a"] = block_b(288)
    p["Mixed_6b"] = block_c(768, 128)
    p["Mixed_6c"] = block_c(768, 160)
    p["Mixed_6d"] = block_c(768, 160)
    p["Mixed_6e"] = block_c(768, 192)
    p["Mixed_7a"] = block_d(768)
    p["Mixed_7b"] = block_e(1280)
    p["Mixed_7c"] = block_e(2048)

    cnt[0] += 1
    p["fc_w"] = (jax.random.normal(jax.random.fold_in(key, cnt[0]),
                                   (1, 2048), jnp.float32) / (2048.0 ** 0.5))
    p["fc_b"] = jnp.zeros((1,), jnp.float32)

    # transform_input=True (pretrained): per-channel affine input rescale is
    # folded into Conv2d_1a (valid conv -> exact fold, zero runtime cost).
    a = jnp.array([0.229, 0.224, 0.225], jnp.float32) / 0.5
    c = (jnp.array([0.485, 0.456, 0.406], jnp.float32) - 0.5) / 0.5
    w1, b1 = p["Conv2d_1a_3x3"]
    p["Conv2d_1a_3x3"] = (w1 * a[None, None, :, None],
                          b1 + jnp.einsum("hwio,i->o", w1, c))
    return p


# -------------------------------- forward ----------------------------------

def _inception_a(x, p):
    b1 = conv_bn_relu(x, p["b1x1"])
    b5 = conv_bn_relu(x, p["b5x5_1"])
    b5 = conv_bn_relu(b5, p["b5x5_2"], pad=2)
    bd = conv_bn_relu(x, p["b3x3dbl_1"])
    bd = conv_bn_relu(bd, p["b3x3dbl_2"], pad=1)
    bd = conv_bn_relu(bd, p["b3x3dbl_3"], pad=1)
    bp = conv_bn_relu(avgpool_3x3_s1_p1(x), p["bpool"])
    return jnp.concatenate([b1, b5, bd, bp], axis=-1)


def _inception_b(x, p):
    b3 = conv_bn_relu(x, p["b3x3"], stride=2)
    bd = conv_bn_relu(x, p["b3x3dbl_1"])
    bd = conv_bn_relu(bd, p["b3x3dbl_2"], pad=1)
    bd = conv_bn_relu(bd, p["b3x3dbl_3"], stride=2)
    bp = maxpool_3x3_s2(x)
    return jnp.concatenate([b3, bd, bp], axis=-1)


def _inception_c(x, p):
    b1 = conv_bn_relu(x, p["b1x1"])
    b7 = conv_bn_relu(x, p["b7x7_1"])
    b7 = conv_bn_relu(b7, p["b7x7_2"], pad=(0, 3))
    b7 = conv_bn_relu(b7, p["b7x7_3"], pad=(3, 0))
    bd = conv_bn_relu(x, p["b7x7dbl_1"])
    bd = conv_bn_relu(bd, p["b7x7dbl_2"], pad=(3, 0))
    bd = conv_bn_relu(bd, p["b7x7dbl_3"], pad=(0, 3))
    bd = conv_bn_relu(bd, p["b7x7dbl_4"], pad=(3, 0))
    bd = conv_bn_relu(bd, p["b7x7dbl_5"], pad=(0, 3))
    bp = conv_bn_relu(avgpool_3x3_s1_p1(x), p["bpool"])
    return jnp.concatenate([b1, b7, bd, bp], axis=-1)


def _inception_d(x, p):
    b3 = conv_bn_relu(x, p["b3x3_1"])
    b3 = conv_bn_relu(b3, p["b3x3_2"], stride=2)
    b7 = conv_bn_relu(x, p["b7x7x3_1"])
    b7 = conv_bn_relu(b7, p["b7x7x3_2"], pad=(0, 3))
    b7 = conv_bn_relu(b7, p["b7x7x3_3"], pad=(3, 0))
    b7 = conv_bn_relu(b7, p["b7x7x3_4"], stride=2)
    bp = maxpool_3x3_s2(x)
    return jnp.concatenate([b3, b7, bp], axis=-1)


def _inception_e(x, p):
    b1 = conv_bn_relu(x, p["b1x1"])
    b3 = conv_bn_relu(x, p["b3x3_1"])
    b3 = jnp.concatenate([conv_bn_relu(b3, p["b3x3_2a"], pad=(0, 1)),
                          conv_bn_relu(b3, p["b3x3_2b"], pad=(1, 0))], axis=-1)
    bd = conv_bn_relu(x, p["b3x3dbl_1"])
    bd = conv_bn_relu(bd, p["b3x3dbl_2"], pad=1)
    bd = jnp.concatenate([conv_bn_relu(bd, p["b3x3dbl_3a"], pad=(0, 1)),
                          conv_bn_relu(bd, p["b3x3dbl_3b"], pad=(1, 0))], axis=-1)
    bp = conv_bn_relu(avgpool_3x3_s1_p1(x), p["bpool"])
    return jnp.concatenate([b1, b3, bd, bp], axis=-1)


def inception_v3_added_forward(params, x_nchw):
    """Eval-mode InceptionV3 forward with the Linear(2048, 1) head."""
    # layout: input is NCHW (PyTorch); convert once to NHWC for the kernels.
    x = jnp.transpose(x_nchw, (0, 2, 3, 1)).astype(ACT_DTYPE)

    x = conv_bn_relu(x, params["Conv2d_1a_3x3"], stride=2)     # 3 -> 32
    x = conv_bn_relu(x, params["Conv2d_2a_3x3"])               # 32 -> 32
    x = conv_bn_relu(x, params["Conv2d_2b_3x3"], pad=1)        # 32 -> 64
    x = maxpool_3x3_s2(x)
    x = conv_bn_relu(x, params["Conv2d_3b_1x1"])               # 64 -> 80
    x = conv_bn_relu(x, params["Conv2d_4a_3x3"])               # 80 -> 192
    x = maxpool_3x3_s2(x)

    x = _inception_a(x, params["Mixed_5b"])                    # -> 256
    x = _inception_a(x, params["Mixed_5c"])                    # -> 288
    x = _inception_a(x, params["Mixed_5d"])                    # -> 288
    x = _inception_b(x, params["Mixed_6a"])                    # -> 768
    x = _inception_c(x, params["Mixed_6b"])
    x = _inception_c(x, params["Mixed_6c"])
    x = _inception_c(x, params["Mixed_6d"])
    x = _inception_c(x, params["Mixed_6e"])
    # TODO(synk): AuxLogits head is training-only in torchvision InceptionV3;
    # this is the eval-mode inference path (dropout is also a no-op in eval).
    x = _inception_d(x, params["Mixed_7a"])                    # -> 1280
    x = _inception_e(x, params["Mixed_7b"])                    # -> 2048
    x = _inception_e(x, params["Mixed_7c"])                    # -> 2048

    return avgpool_fc(x, params["fc_w"], params["fc_b"])       # (N, 1)


# --------------------------------- main -------------------------------------

if __name__ == "__main__":
    key = jax.random.PRNGKey(0)
    pkey, xkey = jax.random.split(key)

    params = init_inception_v3_params(pkey)
    # 75x75 is the smallest spatial size InceptionV3's stride schedule admits
    # (torchvision asserts H, W >= 75); batch=2 keeps the demo small.
    x = jax.random.normal(xkey, (2, 3, 75, 75), jnp.float32)   # NCHW like torch

    preds = inception_v3_added_forward(params, x)
    preds = jax.block_until_ready(preds)

    assert preds.shape == (2, 1), preds.shape
    assert preds.dtype == jnp.float32
    print("KERNEL_OK")
</pallas_src>

<mosaic_0001>
module attributes {stable_mosaic.version = 11 : i64} {
  func.func @_tapconv_kernel(%arg0: i32, %arg1: i32, %arg2: memref<256x8xbf16, #tpu.memory_space<vmem>>, %arg3: memref<256x8xbf16, #tpu.memory_space<vmem>>, %arg4: memref<256x8xbf16, #tpu.memory_space<vmem>>, %arg5: memref<256x8xbf16, #tpu.memory_space<vmem>>, %arg6: memref<256x8xbf16, #tpu.memory_space<vmem>>, %arg7: memref<256x8xbf16, #tpu.memory_space<vmem>>, %arg8: memref<256x8xbf16, #tpu.memory_space<vmem>>, %arg9: memref<256x8xbf16, #tpu.memory_space<vmem>>, %arg10: memref<256x8xbf16, #tpu.memory_space<vmem>>, %arg11: memref<9x8x32xbf16, #tpu.memory_space<vmem>>, %arg12: memref<1x32xf32, #tpu.memory_space<vmem>>, %arg13: memref<256x32xbf16, #tpu.memory_space<vmem>>) attributes {dimension_semantics = [#tpu.dimension_semantics<parallel>, #tpu.dimension_semantics<parallel>], iteration_bounds = array<i64: 11, 1>, scalar_prefetch = 0 : i64, scratch_operands = 0 : i64, tpu.core_type = #tpu.core_type<tc>, window_params = [{transform_indices = @transform_0, window_bounds = array<i64: 256, 8>}, {transform_indices = @transform_1, window_bounds = array<i64: 256, 8>}, {transform_indices = @transform_2, window_bounds = array<i64: 256, 8>}, {transform_indices = @transform_3, window_bounds = array<i64: 256, 8>}, {transform_indices = @transform_4, window_bounds = array<i64: 256, 8>}, {transform_indices = @transform_5, window_bounds = array<i64: 256, 8>}, {transform_indices = @transform_6, window_bounds = array<i64: 256, 8>}, {transform_indices = @transform_7, window_bounds = array<i64: 256, 8>}, {transform_indices = @transform_8, window_bounds = array<i64: 256, 8>}, {pipeline_mode = #tpu.pipeline_mode<synchronous>, transform_indices = @transform_9, window_bounds = array<i64: 9, 8, 32>}, {pipeline_mode = #tpu.pipeline_mode<synchronous>, transform_indices = @transform_10, window_bounds = array<i64: 1, 32>}, {transform_indices = @transform_11, window_bounds = array<i64: 256, 32>}]} {
    %c0 = arith.constant 0 : index
    %c0_0 = arith.constant 0 : index
    %0 = vector.load %arg2[%c0, %c0_0] : memref<256x8xbf16, #tpu.memory_space<vmem>>, vector<256x8xbf16>
    %c0_1 = arith.constant 0 : index
    %c0_2 = arith.constant 0 : index
    %c0_3 = arith.constant 0 : index
    %1 = vector.load %arg11[%c0_1, %c0_2, %c0_3] : memref<9x8x32xbf16, #tpu.memory_space<vmem>>, vector<1x8x32xbf16>
    %2 = vector.shape_cast %1 : vector<1x8x32xbf16> to vector<8x32xbf16>
    %cst = arith.constant dense<0.000000e+00> : vector<256x32xf32>
    %3 = tpu.matmul %0, %2, %cst {dimension_numbers = #tpu.dot_dimension_numbers<[1], [0], [0], [1], [0, 0, 1, 1], [], []>} : vector<256x8xbf16>, vector<8x32xbf16>, vector<256x32xf32> -> vector<256x32xf32>
    %c0_4 = arith.constant 0 : index
    %c0_5 = arith.constant 0 : index
    %4 = vector.load %arg3[%c0_4, %c0_5] : memref<256x8xbf16, #tpu.memory_space<vmem>>, vector<256x8xbf16>
    %c1 = arith.constant 1 : index
    %c0_6 = arith.constant 0 : index
    %c0_7 = arith.constant 0 : index
    %5 = vector.load %arg11[%c1, %c0_6, %c0_7] : memref<9x8x32xbf16, #tpu.memory_space<vmem>>, vector<1x8x32xbf16>
    %6 = vector.shape_cast %5 : vector<1x8x32xbf16> to vector<8x32xbf16>
    %cst_8 = arith.constant dense<0.000000e+00> : vector<256x32xf32>
    %7 = tpu.matmul %4, %6, %cst_8 {dimension_numbers = #tpu.dot_dimension_numbers<[1], [0], [0], [1], [0, 0, 1, 1], [], []>} : vector<256x8xbf16>, vector<8x32xbf16>, vector<256x32xf32> -> vector<256x32xf32>
    %8 = arith.addf %3, %7 : vector<256x32xf32>
    %c0_9 = arith.constant 0 : index
    %c0_10 = arith.constant 0 : index
    %9 = vector.load %arg4[%c0_9, %c0_10] : memref<256x8xbf16, #tpu.memory_space<vmem>>, vector<256x8xbf16>
    %c2 = arith.constant 2 : index
    %c0_11 = arith.constant 0 : index
    %c0_12 = arith.constant 0 : index
    %10 = vector.load %arg11[%c2, %c0_11, %c0_12] : memref<9x8x32xbf16, #tpu.memory_space<vmem>>, vector<1x8x32xbf16>
    %11 = vector.shape_cast %10 : vector<1x8x32xbf16> to vector<8x32xbf16>
    %cst_13 = arith.constant dense<0.000000e+00> : vector<256x32xf32>
    %12 = tpu.matmul %9, %11, %cst_13 {dimension_numbers = #tpu.dot_dimension_numbers<[1], [0], [0], [1], [0, 0, 1, 1], [], []>} : vector<256x8xbf16>, vector<8x32xbf16>, vector<256x32xf32> -> vector<256x32xf32>
    %13 = arith.addf %8, %12 : vector<256x32xf32>
    %c0_14 = arith.constant 0 : index
    %c0_15 = arith.constant 0 : index
    %14 = vector.load %arg5[%c0_14, %c0_15] : memref<256x8xbf16, #tpu.memory_space<vmem>>, vector<256x8xbf16>
    %c3 = arith.constant 3 : index
    %c0_16 = arith.constant 0 : index
    %c0_17 = arith.constant 0 : index
    %15 = vector.load %arg11[%c3, %c0_16, %c0_17] : memref<9x8x32xbf16, #tpu.memory_space<vmem>>, vector<1x8x32xbf16>
    %16 = vector.shape_cast %15 : vector<1x8x32xbf16> to vector<8x32xbf16>
    %cst_18 = arith.constant dense<0.000000e+00> : vector<256x32xf32>
    %17 = tpu.matmul %14, %16, %cst_18 {dimension_numbers = #tpu.dot_dimension_numbers<[1], [0], [0], [1], [0, 0, 1, 1], [], []>} : vector<256x8xbf16>, vector<8x32xbf16>, vector<256x32xf32> -> vector<256x32xf32>
    %18 = arith.addf %13, %17 : vector<256x32xf32>
    %c0_19 = arith.constant 0 : index
    %c0_20 = arith.constant 0 : index
    %19 = vector.load %arg6[%c0_19, %c0_20] : memref<256x8xbf16, #tpu.memory_space<vmem>>, vector<256x8xbf16>
    %c4 = arith.constant 4 : index
    %c0_21 = arith.constant 0 : index
    %c0_22 = arith.constant 0 : index
    %20 = vector.load %arg11[%c4, %c0_21, %c0_22] : memref<9x8x32xbf16, #tpu.memory_space<vmem>>, vector<1x8x32xbf16>
    %21 = vector.shape_cast %20 : vector<1x8x32xbf16> to vector<8x32xbf16>
    %cst_23 = arith.constant dense<0.000000e+00> : vector<256x32xf32>
    %22 = tpu.matmul %19, %21, %cst_23 {dimension_numbers = #tpu.dot_dimension_numbers<[1], [0], [0], [1], [0, 0, 1, 1], [], []>} : vector<256x8xbf16>, vector<8x32xbf16>, vector<256x32xf32> -> vector<256x32xf32>
    %23 = arith.addf %18, %22 : vector<256x32xf32>
    %c0_24 = arith.constant 0 : index
    %c0_25 = arith.constant 0 : index
    %24 = vector.load %arg7[%c0_24, %c0_25] : memref<256x8xbf16, #tpu.memory_space<vmem>>, vector<256x8xbf16>
    %c5 = arith.constant 5 : index
    %c0_26 = arith.constant 0 : index
    %c0_27 = arith.constant 0 : index
    %25 = vector.load %arg11[%c5, %c0_26, %c0_27] : memref<9x8x32xbf16, #tpu.memory_space<vmem>>, vector<1x8x32xbf16>
    %26 = vector.shape_cast %25 : vector<1x8x32xbf16> to vector<8x32xbf16>
    %cst_28 = arith.constant dense<0.000000e+00> : vector<256x32xf32>
    %27 = tpu.matmul %24, %26, %cst_28 {dimension_numbers = #tpu.dot_dimension_numbers<[1], [0], [0], [1], [0, 0, 1, 1], [], []>} : vector<256x8xbf16>, vector<8x32xbf16>, vector<256x32xf32> -> vector<256x32xf32>
    %28 = arith.addf %23, %27 : vector<256x32xf32>
    %c0_29 = arith.constant 0 : index
    %c0_30 = arith.constant 0 : index
    %29 = vector.load %arg8[%c0_29, %c0_30] : memref<256x8xbf16, #tpu.memory_space<vmem>>, vector<256x8xbf16>
    %c6 = arith.constant 6 : index
    %c0_31 = arith.constant 0 : index
    %c0_32 = arith.constant 0 : index
    %30 = vector.load %arg11[%c6, %c0_31, %c0_32] : memref<9x8x32xbf16, #tpu.memory_space<vmem>>, vector<1x8x32xbf16>
    %31 = vector.shape_cast %30 : vector<1x8x32xbf16> to vector<8x32xbf16>
    %cst_33 = arith.constant dense<0.000000e+00> : vector<256x32xf32>
    %32 = tpu.matmul %29, %31, %cst_33 {dimension_numbers = #tpu.dot_dimension_numbers<[1], [0], [0], [1], [0, 0, 1, 1], [], []>} : vector<256x8xbf16>, vector<8x32xbf16>, vector<256x32xf32> -> vector<256x32xf32>
    %33 = arith.addf %28, %32 : vector<256x32xf32>
    %c0_34 = arith.constant 0 : index
    %c0_35 = arith.constant 0 : index
    %34 = vector.load %arg9[%c0_34, %c0_35] : memref<256x8xbf16, #tpu.memory_space<vmem>>, vector<256x8xbf16>
    %c7 = arith.constant 7 : index
    %c0_36 = arith.constant 0 : index
    %c0_37 = arith.constant 0 : index
    %35 = vector.load %arg11[%c7, %c0_36, %c0_37] : memref<9x8x32xbf16, #tpu.memory_space<vmem>>, vector<1x8x32xbf16>
    %36 = vector.shape_cast %35 : vector<1x8x32xbf16> to vector<8x32xbf16>
    %cst_38 = arith.constant dense<0.000000e+00> : vector<256x32xf32>
    %37 = tpu.matmul %34, %36, %cst_38 {dimension_numbers = #tpu.dot_dimension_numbers<[1], [0], [0], [1], [0, 0, 1, 1], [], []>} : vector<256x8xbf16>, vector<8x32xbf16>, vector<256x32xf32> -> vector<256x32xf32>
    %38 = arith.addf %33, %37 : vector<256x32xf32>
    %c0_39 = arith.constant 0 : index
    %c0_40 = arith.constant 0 : index
    %39 = vector.load %arg10[%c0_39, %c0_40] : memref<256x8xbf16, #tpu.memory_space<vmem>>, vector<256x8xbf16>
    %c8 = arith.constant 8 : index
    %c0_41 = arith.constant 0 : index
    %c0_42 = arith.constant 0 : index
    %40 = vector.load %arg11[%c8, %c0_41, %c0_42] : memref<9x8x32xbf16, #tpu.memory_space<vmem>>, vector<1x8x32xbf16>
    %41 = vector.shape_cast %40 : vector<1x8x32xbf16> to vector<8x32xbf16>
    %cst_43 = arith.constant dense<0.000000e+00> : vector<256x32xf32>
    %42 = tpu.matmul %39, %41, %cst_43 {dimension_numbers = #tpu.dot_dimension_numbers<[1], [0], [0], [1], [0, 0, 1, 1], [], []>} : vector<256x8xbf16>, vector<8x32xbf16>, vector<256x32xf32> -> vector<256x32xf32>
    %43 = arith.addf %38, %42 : vector<256x32xf32>
    %c0_44 = arith.constant 0 : index
    %c0_45 = arith.constant 0 : index
    %44 = vector.load %arg12[%c0_44, %c0_45] : memref<1x32xf32, #tpu.memory_space<vmem>>, vector<1x32xf32>
    %45 = vector.broadcast %44 : vector<1x32xf32> to vector<256x32xf32>
    %46 = arith.addf %43, %45 : vector<256x32xf32>
    %cst_46 = arith.constant 0.000000e+00 : f32
    %47 = vector.broadcast %cst_46 : f32 to vector<256x32xf32>
    %48 = arith.maximumf %46, %47 : vector<256x32xf32>
    %49 = arith.truncf %48 : vector<256x32xf32> to vector<256x32xbf16>
    %c0_47 = arith.constant 0 : index
    %c0_48 = arith.constant 0 : index
    %50 = vector.load %arg13[%c0_47, %c0_48] : memref<256x32xbf16, #tpu.memory_space<vmem>>, vector<256x32xbf16>
    tpu.vector_store %arg13[%c0_47, %c0_48], %49 {strides = array<i32>} : memref<256x32xbf16, #tpu.memory_space<vmem>>, vector<256x32xbf16>,
    return
  }
  func.func @transform_0(%arg0: i32, %arg1: i32) -> (i32, i32) {
    %c0_i32 = arith.constant 0 : i32
    %c0_i32_0 = arith.constant 0 : i32
    return %arg0, %c0_i32 : i32, i32
  }
  func.func @transform_1(%arg0: i32, %arg1: i32) -> (i32, i32) {
    %c0_i32 = arith.constant 0 : i32
    %c0_i32_0 = arith.constant 0 : i32
    return %arg0, %c0_i32 : i32, i32
  }
  func.func @transform_2(%arg0: i32, %arg1: i32) -> (i32, i32) {
    %c0_i32 = arith.constant 0 : i32
    %c0_i32_0 = arith.constant 0 : i32
    return %arg0, %c0_i32 : i32, i32
  }
  func.func @transform_3(%arg0: i32, %arg1: i32) -> (i32, i32) {
    %c0_i32 = arith.constant 0 : i32
    %c0_i32_0 = arith.constant 0 : i32
    return %arg0, %c0_i32 : i32, i32
  }
  func.func @transform_4(%arg0: i32, %arg1: i32) -> (i32, i32) {
    %c0_i32 = arith.constant 0 : i32
    %c0_i32_0 = arith.constant 0 : i32
    return %arg0, %c0_i32 : i32, i32
  }
  func.func @transform_5(%arg0: i32, %arg1: i32) -> (i32, i32) {
    %c0_i32 = arith.constant 0 : i32
    %c0_i32_0 = arith.constant 0 : i32
    return %arg0, %c0_i32 : i32, i32
  }
  func.func @transform_6(%arg0: i32, %arg1: i32) -> (i32, i32) {
    %c0_i32 = arith.constant 0 : i32
    %c0_i32_0 = arith.constant 0 : i32
    return %arg0, %c0_i32 : i32, i32
  }
  func.func @transform_7(%arg0: i32, %arg1: i32) -> (i32, i32) {
    %c0_i32 = arith.constant 0 : i32
    %c0_i32_0 = arith.constant 0 : i32
    return %arg0, %c0_i32 : i32, i32
  }
  func.func @transform_8(%arg0: i32, %arg1: i32) -> (i32, i32) {
    %c0_i32 = arith.constant 0 : i32
    %c0_i32_0 = arith.constant 0 : i32
    return %arg0, %c0_i32 : i32, i32
  }
  func.func @transform_9(%arg0: i32, %arg1: i32) -> (i32, i32, i32) {
    %c0_i32 = arith.constant 0 : i32
    %c0_i32_0 = arith.constant 0 : i32
    %c0_i32_1 = arith.constant 0 : i32
    %c0_i32_2 = arith.constant 0 : i32
    return %c0_i32, %c0_i32_0, %c0_i32_1 : i32, i32, i32
  }
  func.func @transform_10(%arg0: i32, %arg1: i32) -> (i32, i32) {
    %c0_i32 = arith.constant 0 : i32
    %c0_i32_0 = arith.constant 0 : i32
    %c0_i32_1 = arith.constant 0 : i32
    return %c0_i32, %c0_i32_0 : i32, i32
  }
  func.func @transform_11(%arg0: i32, %arg1: i32) -> (i32, i32) {
    %c0_i32 = arith.constant 0 : i32
    return %arg0, %arg1 : i32, i32
  }
}

</mosaic_0001>

<llo_original>
// kernel: _conv_taps.1
$region0: #{_conv_taps.1}
  #allocation0 [shape = 'u32[]', space=smem, size = 0x4, offset = 0x4, fixed_abs, tag = 'smem constant byte address 0x4 - core index']
  #allocation1 [shape = 'u32[144,128]{1,0:T(1,128)}', space=vmem, size = 0x12000, scoped, tag = 'internal scratch']
  %s0 = inlined_call_operand.vmem [shape: bf16[2816,8], index: 0, kind: input, shape index: {}]
  %s1 = inlined_call_operand.vmem [shape: bf16[2816,8], index: 1, kind: input, shape index: {}]
  %s2 = inlined_call_operand.vmem [shape: bf16[2816,8], index: 2, kind: input, shape index: {}]
  %s3 = inlined_call_operand.vmem [shape: bf16[2816,8], index: 3, kind: input, shape index: {}]
  %s4 = inlined_call_operand.vmem [shape: bf16[2816,8], index: 4, kind: input, shape index: {}]
  %s5 = inlined_call_operand.vmem [shape: bf16[2816,8], index: 5, kind: input, shape index: {}]
  %s6 = inlined_call_operand.vmem [shape: bf16[2816,8], index: 6, kind: input, shape index: {}]
  %s7 = inlined_call_operand.vmem [shape: bf16[2816,8], index: 7, kind: input, shape index: {}]
  %s8 = inlined_call_operand.vmem [shape: bf16[2816,8], index: 8, kind: input, shape index: {}]
  %s9 = inlined_call_operand.vmem [shape: bf16[9,8,32], index: 9, kind: input, shape index: {}]
  %s10 = inlined_call_operand.vmem [shape: f32[1,32], index: 10, kind: input, shape index: {}]
  %s11 = inlined_call_operand.vmem [shape: bf16[2816,32], index: 11, kind: output, shape index: {}]
  %s12 = sld [smem:[#allocation0]]
  $region77: #{_conv_taps.1} parent=0
    _
  %s14 = ssub.s32 1, %s12
  %s15 = scalar_select 0, %s14, %s12
  loop: start=0, step=1, limit=13
  $region2: #{_conv_taps.1} parent=0 // loop_pre_header
    _
  $region3: #{_conv_taps.1} parent=0 // loop_header
    %s17 = sphi 0, %s21
    %p18 = scmp.ge.s32.totalorder %s17, 13
    %s24 = sphi 0, %s36
    %s25 = sphi 0, %s32
    %s26 = sphi 0, %s24
    %s27 = sphi 0, %s25
    %s28 = sphi 0, %s26
    %s29 = sphi 0, %s27
    %s39 = sphi 0, %s41
    %s42 = sphi 0, %s39
    %s43 = sphi 0, %s42
    %s59 = sphi 0, %s43
    %s65 = sphi 0, %s67
    %s68 = sphi 0, %s65
    %s69 = sphi 0, %s68
    %s85 = sphi 0, %s69
    %s91 = sphi 0, %s93
    %s94 = sphi 0, %s91
    %s95 = sphi 0, %s94
    %s111 = sphi 0, %s95
    %s117 = sphi 0, %s119
    %s120 = sphi 0, %s117
    %s121 = sphi 0, %s120
    %s137 = sphi 0, %s121
    %s143 = sphi 0, %s145
    %s146 = sphi 0, %s143
    %s147 = sphi 0, %s146
    %s163 = sphi 0, %s147
    %s169 = sphi 0, %s171
    %s172 = sphi 0, %s169
    %s173 = sphi 0, %s172
    %s189 = sphi 0, %s173
    %s195 = sphi 0, %s197
    %s198 = sphi 0, %s195
    %s199 = sphi 0, %s198
    %s215 = sphi 0, %s199
    %s221 = sphi 0, %s223
    %s224 = sphi 0, %s221
    %s225 = sphi 0, %s224
    %s241 = sphi 0, %s225
    %s247 = sphi 0, %s249
    %s250 = sphi 0, %s247
    %s251 = sphi 0, %s250
    %s267 = sphi 0, %s251
    %s271 = sphi 0, %s271
    %s273 = sphi 0, %s271
    %s274 = sphi 0, %s273
    %s288 = sphi 0, %s274
    %s292 = sphi 0, %s292
    %s294 = sphi 0, %s292
    %s295 = sphi 0, %s294
    %s309 = sphi 0, %s295
    %s317 = sphi 0, %s319
    %s320 = sphi 0, %s317
    %s321 = sphi 0, %s320
    %s337 = sphi 0, %s321
  $region4: #{_conv_taps.1} parent=0 // loop_header_branch
    %20 = sbr.rel (%p18) target = $region8
  $region5: #{_conv_taps.1} parent=0 // loop_body
    %s22 = ssub.s32 %s17, 1
    %s23 = ssub.s32 %s17, 2
    %s30 = sadd.s32 1, %s25
    %p31 = scmp.ge.s32.totalorder %s30, 1
    %s32 = scalar_select %p31, 0, %s30
    %s33 = sadd.s32 1, %s24
    %s34 = scalar_select %p31, %s33, %s24
    %p35 = scmp.ge.s32.totalorder %s34, 11
    %s36 = scalar_select %p35, 0, %s34
    %s37 = ssub.s32 %s24, %s36
    %p38 = scmp.eq.s32.totalorder %s37, 0
    %s40 = sadd.s32 %s39, 1
    %s41 = scalar_select %p38, %s39, %s40
    %p44 = pneg %p38
    %p45 = scmp.eq.s32.totalorder %s17, 10
    %p46 = por %p44, %p45
    %p47 = scmp.ne.s32.totalorder %s39, %s42
    %p48 = scmp.eq.s32.totalorder %s17, 0
    %p49 = por %p47, %p48
    %p50 = scmp.ne.s32.totalorder %s39, %s42
    %p51 = scmp.eq.s32.totalorder %s22, 10
    %p52 = por %p50, %p51
    %p53 = scmp.ne.s32.totalorder %s42, %s43
    %p54 = scmp.eq.s32.totalorder %s22, 0
    %p55 = por %p53, %p54
    %p56 = scmp.ne.s32.totalorder %s42, %s43
    %p57 = scmp.eq.s32.totalorder %s23, 10
    %p58 = por %p56, %p57
    %p60 = scmp.ne.s32.totalorder %s43, %s59
    %p61 = scmp.eq.s32.totalorder %s23, 0
    %p62 = por %p60, %p61
    %s63 = ssub.s32 %s24, %s36
    %p64 = scmp.eq.s32.totalorder %s63, 0
    %s66 = sadd.s32 %s65, 1
    %s67 = scalar_select %p64, %s65, %s66
    %p70 = pneg %p64
    %p71 = scmp.eq.s32.totalorder %s17, 10
    %p72 = por %p70, %p71
    %p73 = scmp.ne.s32.totalorder %s65, %s68
    %p74 = scmp.eq.s32.totalorder %s17, 0
    %p75 = por %p73, %p74
    %p76 = scmp.ne.s32.totalorder %s65, %s68
    %p77 = scmp.eq.s32.totalorder %s22, 10
    %p78 = por %p76, %p77
    %p79 = scmp.ne.s32.totalorder %s68, %s69
    %p80 = scmp.eq.s32.totalorder %s22, 0
    %p81 = por %p79, %p80
    %p82 = scmp.ne.s32.totalorder %s68, %s69
    %p83 = scmp.eq.s32.totalorder %s23, 10
    %p84 = por %p82, %p83
    %p86 = scmp.ne.s32.totalorder %s69, %s85
    %p87 = scmp.eq.s32.totalorder %s23, 0
    %p88 = por %p86, %p87
    %s89 = ssub.s32 %s24, %s36
    %p90 = scmp.eq.s32.totalorder %s89, 0
    %s92 = sadd.s32 %s91, 1
    %s93 = scalar_select %p90, %s91, %s92
    %p96 = pneg %p90
    %p97 = scmp.eq.s32.totalorder %s17, 10
    %p98 = por %p96, %p97
    %p99 = scmp.ne.s32.totalorder %s91, %s94
    %p100 = scmp.eq.s32.totalorder %s17, 0
    %p101 = por %p99, %p100
    %p102 = scmp.ne.s32.totalorder %s91, %s94
    %p103 = scmp.eq.s32.totalorder %s22, 10
    %p104 = por %p102, %p103
    %p105 = scmp.ne.s32.totalorder %s94, %s95
    %p106 = scmp.eq.s32.totalorder %s22, 0
    %p107 = por %p105, %p106
    %p108 = scmp.ne.s32.totalorder %s94, %s95
    %p109 = scmp.eq.s32.totalorder %s23, 10
    %p110 = por %p108, %p109
    %p112 = scmp.ne.s32.totalorder %s95, %s111
    %p113 = scmp.eq.s32.totalorder %s23, 0
    %p114 = por %p112, %p113
    %s115 = ssub.s32 %s24, %s36
    %p116 = scmp.eq.s32.totalorder %s115, 0
    %s118 = sadd.s32 %s117, 1
    %s119 = scalar_select %p116, %s117, %s118
    %p122 = pneg %p116
    %p123 = scmp.eq.s32.totalorder %s17, 10
    %p124 = por %p122, %p123
    %p125 = scmp.ne.s32.totalorder %s117, %s120
    %p126 = scmp.eq.s32.totalorder %s17, 0
    %p127 = por %p125, %p126
    %p128 = scmp.ne.s32.totalorder %s117, %s120
    %p129 = scmp.eq.s32.totalorder %s22, 10
    %p130 = por %p128, %p129
    %p131 = scmp.ne.s32.totalorder %s120, %s121
    %p132 = scmp.eq.s32.totalorder %s22, 0
    %p133 = por %p131, %p132
    %p134 = scmp.ne.s32.totalorder %s120, %s121
    %p135 = scmp.eq.s32.totalorder %s23, 10
    %p136 = por %p134, %p135
    %p138 = scmp.ne.s32.totalorder %s121, %s137
    %p139 = scmp.eq.s32.totalorder %s23, 0
    %p140 = por %p138, %p139
    %s141 = ssub.s32 %s24, %s36
    %p142 = scmp.eq.s32.totalorder %s141, 0
    %s144 = sadd.s32 %s143, 1
    %s145 = scalar_select %p142, %s143, %s144
    %p148 = pneg %p142
    %p149 = scmp.eq.s32.totalorder %s17, 10
    %p150 = por %p148, %p149
    %p151 = scmp.ne.s32.totalorder %s143, %s146
    %p152 = scmp.eq.s32.totalorder %s17, 0
    %p153 = por %p151, %p152
    %p154 = scmp.ne.s32.totalorder %s143, %s146
    %p155 = scmp.eq.s32.totalorder %s22, 10
    %p156 = por %p154, %p155
    %p157 = scmp.ne.s32.totalorder %s146, %s147
    %p158 = scmp.eq.s32.totalorder %s22, 0
    %p159 = por %p157, %p158
    %p160 = scmp.ne.s32.totalorder %s146, %s147
    %p161 = scmp.eq.s32.totalorder %s23, 10
    %p162 = por %p160, %p161
    %p164 = scmp.ne.s32.totalorder %s147, %s163
    %p165 = scmp.eq.s32.totalorder %s23, 0
    %p166 = por %p164, %p165
    %s167 = ssub.s32 %s24, %s36
    %p168 = scmp.eq.s32.totalorder %s167, 0
    %s170 = sadd.s32 %s169, 1
    %s171 = scalar_select %p168, %s169, %s170
    %p174 = pneg %p168
    %p175 = scmp.eq.s32.totalorder %s17, 10
    %p176 = por %p174, %p175
    %p177 = scmp.ne.s32.totalorder %s169, %s172
    %p178 = scmp.eq.s32.totalorder %s17, 0
    %p179 = por %p177, %p178
    %p180 = scmp.ne.s32.totalorder %s169, %s172
    %p181 = scmp.eq.s32.totalorder %s22, 10
    %p182 = por %p180, %p181
    %p183 = scmp.ne.s32.totalorder %s172, %s173
    %p184 = scmp.eq.s32.totalorder %s22, 0
    %p185 = por %p183, %p184
    %p186 = scmp.ne.s32.totalorder %s172, %s173
    %p187 = scmp.eq.s32.totalorder %s23, 10
    %p188 = por %p186, %p187
    %p190 = scmp.ne.s32.totalorder %s173, %s189
    %p191 = scmp.eq.s32.totalorder %s23, 0
    %p192 = por %p190, %p191
    %s193 = ssub.s32 %s24, %s36
    %p194 = scmp.eq.s32.totalorder %s193, 0
    %s196 = sadd.s32 %s195, 1
    %s197 = scalar_select %p194, %s195, %s196
    %p200 = pneg %p194
    %p201 = scmp.eq.s32.totalorder %s17, 10
    %p202 = por %p200, %p201
    %p203 = scmp.ne.s32.totalorder %s195, %s198
    %p204 = scmp.eq.s32.totalorder %s17, 0
    %p205 = por %p203, %p204
    %p206 = scmp.ne.s32.totalorder %s195, %s198
    %p207 = scmp.eq.s32.totalorder %s22, 10
    %p208 = por %p206, %p207
    %p209 = scmp.ne.s32.totalorder %s198, %s199
    %p210 = scmp.eq.s32.totalorder %s22, 0
    %p211 = por %p209, %p210
    %p212 = scmp.ne.s32.totalorder %s198, %s199
    %p213 = scmp.eq.s32.totalorder %s23, 10
    %p214 = por %p212, %p213
    %p216 = scmp.ne.s32.totalorder %s199, %s215
    %p217 = scmp.eq.s32.totalorder %s23, 0
    %p218 = por %p216, %p217
    %s219 = ssub.s32 %s24, %s36
    %p220 = scmp.eq.s32.totalorder %s219, 0
    %s222 = sadd.s32 %s221, 1
    %s223 = scalar_select %p220, %s221, %s222
    %p226 = pneg %p220
    %p227 = scmp.eq.s32.totalorder %s17, 10
    %p228 = por %p226, %p227
    %p229 = scmp.ne.s32.totalorder %s221, %s224
    %p230 = scmp.eq.s32.totalorder %s17, 0
    %p231 = por %p229, %p230
    %p232 = scmp.ne.s32.totalorder %s221, %s224
    %p233 = scmp.eq.s32.totalorder %s22, 10
    %p234 = por %p232, %p233
    %p235 = scmp.ne.s32.totalorder %s224, %s225
    %p236 = scmp.eq.s32.totalorder %s22, 0
    %p237 = por %p235, %p236
    %p238 = scmp.ne.s32.totalorder %s224, %s225
    %p239 = scmp.eq.s32.totalorder %s23, 10
    %p240 = por %p238, %p239
    %p242 = scmp.ne.s32.totalorder %s225, %s241
    %p243 = scmp.eq.s32.totalorder %s23, 0
    %p244 = por %p242, %p243
    %s245 = ssub.s32 %s24, %s36
    %p246 = scmp.eq.s32.totalorder %s245, 0
    %s248 = sadd.s32 %s247, 1
    %s249 = scalar_select %p246, %s247, %s248
    %p252 = pneg %p246
    %p253 = scmp.eq.s32.totalorder %s17, 10
    %p254 = por %p252, %p253
    %p255 = scmp.ne.s32.totalorder %s247, %s250
    %p256 = scmp.eq.s32.totalorder %s17, 0
    %p257 = por %p255, %p256
    %p258 = scmp.ne.s32.totalorder %s247, %s250
    %p259 = scmp.eq.s32.totalorder %s22, 10
    %p260 = por %p258, %p259
    %p261 = scmp.ne.s32.totalorder %s250, %s251
    %p262 = scmp.eq.s32.totalorder %s22, 0
    %p263 = por %p261, %p262
    %p264 = scmp.ne.s32.totalorder %s250, %s251
    %p265 = scmp.eq.s32.totalorder %s23, 10
    %p266 = por %p264, %p265
    %p268 = scmp.ne.s32.totalorder %s251, %s267
    %p269 = scmp.eq.s32.totalorder %s23, 0
    %p270 = por %p268, %p269
    %s272 = sadd.s32 %s271, 1
    %p275 = scmp.eq.s32.totalorder %s17, 10
    %p276 = scmp.ne.s32.totalorder %s271, %s273
    %p277 = scmp.eq.s32.totalorder %s17, 0
    %p278 = por %p276, %p277
    %p279 = scmp.ne.s32.totalorder %s271, %s273
    %p280 = scmp.eq.s32.totalorder %s22, 10
    %p281 = por %p279, %p280
    %p282 = scmp.ne.s32.totalorder %s273, %s274
    %p283 = scmp.eq.s32.totalorder %s22, 0
    %p284 = por %p282, %p283
    %p285 = scmp.ne.s32.totalorder %s273, %s274
    %p286 = scmp.eq.s32.totalorder %s23, 10
    %p287 = por %p285, %p286
    %p289 = scmp.ne.s32.totalorder %s274, %s288
    %p290 = scmp.eq.s32.totalorder %s23, 0
    %p291 = por %p289, %p290
    %s293 = sadd.s32 %s292, 1
    %p296 = scmp.eq.s32.totalorder %s17, 10
    %p297 = scmp.ne.s32.totalorder %s292, %s294
    %p298 = scmp.eq.s32.totalorder %s17, 0
    %p299 = por %p297, %p298
    %p300 = scmp.ne.s32.totalorder %s292, %s294
    %p301 = scmp.eq.s32.totalorder %s22, 10
    %p302 = por %p300, %p301
    %p303 = scmp.ne.s32.totalorder %s294, %s295
    %p304 = scmp.eq.s32.totalorder %s22, 0
    %p305 = por %p303, %p304
    %p306 = scmp.ne.s32.totalorder %s294, %s295
    %p307 = scmp.eq.s32.totalorder %s23, 10
    %p308 = por %p306, %p307
    %p310 = scmp.ne.s32.totalorder %s295, %s309
    %p311 = scmp.eq.s32.totalorder %s23, 0
    %p312 = por %p310, %p311
    %s313 = ssub.s32 %s24, %s36
    %s314 = ssub.s32 %s25, %s32
    %s315 = sor.u32 %s313, %s314
    %p316 = scmp.eq.s32.totalorder %s315, 0
    %s318 = sadd.s32 %s317, 1
    %s319 = scalar_select %p316, %s317, %s318
    %p322 = pneg %p316
    %p323 = scmp.eq.s32.totalorder %s17, 10
    %p324 = por %p322, %p323
    %p325 = scmp.ne.s32.totalorder %s317, %s320
    %p326 = scmp.eq.s32.totalorder %s17, 0
    %p327 = por %p325, %p326
    %p328 = scmp.ne.s32.totalorder %s317, %s320
    %p329 = scmp.eq.s32.totalorder %s22, 10
    %p330 = por %p328, %p329
    %p331 = scmp.ne.s32.totalorder %s320, %s321
    %p332 = scmp.eq.s32.totalorder %s22, 0
    %p333 = por %p331, %p332
    %p334 = scmp.ne.s32.totalorder %s320, %s321
    %p335 = scmp.eq.s32.totalorder %s23, 10
    %p336 = por %p334, %p335
    %p338 = scmp.ne.s32.totalorder %s321, %s337
    %p339 = scmp.eq.s32.totalorder %s23, 0
    %p340 = por %p338, %p339
    %p341 = scmp.le.s32.totalorder 1, %s17
    %p342 = scmp.lt.s32.totalorder %s17, 12
    %p343 = pnand %p341, %p342
    %p344 = pneg %p343
    // Predicated region
    $region9: #{_conv_taps.1} parent=5 // pred_check
      _
    $region10: #{_conv_taps.1} parent=5 // pred_check_branch
      %346 = sbr.rel (%p343) target = $region12
    $region11: #{_conv_taps.1} parent=5 // pred_region
      %s347 = ssub.s32 %s17, 1
      // Predicated region
      $region13: #{_conv_taps.1} parent=11 // pred_check
        %p348 = pneg %p284
      $region14: #{_conv_taps.1} parent=11 // pred_check_branch
        %350 = sbr.rel (%p348) target = $region16
      $region15: #{_conv_taps.1} parent=11 // pred_region
        _
      $region16: #{_conv_taps.1} parent=11 // pred_fallthru
        _
      // Predicated region
      $region17: #{_conv_taps.1} parent=11 // pred_check
        %p351 = pneg %p305
      $region18: #{_conv_taps.1} parent=11 // pred_check_branch
        %353 = sbr.rel (%p351) target = $region20
      $region19: #{_conv_taps.1} parent=11 // pred_region
        _
      $region20: #{_conv_taps.1} parent=11 // pred_fallthru
        _
    $region12: #{_conv_taps.1} parent=5 // pred_fallthru
      _
    %p354 = scmp.lt.s32.totalorder %s17, 11
    // Predicated region
    $region21: #{_conv_taps.1} parent=5 // pred_check
      %p355 = pneg %p354
    $region22: #{_conv_taps.1} parent=5 // pred_check_branch
      %357 = sbr.rel (%p355) target = $region24
    $region23: #{_conv_taps.1} parent=5 // pred_region
      // Predicated region
      $region25: #{_conv_taps.1} parent=23 // pred_check
        %p358 = pneg %p49
      $region26: #{_conv_taps.1} parent=23 // pred_check_branch
        %360 = sbr.rel (%p358) target = $region28
      $region27: #{_conv_taps.1} parent=23 // pred_region
        %s361 = smul.u32 32, %s24
        %p362 = scmp.lt.s32.totalorder %s361, 351
        %s363 = scalar_select %p362, %s361, 351
        %s364 = smul.addr %s363, 4
        %s365 = scalar_lea.vmem %s0, %s364
        %s366 = smul.u32 32, %s24
      $region28: #{_conv_taps.1} parent=23 // pred_fallthru
        _
      // Predicated region
      $region29: #{_conv_taps.1} parent=23 // pred_check
        %p367 = pneg %p75
      $region30: #{_conv_taps.1} parent=23 // pred_check_branch
        %369 = sbr.rel (%p367) target = $region32
      $region31: #{_conv_taps.1} parent=23 // pred_region
        %s370 = smul.u32 32, %s24
        %p371 = scmp.lt.s32.totalorder %s370, 351
        %s372 = scalar_select %p371, %s370, 351
        %s373 = smul.addr %s372, 4
        %s374 = scalar_lea.vmem %s1, %s373
        %s375 = smul.u32 32, %s24
      $region32: #{_conv_taps.1} parent=23 // pred_fallthru
        _
      // Predicated region
      $region33: #{_conv_taps.1} parent=23 // pred_check
        %p376 = pneg %p101
      $region34: #{_conv_taps.1} parent=23 // pred_check_branch
        %378 = sbr.rel (%p376) target = $region36
      $region35: #{_conv_taps.1} parent=23 // pred_region
        %s379 = smul.u32 32, %s24
        %p380 = scmp.lt.s32.totalorder %s379, 351
        %s381 = scalar_select %p380, %s379, 351
        %s382 = smul.addr %s381, 4
        %s383 = scalar_lea.vmem %s2, %s382
        %s384 = smul.u32 32, %s24
      $region36: #{_conv_taps.1} parent=23 // pred_fallthru
        _
      // Predicated region
      $region37: #{_conv_taps.1} parent=23 // pred_check
        %p385 = pneg %p127
      $region38: #{_conv_taps.1} parent=23 // pred_check_branch
        %387 = sbr.rel (%p385) target = $region40
      $region39: #{_conv_taps.1} parent=23 // pred_region
        %s388 = smul.u32 32, %s24
        %p389 = scmp.lt.s32.totalorder %s388, 351
        %s390 = scalar_select %p389, %s388, 351
        %s391 = smul.addr %s390, 4
        %s392 = scalar_lea.vmem %s3, %s391
        %s393 = smul.u32 32, %s24
      $region40: #{_conv_taps.1} parent=23 // pred_fallthru
        _
      // Predicated region
      $region41: #{_conv_taps.1} parent=23 // pred_check
        %p394 = pneg %p153
      $region42: #{_conv_taps.1} parent=23 // pred_check_branch
        %396 = sbr.rel (%p394) target = $region44
      $region43: #{_conv_taps.1} parent=23 // pred_region
        %s397 = smul.u32 32, %s24
        %p398 = scmp.lt.s32.totalorder %s397, 351
        %s399 = scalar_select %p398, %s397, 351
        %s400 = smul.addr %s399, 4
        %s401 = scalar_lea.vmem %s4, %s400
        %s402 = smul.u32 32, %s24
      $region44: #{_conv_taps.1} parent=23 // pred_fallthru
        _
      // Predicated region
      $region45: #{_conv_taps.1} parent=23 // pred_check
        %p403 = pneg %p179
      $region46: #{_conv_taps.1} parent=23 // pred_check_branch
        %405 = sbr.rel (%p403) target = $region48
      $region47: #{_conv_taps.1} parent=23 // pred_region
        %s406 = smul.u32 32, %s24
        %p407 = scmp.lt.s32.totalorder %s406, 351
        %s408 = scalar_select %p407, %s406, 351
        %s409 = smul.addr %s408, 4
        %s410 = scalar_lea.vmem %s5, %s409
        %s411 = smul.u32 32, %s24
      $region48: #{_conv_taps.1} parent=23 // pred_fallthru
        _
      // Predicated region
      $region49: #{_conv_taps.1} parent=23 // pred_check
        %p412 = pneg %p205
      $region50: #{_conv_taps.1} parent=23 // pred_check_branch
        %414 = sbr.rel (%p412) target = $region52
      $region51: #{_conv_taps.1} parent=23 // pred_region
        %s415 = smul.u32 32, %s24
        %p416 = scmp.lt.s32.totalorder %s415, 351
        %s417 = scalar_select %p416, %s415, 351
        %s418 = smul.addr %s417, 4
        %s419 = scalar_lea.vmem %s6, %s418
        %s420 = smul.u32 32, %s24
      $region52: #{_conv_taps.1} parent=23 // pred_fallthru
        _
      // Predicated region
      $region53: #{_conv_taps.1} parent=23 // pred_check
        %p421 = pneg %p231
      $region54: #{_conv_taps.1} parent=23 // pred_check_branch
        %423 = sbr.rel (%p421) target = $region56
      $region55: #{_conv_taps.1} parent=23 // pred_region
        %s424 = smul.u32 32, %s24
        %p425 = scmp.lt.s32.totalorder %s424, 351
        %s426 = scalar_select %p425, %s424, 351
        %s427 = smul.addr %s426, 4
        %s428 = scalar_lea.vmem %s7, %s427
        %s429 = smul.u32 32, %s24
      $region56: #{_conv_taps.1} parent=23 // pred_fallthru
        _
      // Predicated region
      $region57: #{_conv_taps.1} parent=23 // pred_check
        %p430 = pneg %p257
      $region58: #{_conv_taps.1} parent=23 // pred_check_branch
        %432 = sbr.rel (%p430) target = $region60
      $region59: #{_conv_taps.1} parent=23 // pred_region
        %s433 = smul.u32 32, %s24
        %p434 = scmp.lt.s32.totalorder %s433, 351
        %s435 = scalar_select %p434, %s433, 351
        %s436 = smul.addr %s435, 4
        %s437 = scalar_lea.vmem %s8, %s436
        %s438 = smul.u32 32, %s24
      $region60: #{_conv_taps.1} parent=23 // pred_fallthru
        _
    $region24: #{_conv_taps.1} parent=5 // pred_fallthru
      _
    %p439 = scmp.le.s32.totalorder 1, %s17
    %p440 = scmp.lt.s32.totalorder %s17, 12
    %p441 = pnand %p439, %p440
    %p442 = pneg %p441
    // Predicated region
    $region61: #{_conv_taps.1} parent=5 // pred_check
      _
    $region62: #{_conv_taps.1} parent=5 // pred_check_branch
      %444 = sbr.rel (%p441) target = $region64
    $region63: #{_conv_taps.1} parent=5 // pred_region
      %s445 = ssub.s32 %s17, 1
      %s446 = smul.u32 32, %s26
      %p447 = scmp.lt.s32.totalorder %s446, 351
      %s448 = scalar_select %p447, %s446, 351
      %s449 = smul.addr %s448, 4
      %s450 = scalar_lea.vmem %s0, %s449
      %p451 = pneg %p55
      %p452 = pneg %p52
      %s453 = smul.u32 32, %s26
      %p454 = scmp.lt.s32.totalorder %s453, 351
      %s455 = scalar_select %p454, %s453, 351
      %s456 = smul.addr %s455, 4
      %s457 = scalar_lea.vmem %s1, %s456
      %p458 = pneg %p81
      %p459 = pneg %p78
      %s460 = smul.u32 32, %s26
      %p461 = scmp.lt.s32.totalorder %s460, 351
      %s462 = scalar_select %p461, %s460, 351
      %s463 = smul.addr %s462, 4
      %s464 = scalar_lea.vmem %s2, %s463
      %p465 = pneg %p107
      %p466 = pneg %p104
      %s467 = smul.u32 32, %s26
      %p468 = scmp.lt.s32.totalorder %s467, 351
      %s469 = scalar_select %p468, %s467, 351
      %s470 = smul.addr %s469, 4
      %s471 = scalar_lea.vmem %s3, %s470
      %p472 = pneg %p133
      %p473 = pneg %p130
      %s474 = smul.u32 32, %s26
      %p475 = scmp.lt.s32.totalorder %s474, 351
      %s476 = scalar_select %p475, %s474, 351
      %s477 = smul.addr %s476, 4
      %s478 = scalar_lea.vmem %s4, %s477
      %p479 = pneg %p159
      %p480 = pneg %p156
      %s481 = smul.u32 32, %s26
      %p482 = scmp.lt.s32.totalorder %s481, 351
      %s483 = scalar_select %p482, %s481, 351
      %s484 = smul.addr %s483, 4
      %s485 = scalar_lea.vmem %s5, %s484
      %p486 = pneg %p185
      %p487 = pneg %p182
      %s488 = smul.u32 32, %s26
      %p489 = scmp.lt.s32.totalorder %s488, 351
      %s490 = scalar_select %p489, %s488, 351
      %s491 = smul.addr %s490, 4
      %s492 = scalar_lea.vmem %s6, %s491
      %p493 = pneg %p211
      %p494 = pneg %p208
      %s495 = smul.u32 32, %s26
      %p496 = scmp.lt.s32.totalorder %s495, 351
      %s497 = scalar_select %p496, %s495, 351
      %s498 = smul.addr %s497, 4
      %s499 = scalar_lea.vmem %s7, %s498
      %p500 = pneg %p237
      %p501 = pneg %p234
      %s502 = smul.u32 32, %s26
      %p503 = scmp.lt.s32.totalorder %s502, 351
      %s504 = scalar_select %p503, %s502, 351
      %s505 = smul.addr %s504, 4
      %s506 = scalar_lea.vmem %s8, %s505
      %p507 = pneg %p263
      %p508 = pneg %p260
      %p509 = pneg %p284
      %p510 = pneg %p281
      %p511 = pneg %p305
      %p512 = pneg %p302
      %p513 = pneg %p333
      %p514 = pneg %p330
      %s515 = smul.u32 32, %s26
      %p516 = scmp.lt.s32.totalorder %s515, 351
      %s517 = scalar_select %p516, %s515, 351
      %p518 = scmp.lt.s32.totalorder %s27, 0
      %s519 = scalar_select %p518, %s27, 0
      %s520 = sadd.s32 %s519, %s517
      %s521 = smul.addr %s520, 4
      %s522 = scalar_lea.vmem %s11, %s521
      %s523 = smul.u32 32, %s26
      %p524 = scmp.lt.s32.totalorder %s523, 351
      %s525 = scalar_select %p524, %s523, 351
      %s526 = smul.addr %s525, 4
      %s527 = scalar_lea.vmem %s0, %s526
      %s528 = smul.u32 32, %s26
      %s529 = smul.u32 32, %s26
      %p530 = scmp.lt.s32.totalorder %s529, 351
      %s531 = scalar_select %p530, %s529, 351
      %s532 = smul.addr %s531, 4
      %s533 = scalar_lea.vmem %s1, %s532
      %s534 = smul.u32 32, %s26
      %s535 = smul.u32 32, %s26
      %p536 = scmp.lt.s32.totalorder %s535, 351
      %s537 = scalar_select %p536, %s535, 351
      %s538 = smul.addr %s537, 4
      %s539 = scalar_lea.vmem %s2, %s538
      %s540 = smul.u32 32, %s26
      %s541 = smul.u32 32, %s26
      %p542 = scmp.lt.s32.totalorder %s541, 351
      %s543 = scalar_select %p542, %s541, 351
      %s544 = smul.addr %s543, 4
      %s545 = scalar_lea.vmem %s3, %s544
      %s546 = smul.u32 32, %s26
      %s547 = smul.u32 32, %s26
      %p548 = scmp.lt.s32.totalorder %s547, 351
      %s549 = scalar_select %p548, %s547, 351
      %s550 = smul.addr %s549, 4
      %s551 = scalar_lea.vmem %s4, %s550
      %s552 = smul.u32 32, %s26
      %s553 = smul.u32 32, %s26
      %p554 = scmp.lt.s32.totalorder %s553, 351
      %s555 = scalar_select %p554, %s553, 351
      %s556 = smul.addr %s555, 4
      %s557 = scalar_lea.vmem %s5, %s556
      %s558 = smul.u32 32, %s26
      %s559 = smul.u32 32, %s26
      %p560 = scmp.lt.s32.totalorder %s559, 351
      %s561 = scalar_select %p560, %s559, 351
      %s562 = smul.addr %s561, 4
      %s563 = scalar_lea.vmem %s6, %s562
      %s564 = smul.u32 32, %s26
      %s565 = smul.u32 32, %s26
      %p566 = scmp.lt.s32.totalorder %s565, 351
      %s567 = scalar_select %p566, %s565, 351
      %s568 = smul.addr %s567, 4
      %s569 = scalar_lea.vmem %s7, %s568
      %s570 = smul.u32 32, %s26
      %s571 = smul.u32 32, %s26
      %p572 = scmp.lt.s32.totalorder %s571, 351
      %s573 = scalar_select %p572, %s571, 351
      %s574 = smul.addr %s573, 4
      %s575 = scalar_lea.vmem %s8, %s574
      %s576 = smul.u32 32, %s26
      %s577 = smul.u32 32, %s26
      %p578 = scmp.lt.s32.totalorder %s577, 351
      %s579 = scalar_select %p578, %s577, 351
      %p580 = scmp.lt.s32.totalorder %s27, 0
      %s581 = scalar_select %p580, %s27, 0
      %s582 = sadd.s32 %s581, %s579
      %s583 = smul.addr %s582, 4
      %s584 = scalar_lea.vmem %s11, %s583
      %s585 = smul.u32 32, %s26
      %v587 = vld [vmem:[%s527] sm:$0xf]
      %v588 = vld [vmem:[%s527 + $0x4] sm:$0xf]
      %v589 = vld [vmem:[%s527 + $0x8] sm:$0xf]
      %v590 = vld [vmem:[%s527 + $0xc] sm:$0xf]
      %v591 = vld [vmem:[%s527 + $0x10] sm:$0xf]
      %v592 = vld [vmem:[%s527 + $0x14] sm:$0xf]
      %v593 = vld [vmem:[%s527 + $0x18] sm:$0xf]
      %v594 = vld [vmem:[%s527 + $0x1c] sm:$0xf]
      %v595 = vld [vmem:[%s527 + $0x20] sm:$0xf]
      %v596 = vld [vmem:[%s527 + $0x24] sm:$0xf]
      %v597 = vld [vmem:[%s527 + $0x28] sm:$0xf]
      %v598 = vld [vmem:[%s527 + $0x2c] sm:$0xf]
      %v599 = vld [vmem:[%s527 + $0x30] sm:$0xf]
      %v600 = vld [vmem:[%s527 + $0x34] sm:$0xf]
      %v601 = vld [vmem:[%s527 + $0x38] sm:$0xf]
      %v602 = vld [vmem:[%s527 + $0x3c] sm:$0xf]
      %v603 = vld [vmem:[%s527 + $0x40] sm:$0xf]
      %v604 = vld [vmem:[%s527 + $0x44] sm:$0xf]
      %v605 = vld [vmem:[%s527 + $0x48] sm:$0xf]
      %v606 = vld [vmem:[%s527 + $0x4c] sm:$0xf]
      %v607 = vld [vmem:[%s527 + $0x50] sm:$0xf]
      %v608 = vld [vmem:[%s527 + $0x54] sm:$0xf]
      %v609 = vld [vmem:[%s527 + $0x58] sm:$0xf]
      %v610 = vld [vmem:[%s527 + $0x5c] sm:$0xf]
      %v611 = vld [vmem:[%s527 + $0x60] sm:$0xf]
      %v612 = vld [vmem:[%s527 + $0x64] sm:$0xf]
      %v613 = vld [vmem:[%s527 + $0x68] sm:$0xf]
      %v614 = vld [vmem:[%s527 + $0x6c] sm:$0xf]
      %v615 = vld [vmem:[%s527 + $0x70] sm:$0xf]
      %v616 = vld [vmem:[%s527 + $0x74] sm:$0xf]
      %v617 = vld [vmem:[%s527 + $0x78] sm:$0xf]
      %v618 = vld [vmem:[%s527 + $0x7c] sm:$0xf]
      %v619 = vld [vmem:[%s9] sm:$0xf]
      %v620 = vld [vmem:[%s533] sm:$0xf]
      %v621 = vld [vmem:[%s533 + $0x4] sm:$0xf]
      %v622 = vld [vmem:[%s533 + $0x8] sm:$0xf]
      %v623 = vld [vmem:[%s533 + $0xc] sm:$0xf]
      %v624 = vld [vmem:[%s533 + $0x10] sm:$0xf]
      %v625 = vld [vmem:[%s533 + $0x14] sm:$0xf]
      %v626 = vld [vmem:[%s533 + $0x18] sm:$0xf]
      %v627 = vld [vmem:[%s533 + $0x1c] sm:$0xf]
      %v628 = vld [vmem:[%s533 + $0x20] sm:$0xf]
      %v629 = vld [vmem:[%s533 + $0x24] sm:$0xf]
      %v630 = vld [vmem:[%s533 + $0x28] sm:$0xf]
      %v631 = vld [vmem:[%s533 + $0x2c] sm:$0xf]
      %v632 = vld [vmem:[%s533 + $0x30] sm:$0xf]
      %v633 = vld [vmem:[%s533 + $0x34] sm:$0xf]
      %v634 = vld [vmem:[%s533 + $0x38] sm:$0xf]
      %v635 = vld [vmem:[%s533 + $0x3c] sm:$0xf]
      %v636 = vld [vmem:[%s533 + $0x40] sm:$0xf]
      %v637 = vld [vmem:[%s533 + $0x44] sm:$0xf]
      %v638 = vld [vmem:[%s533 + $0x48] sm:$0xf]
      %v639 = vld [vmem:[%s533 + $0x4c] sm:$0xf]
      %v640 = vld [vmem:[%s533 + $0x50] sm:$0xf]
      %v641 = vld [vmem:[%s533 + $0x54] sm:$0xf]
      %v642 = vld [vmem:[%s533 + $0x58] sm:$0xf]
      %v643 = vld [vmem:[%s533 + $0x5c] sm:$0xf]
      %v644 = vld [vmem:[%s533 + $0x60] sm:$0xf]
      %v645 = vld [vmem:[%s533 + $0x64] sm:$0xf]
      %v646 = vld [vmem:[%s533 + $0x68] sm:$0xf]
      %v647 = vld [vmem:[%s533 + $0x6c] sm:$0xf]
      %v648 = vld [vmem:[%s533 + $0x70] sm:$0xf]
      %v649 = vld [vmem:[%s533 + $0x74] sm:$0xf]
      %v650 = vld [vmem:[%s533 + $0x78] sm:$0xf]
      %v651 = vld [vmem:[%s533 + $0x7c] sm:$0xf]
      %s652 = scalar_lea.vmem %s9, 4
      %v653 = vld [vmem:[%s652] sm:$0xf]
      %v686 = vunpack.c.l.b16 %v620
      %v687 = vunpack.c.l.b16 %v621
      %v688 = vunpack.c.l.b16 %v622
      %v689 = vunpack.c.l.b16 %v623
      %v690 = vunpack.c.l.b16 %v624
      %v691 = vunpack.c.l.b16 %v625
      %v692 = vunpack.c.l.b16 %v626
      %v693 = vunpack.c.l.b16 %v627
      %v694 = vunpack.c.l.b16 %v628
      %v695 = vunpack.c.l.b16 %v629
      %v696 = vunpack.c.l.b16 %v630
      %v697 = vunpack.c.l.b16 %v631
      %v698 = vunpack.c.l.b16 %v632
      %v699 = vunpack.c.l.b16 %v633
      %v700 = vunpack.c.l.b16 %v634
      %v701 = vunpack.c.l.b16 %v635
      %v702 = vunpack.c.l.b16 %v636
      %v703 = vunpack.c.l.b16 %v637
      %v704 = vunpack.c.l.b16 %v638
      %v705 = vunpack.c.l.b16 %v639
      %v706 = vunpack.c.l.b16 %v640
      %v707 = vunpack.c.l.b16 %v641
      %v708 = vunpack.c.l.b16 %v642
      %v709 = vunpack.c.l.b16 %v643
      %v710 = vunpack.c.l.b16 %v644
      %v711 = vunpack.c.l.b16 %v645
      %v712 = vunpack.c.l.b16 %v646
      %v713 = vunpack.c.l.b16 %v647
      %v714 = vunpack.c.l.b16 %v648
      %v715 = vunpack.c.l.b16 %v649
      %v716 = vunpack.c.l.b16 %v650
      %v717 = vunpack.c.l.b16 %v651
      %v718 = vpack.c.b16 %v687, %v686
      %v719 = vpack.c.b16 %v689, %v688
      %v720 = vpack.c.b16 %v691, %v690
      %v721 = vpack.c.b16 %v693, %v692
      %v722 = vpack.c.b16 %v695, %v694
      %v723 = vpack.c.b16 %v697, %v696
      %v724 = vpack.c.b16 %v699, %v698
      %v725 = vpack.c.b16 %v701, %v700
      %v726 = vpack.c.b16 %v703, %v702
      %v727 = vpack.c.b16 %v705, %v704
      %v728 = vpack.c.b16 %v707, %v706
      %v729 = vpack.c.b16 %v709, %v708
      %v730 = vpack.c.b16 %v711, %v710
      %v731 = vpack.c.b16 %v713, %v712
      %v732 = vpack.c.b16 %v715, %v714
      %v733 = vpack.c.b16 %v717, %v716
      %vm734 = vcmask 64512
      %v736 = vsel %vm734, %v718, 0
      %v739 = vsel %vm734, %v719, 0
      %v742 = vsel %vm734, %v720, 0
      %v745 = vsel %vm734, %v721, 0
      %v748 = vsel %vm734, %v722, 0
      %v751 = vsel %vm734, %v723, 0
      %v754 = vsel %vm734, %v724, 0
      %v757 = vsel %vm734, %v725, 0
      %v760 = vsel %vm734, %v726, 0
      %v763 = vsel %vm734, %v727, 0
      %v766 = vsel %vm734, %v728, 0
      %v769 = vsel %vm734, %v729, 0
      %v772 = vsel %vm734, %v730, 0
      %v775 = vsel %vm734, %v731, 0
      %v778 = vsel %vm734, %v732, 0
      %v781 = vsel %vm734, %v733, 0
      %vm783 = vcmask 1043456
      %v785 = vsel %vm783, %v653, 0
      %787 = vmatprep.subr.bf16.mxu0 0
      %788 = vmatpush1.bf16.msra.mxu0 0
      %789 = vmatprep.subr.bf16.mxu0 0
      %790 = vmatpush1.bf16.msra.mxu0 0
      %791 = vmatprep.subr.bf16.mxu0 0
      %792 = vmatpush1.bf16.msra.mxu0 0
      %793 = vmatprep.subr.bf16.mxu0 0
      %794 = vmatpush1.bf16.msra.mxu0 0
      %795 = vmatprep.subr.bf16.mxu0 0
      %796 = vmatpush1.bf16.msra.mxu0 0
      %797 = vmatprep.subr.bf16.mxu0 0
      %798 = vmatpush1.bf16.msra.mxu0 0
      %799 = vmatprep.subr.bf16.mxu0 0
      %800 = vmatpush1.bf16.msra.mxu0 0
      %801 = vmatprep.subr.bf16.mxu0 0
      %802 = vmatpush1.bf16.msra.mxu0 %v785
      %803 = vmatprep.subr.bf16.mxu0 0
      %804 = vmatpush2.bf16.msra.mxu0 0
      %805 = vmatprep.subr.bf16.mxu0 0
      %806 = vmatpush2.bf16.msra.mxu0 0
      %807 = vmatprep.subr.bf16.mxu0 0
      %808 = vmatpush2.bf16.msra.mxu0 0
      %809 = vmatprep.subr.bf16.mxu0 0
      %810 = vmatpush2.bf16.msra.mxu0 0
      %811 = vmatprep.subr.bf16.mxu0 0
      %812 = vmatpush2.bf16.msra.mxu0 0
      %813 = vmatprep.subr.bf16.mxu0 0
      %814 = vmatpush2.bf16.msra.mxu0 0
      %815 = vmatprep.subr.bf16.mxu0 0
      %816 = vmatpush2.bf16.msra.mxu0 0
      %817 = vmatprep.subr.bf16.mxu0 0
      %818 = vmatpush2.bf16.msra.mxu0 0
      %819 = vmatprep.mubr.bf16.mxu0 0
      %820 = vmatmul.mubr.bf16.gmra.mxu0 %v736
      %v821 = vpop.f32.mrf.mxu0
      %v822 = vadd.f32 0.0, %v821
      %v823 = vpop.f32.mrf.mxu0
      %v824 = vpop.f32.mrf.mxu0
      %v825 = vadd.f32 0.0, %v824
      %v826 = vpop.f32.mrf.mxu0
      %827 = vmatprep.mubr.bf16.mxu0 0
      %828 = vmatmul.mubr.bf16.gmra.mxu0 %v739
      %v829 = vpop.f32.mrf.mxu0
      %v830 = vadd.f32 0.0, %v829
      %v831 = vpop.f32.mrf.mxu0
      %v832 = vpop.f32.mrf.mxu0
      %v833 = vadd.f32 0.0, %v832
      %v834 = vpop.f32.mrf.mxu0
      %835 = vmatprep.mubr.bf16.mxu0 0
      %836 = vmatmul.mubr.bf16.gmra.mxu0 %v742
      %v837 = vpop.f32.mrf.mxu0
      %v838 = vadd.f32 0.0, %v837
      %v839 = vpop.f32.mrf.mxu0
      %v840 = vpop.f32.mrf.mxu0
      %v841 = vadd.f32 0.0, %v840
      %v842 = vpop.f32.mrf.mxu0
      %843 = vmatprep.mubr.bf16.mxu0 0
      %844 = vmatmul.mubr.bf16.gmra.mxu0 %v745
      %v845 = vpop.f32.mrf.mxu0
      %v846 = vadd.f32 0.0, %v845
      %v847 = vpop.f32.mrf.mxu0
      %v848 = vpop.f32.mrf.mxu0
      %v849 = vadd.f32 0.0, %v848
      %v850 = vpop.f32.mrf.mxu0
      %851 = vmatprep.mubr.bf16.mxu0 0
      %852 = vmatmul.mubr.bf16.gmra.mxu0 %v748
      %v853 = vpop.f32.mrf.mxu0
      %v854 = vadd.f32 0.0, %v853
      %v855 = vpop.f32.mrf.mxu0
      %v856 = vpop.f32.mrf.mxu0
      %v857 = vadd.f32 0.0, %v856
      %v858 = vpop.f32.mrf.mxu0
      %859 = vmatprep.mubr.bf16.mxu0 0
      %860 = vmatmul.mubr.bf16.gmra.mxu0 %v751
      %v861 = vpop.f32.mrf.mxu0
      %v862 = vadd.f32 0.0, %v861
      %v863 = vpop.f32.mrf.mxu0
      %v864 = vpop.f32.mrf.mxu0
      %v865 = vadd.f32 0.0, %v864
      %v866 = vpop.f32.mrf.mxu0
      %867 = vmatprep.mubr.bf16.mxu0 0
      %868 = vmatmul.mubr.bf16.gmra.mxu0 %v754
      %v869 = vpop.f32.mrf.mxu0
      %v870 = vadd.f32 0.0, %v869
      %v871 = vpop.f32.mrf.mxu0
      %v872 = vpop.f32.mrf.mxu0
      %v873 = vadd.f32 0.0, %v872
      %v874 = vpop.f32.mrf.mxu0
      %875 = vmatprep.mubr.bf16.mxu0 0
      %876 = vmatmul.mubr.bf16.gmra.mxu0 %v757
      %v877 = vpop.f32.mrf.mxu0
      %v878 = vadd.f32 0.0, %v877
      %v879 = vpop.f32.mrf.mxu0
      %v880 = vpop.f32.mrf.mxu0
      %v881 = vadd.f32 0.0, %v880
      %v882 = vpop.f32.mrf.mxu0
      %883 = vmatprep.mubr.bf16.mxu0 0
      %884 = vmatmul.mubr.bf16.gmra.mxu0 %v760
      %v885 = vpop.f32.mrf.mxu0
      %v886 = vadd.f32 0.0, %v885
      %v887 = vpop.f32.mrf.mxu0
      %v888 = vpop.f32.mrf.mxu0
      %v889 = vadd.f32 0.0, %v888
      %v890 = vpop.f32.mrf.mxu0
      %891 = vmatprep.mubr.bf16.mxu0 0
      %892 = vmatmul.mubr.bf16.gmra.mxu0 %v763
      %v893 = vpop.f32.mrf.mxu0
      %v894 = vadd.f32 0.0, %v893
      %v895 = vpop.f32.mrf.mxu0
      %v896 = vpop.f32.mrf.mxu0
      %v897 = vadd.f32 0.0, %v896
      %v898 = vpop.f32.mrf.mxu0
      %899 = vmatprep.mubr.bf16.mxu0 0
      %900 = vmatmul.mubr.bf16.gmra.mxu0 %v766
      %v901 = vpop.f32.mrf.mxu0
      %v902 = vadd.f32 0.0, %v901
      %v903 = vpop.f32.mrf.mxu0
      %v904 = vpop.f32.mrf.mxu0
      %v905 = vadd.f32 0.0, %v904
      %v906 = vpop.f32.mrf.mxu0
      %907 = vmatprep.mubr.bf16.mxu0 0
      %908 = vmatmul.mubr.bf16.gmra.mxu0 %v769
      %v909 = vpop.f32.mrf.mxu0
      %v910 = vadd.f32 0.0, %v909
      %v911 = vpop.f32.mrf.mxu0
      %v912 = vpop.f32.mrf.mxu0
      %v913 = vadd.f32 0.0, %v912
      %v914 = vpop.f32.mrf.mxu0
      %915 = vmatprep.mubr.bf16.mxu0 0
      %916 = vmatmul.mubr.bf16.gmra.mxu0 %v772
      %v917 = vpop.f32.mrf.mxu0
      %v918 = vadd.f32 0.0, %v917
      %v919 = vpop.f32.mrf.mxu0
      %v920 = vpop.f32.mrf.mxu0
      %v921 = vadd.f32 0.0, %v920
      %v922 = vpop.f32.mrf.mxu0
      %923 = vmatprep.mubr.bf16.mxu0 0
      %924 = vmatmul.mubr.bf16.gmra.mxu0 %v775
      %v925 = vpop.f32.mrf.mxu0
      %v926 = vadd.f32 0.0, %v925
      %v927 = vpop.f32.mrf.mxu0
      %v928 = vpop.f32.mrf.mxu0
      %v929 = vadd.f32 0.0, %v928
      %v930 = vpop.f32.mrf.mxu0
      %931 = vmatprep.mubr.bf16.mxu0 0
      %932 = vmatmul.mubr.bf16.gmra.mxu0 %v778
      %v933 = vpop.f32.mrf.mxu0
      %v934 = vadd.f32 0.0, %v933
      %v935 = vpop.f32.mrf.mxu0
      %v936 = vpop.f32.mrf.mxu0
      %v937 = vadd.f32 0.0, %v936
      %v938 = vpop.f32.mrf.mxu0
      %939 = vmatprep.mubr.bf16.mxu0 0
      %940 = vmatmul.mubr.bf16.gmra.mxu0 %v781
      %v941 = vpop.f32.mrf.mxu0
      %v942 = vadd.f32 0.0, %v941
      %v943 = vpop.f32.mrf.mxu0
      %v944 = vpop.f32.mrf.mxu0
      %v945 = vadd.f32 0.0, %v944
      %v946 = vpop.f32.mrf.mxu0
      %947 = vdwg.mxu0
      %v980 = vunpack.c.l.b16 %v587
      %v981 = vunpack.c.l.b16 %v588
      %v982 = vunpack.c.l.b16 %v589
      %v983 = vunpack.c.l.b16 %v590
      %v984 = vunpack.c.l.b16 %v591
      %v985 = vunpack.c.l.b16 %v592
      %v986 = vunpack.c.l.b16 %v593
      %v987 = vunpack.c.l.b16 %v594
      %v988 = vunpack.c.l.b16 %v595
      %v989 = vunpack.c.l.b16 %v596
      %v990 = vunpack.c.l.b16 %v597
      %v991 = vunpack.c.l.b16 %v598
      %v992 = vunpack.c.l.b16 %v599
      %v993 = vunpack.c.l.b16 %v600
      %v994 = vunpack.c.l.b16 %v601
      %v995 = vunpack.c.l.b16 %v602
      %v996 = vunpack.c.l.b16 %v603
      %v997 = vunpack.c.l.b16 %v604
      %v998 = vunpack.c.l.b16 %v605
      %v999 = vunpack.c.l.b16 %v606
      %v1000 = vunpack.c.l.b16 %v607
      %v1001 = vunpack.c.l.b16 %v608
      %v1002 = vunpack.c.l.b16 %v609
      %v1003 = vunpack.c.l.b16 %v610
      %v1004 = vunpack.c.l.b16 %v611
      %v1005 = vunpack.c.l.b16 %v612
      %v1006 = vunpack.c.l.b16 %v613
      %v1007 = vunpack.c.l.b16 %v614
      %v1008 = vunpack.c.l.b16 %v615
      %v1009 = vunpack.c.l.b16 %v616
      %v1010 = vunpack.c.l.b16 %v617
      %v1011 = vunpack.c.l.b16 %v618
      %v1012 = vpack.c.b16 %v981, %v980
      %v1013 = vpack.c.b16 %v983, %v982
      %v1014 = vpack.c.b16 %v985, %v984
      %v1015 = vpack.c.b16 %v987, %v986
      %v1016 = vpack.c.b16 %v989, %v988
      %v1017 = vpack.c.b16 %v991, %v990
      %v1018 = vpack.c.b16 %v993, %v992
      %v1019 = vpack.c.b16 %v995, %v994
      %v1020 = vpack.c.b16 %v997, %v996
      %v1021 = vpack.c.b16 %v999, %v998
      %v1022 = vpack.c.b16 %v1001, %v1000
      %v1023 = vpack.c.b16 %v1003, %v1002
      %v1024 = vpack.c.b16 %v1005, %v1004
      %v1025 = vpack.c.b16 %v1007, %v1006
      %v1026 = vpack.c.b16 %v1009, %v1008
      %v1027 = vpack.c.b16 %v1011, %v1010
      %v1029 = vsel %vm734, %v1012, 0
      %v1032 = vsel %vm734, %v1013, 0
      %v1035 = vsel %vm734, %v1014, 0
      %v1038 = vsel %vm734, %v1015, 0
      %v1041 = vsel %vm734, %v1016, 0
      %v1044 = vsel %vm734, %v1017, 0
      %v1047 = vsel %vm734, %v1018, 0
      %v1050 = vsel %vm734, %v1019, 0
      %v1053 = vsel %vm734, %v1020, 0
      %v1056 = vsel %vm734, %v1021, 0
      %v1059 = vsel %vm734, %v1022, 0
      %v1062 = vsel %vm734, %v1023, 0
      %v1065 = vsel %vm734, %v1024, 0
      %v1068 = vsel %vm734, %v1025, 0
      %v1071 = vsel %vm734, %v1026, 0
      %v1074 = vsel %vm734, %v1027, 0
      %v1077 = vsel %vm783, %v619, 0
      %1079 = vmatprep.subr.bf16.mxu0 0
      %1080 = vmatpush1.bf16.msra.mxu0 0
      %1081 = vmatprep.subr.bf16.mxu0 0
      %1082 = vmatpush1.bf16.msra.mxu0 0
      %1083 = vmatprep.subr.bf16.mxu0 0
      %1084 = vmatpush1.bf16.msra.mxu0 0
      %1085 = vmatprep.subr.bf16.mxu0 0
      %1086 = vmatpush1.bf16.msra.mxu0 0
      %1087 = vmatprep.subr.bf16.mxu0 0
      %1088 = vmatpush1.bf16.msra.mxu0 0
      %1089 = vmatprep.subr.bf16.mxu0 0
      %1090 = vmatpush1.bf16.msra.mxu0 0
      %1091 = vmatprep.subr.bf16.mxu0 0
      %1092 = vmatpush1.bf16.msra.mxu0 0
      %1093 = vmatprep.subr.bf16.mxu0 0
      %1094 = vmatpush1.bf16.msra.mxu0 %v1077
      %1095 = vmatprep.subr.bf16.mxu0 0
      %1096 = vmatpush2.bf16.msra.mxu0 0
      %1097 = vmatprep.subr.bf16.mxu0 0
      %1098 = vmatpush2.bf16.msra.mxu0 0
      %1099 = vmatprep.subr.bf16.mxu0 0
      %1100 = vmatpush2.bf16.msra.mxu0 0
      %1101 = vmatprep.subr.bf16.mxu0 0
      %1102 = vmatpush2.bf16.msra.mxu0 0
      %1103 = vmatprep.subr.bf16.mxu0 0
      %1104 = vmatpush2.bf16.msra.mxu0 0
      %1105 = vmatprep.subr.bf16.mxu0 0
      %1106 = vmatpush2.bf16.msra.mxu0 0
      %1107 = vmatprep.subr.bf16.mxu0 0
      %1108 = vmatpush2.bf16.msra.mxu0 0
      %1109 = vmatprep.subr.bf16.mxu0 0
      %1110 = vmatpush2.bf16.msra.mxu0 0
      %1111 = vmatprep.mubr.bf16.mxu0 0
      %1112 = vmatmul.mubr.bf16.gmra.mxu0 %v1029
      %v1113 = vpop.f32.mrf.mxu0
      %v1114 = vadd.f32 %v822, %v1113
      %v1115 = vpop.f32.mrf.mxu0
      %v1116 = vpop.f32.mrf.mxu0
      %v1117 = vadd.f32 %v825, %v1116
      %v1118 = vpop.f32.mrf.mxu0
      %1119 = vmatprep.mubr.bf16.mxu0 0
      %1120 = vmatmul.mubr.bf16.gmra.mxu0 %v1032
      %v1121 = vpop.f32.mrf.mxu0
      %v1122 = vadd.f32 %v830, %v1121
      %v1123 = vpop.f32.mrf.mxu0
      %v1124 = vpop.f32.mrf.mxu0
      %v1125 = vadd.f32 %v833, %v1124
      %v1126 = vpop.f32.mrf.mxu0
      %1127 = vmatprep.mubr.bf16.mxu0 0
      %1128 = vmatmul.mubr.bf16.gmra.mxu0 %v1035
      %v1129 = vpop.f32.mrf.mxu0
      %v1130 = vadd.f32 %v838, %v1129
      %v1131 = vpop.f32.mrf.mxu0
      %v1132 = vpop.f32.mrf.mxu0
      %v1133 = vadd.f32 %v841, %v1132
      %v1134 = vpop.f32.mrf.mxu0
      %1135 = vmatprep.mubr.bf16.mxu0 0
      %1136 = vmatmul.mubr.bf16.gmra.mxu0 %v1038
      %v1137 = vpop.f32.mrf.mxu0
      %v1138 = vadd.f32 %v846, %v1137
      %v1139 = vpop.f32.mrf.mxu0
      %v1140 = vpop.f32.mrf.mxu0
      %v1141 = vadd.f32 %v849, %v1140
      %v1142 = vpop.f32.mrf.mxu0
      %1143 = vmatprep.mubr.bf16.mxu0 0
      %1144 = vmatmul.mubr.bf16.gmra.mxu0 %v1041
      %v1145 = vpop.f32.mrf.mxu0
      %v1146 = vadd.f32 %v854, %v1145
      %v1147 = vpop.f32.mrf.mxu0
      %v1148 = vpop.f32.mrf.mxu0
      %v1149 = vadd.f32 %v857, %v1148
      %v1150 = vpop.f32.mrf.mxu0
      %1151 = vmatprep.mubr.bf16.mxu0 0
      %1152 = vmatmul.mubr.bf16.gmra.mxu0 %v1044
      %v1153 = vpop.f32.mrf.mxu0
      %v1154 = vadd.f32 %v862, %v1153
      %v1155 = vpop.f32.mrf.mxu0
      %v1156 = vpop.f32.mrf.mxu0
      %v1157 = vadd.f32 %v865, %v1156
      %v1158 = vpop.f32.mrf.mxu0
      %1159 = vmatprep.mubr.bf16.mxu0 0
      %1160 = vmatmul.mubr.bf16.gmra.mxu0 %v1047
      %v1161 = vpop.f32.mrf.mxu0
      %v1162 = vadd.f32 %v870, %v1161
      %v1163 = vpop.f32.mrf.mxu0
      %v1164 = vpop.f32.mrf.mxu0
      %v1165 = vadd.f32 %v873, %v1164
      %v1166 = vpop.f32.mrf.mxu0
      %1167 = vmatprep.mubr.bf16.mxu0 0
      %1168 = vmatmul.mubr.bf16.gmra.mxu0 %v1050
      %v1169 = vpop.f32.mrf.mxu0
      %v1170 = vadd.f32 %v878, %v1169
      %v1171 = vpop.f32.mrf.mxu0
      %v1172 = vpop.f32.mrf.mxu0
      %v1173 = vadd.f32 %v881, %v1172
      %v1174 = vpop.f32.mrf.mxu0
      %1175 = vmatprep.mubr.bf16.mxu0 0
      %1176 = vmatmul.mubr.bf16.gmra.mxu0 %v1053
      %v1177 = vpop.f32.mrf.mxu0
      %v1178 = vadd.f32 %v886, %v1177
      %v1179 = vpop.f32.mrf.mxu0
      %v1180 = vpop.f32.mrf.mxu0
      %v1181 = vadd.f32 %v889, %v1180
      %v1182 = vpop.f32.mrf.mxu0
      %1183 = vmatprep.mubr.bf16.mxu0 0
      %1184 = vmatmul.mubr.bf16.gmra.mxu0 %v1056
      %v1185 = vpop.f32.mrf.mxu0
      %v1186 = vadd.f32 %v894, %v1185
      %v1187 = vpop.f32.mrf.mxu0
      %v1188 = vpop.f32.mrf.mxu0
      %v1189 = vadd.f32 %v897, %v1188
      %v1190 = vpop.f32.mrf.mxu0
      %1191 = vmatprep.mubr.bf16.mxu0 0
      %1192 = vmatmul.mubr.bf16.gmra.mxu0 %v1059
      %v1193 = vpop.f32.mrf.mxu0
      %v1194 = vadd.f32 %v902, %v1193
      %v1195 = vpop.f32.mrf.mxu0
      %v1196 = vpop.f32.mrf.mxu0
      %v1197 = vadd.f32 %v905, %v1196
      %v1198 = vpop.f32.mrf.mxu0
      %1199 = vmatprep.mubr.bf16.mxu0 0
      %1200 = vmatmul.mubr.bf16.gmra.mxu0 %v1062
      %v1201 = vpop.f32.mrf.mxu0
      %v1202 = vadd.f32 %v910, %v1201
      %v1203 = vpop.f32.mrf.mxu0
      %v1204 = vpop.f32.mrf.mxu0
      %v1205 = vadd.f32 %v913, %v1204
      %v1206 = vpop.f32.mrf.mxu0
      %1207 = vmatprep.mubr.bf16.mxu0 0
      %1208 = vmatmul.mubr.bf16.gmra.mxu0 %v1065
      %v1209 = vpop.f32.mrf.mxu0
      %v1210 = vadd.f32 %v918, %v1209
      %v1211 = vpop.f32.mrf.mxu0
      %v1212 = vpop.f32.mrf.mxu0
      %v1213 = vadd.f32 %v921, %v1212
      %v1214 = vpop.f32.mrf.mxu0
      %1215 = vmatprep.mubr.bf16.mxu0 0
      %1216 = vmatmul.mubr.bf16.gmra.mxu0 %v1068
      %v1217 = vpop.f32.mrf.mxu0
      %v1218 = vadd.f32 %v926, %v1217
      %v1219 = vpop.f32.mrf.mxu0
      %v1220 = vpop.f32.mrf.mxu0
      %v1221 = vadd.f32 %v929, %v1220
      %v1222 = vpop.f32.mrf.mxu0
      %1223 = vmatprep.mubr.bf16.mxu0 0
      %1224 = vmatmul.mubr.bf16.gmra.mxu0 %v1071
      %v1225 = vpop.f32.mrf.mxu0
      %v1226 = vadd.f32 %v934, %v1225
      %v1227 = vpop.f32.mrf.mxu0
      %v1228 = vpop.f32.mrf.mxu0
      %v1229 = vadd.f32 %v937, %v1228
      %v1230 = vpop.f32.mrf.mxu0
      %1231 = vmatprep.mubr.bf16.mxu0 0
      %1232 = vmatmul.mubr.bf16.gmra.mxu0 %v1074
      %v1233 = vpop.f32.mrf.mxu0
      %v1234 = vadd.f32 %v942, %v1233
      %v1235 = vpop.f32.mrf.mxu0
      %v1236 = vpop.f32.mrf.mxu0
      %v1237 = vadd.f32 %v945, %v1236
      %v1238 = vpop.f32.mrf.mxu0
      %1239 = vdwg.mxu0
      %v1240 = vld [vmem:[%s539] sm:$0xf]
      %v1241 = vld [vmem:[%s539 + $0x4] sm:$0xf]
      %v1242 = vld [vmem:[%s539 + $0x8] sm:$0xf]
      %v1243 = vld [vmem:[%s539 + $0xc] sm:$0xf]
      %v1244 = vld [vmem:[%s539 + $0x10] sm:$0xf]
      %v1245 = vld [vmem:[%s539 + $0x14] sm:$0xf]
      %v1246 = vld [vmem:[%s539 + $0x18] sm:$0xf]
      %v1247 = vld [vmem:[%s539 + $0x1c] sm:$0xf]
      %v1248 = vld [vmem:[%s539 + $0x20] sm:$0xf]
      %v1249 = vld [vmem:[%s539 + $0x24] sm:$0xf]
      %v1250 = vld [vmem:[%s539 + $0x28] sm:$0xf]
      %v1251 = vld [vmem:[%s539 + $0x2c] sm:$0xf]
      %v1252 = vld [vmem:[%s539 + $0x30] sm:$0xf]
      %v1253 = vld [vmem:[%s539 + $0x34] sm:$0xf]
      %v1254 = vld [vmem:[%s539 + $0x38] sm:$0xf]
      %v1255 = vld [vmem:[%s539 + $0x3c] sm:$0xf]
      %v1256 = vld [vmem:[%s539 + $0x40] sm:$0xf]
      %v1257 = vld [vmem:[%s539 + $0x44] sm:$0xf]
      %v1258 = vld [vmem:[%s539 + $0x48] sm:$0xf]
      %v1259 = vld [vmem:[%s539 + $0x4c] sm:$0xf]
      %v1260 = vld [vmem:[%s539 + $0x50] sm:$0xf]
      %v1261 = vld [vmem:[%s539 + $0x54] sm:$0xf]
      %v1262 = vld [vmem:[%s539 + $0x58] sm:$0xf]
      %v1263 = vld [vmem:[%s539 + $0x5c] sm:$0xf]
      %v1264 = vld [vmem:[%s539 + $0x60] sm:$0xf]
      %v1265 = vld [vmem:[%s539 + $0x64] sm:$0xf]
      %v1266 = vld [vmem:[%s539 + $0x68] sm:$0xf]
      %v1267 = vld [vmem:[%s539 + $0x6c] sm:$0xf]
      %v1268 = vld [vmem:[%s539 + $0x70] sm:$0xf]
      %v1269 = vld [vmem:[%s539 + $0x74] sm:$0xf]
      %v1270 = vld [vmem:[%s539 + $0x78] sm:$0xf]
      %v1271 = vld [vmem:[%s539 + $0x7c] sm:$0xf]
      %s1272 = scalar_lea.vmem %s9, 8
      %v1273 = vld [vmem:[%s1272] sm:$0xf]
      %v1306 = vunpack.c.l.b16 %v1240
      %v1307 = vunpack.c.l.b16 %v1241
      %v1308 = vunpack.c.l.b16 %v1242
      %v1309 = vunpack.c.l.b16 %v1243
      %v1310 = vunpack.c.l.b16 %v1244
      %v1311 = vunpack.c.l.b16 %v1245
      %v1312 = vunpack.c.l.b16 %v1246
      %v1313 = vunpack.c.l.b16 %v1247
      %v1314 = vunpack.c.l.b16 %v1248
      %v1315 = vunpack.c.l.b16 %v1249
      %v1316 = vunpack.c.l.b16 %v1250
      %v1317 = vunpack.c.l.b16 %v1251
      %v1318 = vunpack.c.l.b16 %v1252
      %v1319 = vunpack.c.l.b16 %v1253
      %v1320 = vunpack.c.l.b16 %v1254
      %v1321 = vunpack.c.l.b16 %v1255
      %v1322 = vunpack.c.l.b16 %v1256
      %v1323 = vunpack.c.l.b16 %v1257
      %v1324 = vunpack.c.l.b16 %v1258
      %v1325 = vunpack.c.l.b16 %v1259
      %v1326 = vunpack.c.l.b16 %v1260
      %v1327 = vunpack.c.l.b16 %v1261
      %v1328 = vunpack.c.l.b16 %v1262
      %v1329 = vunpack.c.l.b16 %v1263
      %v1330 = vunpack.c.l.b16 %v1264
      %v1331 = vunpack.c.l.b16 %v1265
      %v1332 = vunpack.c.l.b16 %v1266
      %v1333 = vunpack.c.l.b16 %v1267
      %v1334 = vunpack.c.l.b16 %v1268
      %v1335 = vunpack.c.l.b16 %v1269
      %v1336 = vunpack.c.l.b16 %v1270
      %v1337 = vunpack.c.l.b16 %v1271
      %v1338 = vpack.c.b16 %v1307, %v1306
      %v1339 = vpack.c.b16 %v1309, %v1308
      %v1340 = vpack.c.b16 %v1311, %v1310
      %v1341 = vpack.c.b16 %v1313, %v1312
      %v1342 = vpack.c.b16 %v1315, %v1314
      %v1343 = vpack.c.b16 %v1317, %v1316
      %v1344 = vpack.c.b16 %v1319, %v1318
      %v1345 = vpack.c.b16 %v1321, %v1320
      %v1346 = vpack.c.b16 %v1323, %v1322
      %v1347 = vpack.c.b16 %v1325, %v1324
      %v1348 = vpack.c.b16 %v1327, %v1326
      %v1349 = vpack.c.b16 %v1329, %v1328
      %v1350 = vpack.c.b16 %v1331, %v1330
      %v1351 = vpack.c.b16 %v1333, %v1332
      %v1352 = vpack.c.b16 %v1335, %v1334
      %v1353 = vpack.c.b16 %v1337, %v1336
      %v1355 = vsel %vm734, %v1338, 0
      %v1358 = vsel %vm734, %v1339, 0
      %v1361 = vsel %vm734, %v1340, 0
      %v1364 = vsel %vm734, %v1341, 0
      %v1367 = vsel %vm734, %v1342, 0
      %v1370 = vsel %vm734, %v1343, 0
      %v1373 = vsel %vm734, %v1344, 0
      %v1376 = vsel %vm734, %v1345, 0
      %v1379 = vsel %vm734, %v1346, 0
      %v1382 = vsel %vm734, %v1347, 0
      %v1385 = vsel %vm734, %v1348, 0
      %v1388 = vsel %vm734, %v1349, 0
      %v1391 = vsel %vm734, %v1350, 0
      %v1394 = vsel %vm734, %v1351, 0
      %v1397 = vsel %vm734, %v1352, 0
      %v1400 = vsel %vm734, %v1353, 0
      %v1403 = vsel %vm783, %v1273, 0
      %1405 = vmatprep.subr.bf16.mxu0 0
      %1406 = vmatpush1.bf16.msra.mxu0 0
      %1407 = vmatprep.subr.bf16.mxu0 0
      %1408 = vmatpush1.bf16.msra.mxu0 0
      %1409 = vmatprep.subr.bf16.mxu0 0
      %1410 = vmatpush1.bf16.msra.mxu0 0
      %1411 = vmatprep.subr.bf16.mxu0 0
      %1412 = vmatpush1.bf16.msra.mxu0 0
      %1413 = vmatprep.subr.bf16.mxu0 0
      %1414 = vmatpush1.bf16.msra.mxu0 0
      %1415 = vmatprep.subr.bf16.mxu0 0
      %1416 = vmatpush1.bf16.msra.mxu0 0
      %1417 = vmatprep.subr.bf16.mxu0 0
      %1418 = vmatpush1.bf16.msra.mxu0 0
      %1419 = vmatprep.subr.bf16.mxu0 0
      %1420 = vmatpush1.bf16.msra.mxu0 %v1403
      %1421 = vmatprep.subr.bf16.mxu0 0
      %1422 = vmatpush2.bf16.msra.mxu0 0
      %1423 = vmatprep.subr.bf16.mxu0 0
      %1424 = vmatpush2.bf16.msra.mxu0 0
      %1425 = vmatprep.subr.bf16.mxu0 0
      %1426 = vmatpush2.bf16.msra.mxu0 0
      %1427 = vmatprep.subr.bf16.mxu0 0
      %1428 = vmatpush2.bf16.msra.mxu0 0
      %1429 = vmatprep.subr.bf16.mxu0 0
      %1430 = vmatpush2.bf16.msra.mxu0 0
      %1431 = vmatprep.subr.bf16.mxu0 0
      %1432 = vmatpush2.bf16.msra.mxu0 0
      %1433 = vmatprep.subr.bf16.mxu0 0
      %1434 = vmatpush2.bf16.msra.mxu0 0
      %1435 = vmatprep.subr.bf16.mxu0 0
      %1436 = vmatpush2.bf16.msra.mxu0 0
      %1437 = vmatprep.mubr.bf16.mxu0 0
      %1438 = vmatmul.mubr.bf16.gmra.mxu0 %v1355
      %v1439 = vpop.f32.mrf.mxu0
      %v1440 = vadd.f32 0.0, %v1439
      %v1441 = vpop.f32.mrf.mxu0
      %v1442 = vpop.f32.mrf.mxu0
      %v1443 = vadd.f32 0.0, %v1442
      %v1444 = vpop.f32.mrf.mxu0
      %1445 = vmatprep.mubr.bf16.mxu0 0
      %1446 = vmatmul.mubr.bf16.gmra.mxu0 %v1358
      %v1447 = vpop.f32.mrf.mxu0
      %v1448 = vadd.f32 0.0, %v1447
      %v1449 = vpop.f32.mrf.mxu0
      %v1450 = vpop.f32.mrf.mxu0
      %v1451 = vadd.f32 0.0, %v1450
      %v1452 = vpop.f32.mrf.mxu0
      %1453 = vmatprep.mubr.bf16.mxu0 0
      %1454 = vmatmul.mubr.bf16.gmra.mxu0 %v1361
      %v1455 = vpop.f32.mrf.mxu0
      %v1456 = vadd.f32 0.0, %v1455
      %v1457 = vpop.f32.mrf.mxu0
      %v1458 = vpop.f32.mrf.mxu0
      %v1459 = vadd.f32 0.0, %v1458
      %v1460 = vpop.f32.mrf.mxu0
      %1461 = vmatprep.mubr.bf16.mxu0 0
      %1462 = vmatmul.mubr.bf16.gmra.mxu0 %v1364
      %v1463 = vpop.f32.mrf.mxu0
      %v1464 = vadd.f32 0.0, %v1463
      %v1465 = vpop.f32.mrf.mxu0
      %v1466 = vpop.f32.mrf.mxu0
      %v1467 = vadd.f32 0.0, %v1466
      %v1468 = vpop.f32.mrf.mxu0
      %1469 = vmatprep.mubr.bf16.mxu0 0
      %1470 = vmatmul.mubr.bf16.gmra.mxu0 %v1367
      %v1471 = vpop.f32.mrf.mxu0
      %v1472 = vadd.f32 0.0, %v1471
      %v1473 = vpop.f32.mrf.mxu0
      %v1474 = vpop.f32.mrf.mxu0
      %v1475 = vadd.f32 0.0, %v1474
      %v1476 = vpop.f32.mrf.mxu0
      %1477 = vmatprep.mubr.bf16.mxu0 0
      %1478 = vmatmul.mubr.bf16.gmra.mxu0 %v1370
      %v1479 = vpop.f32.mrf.mxu0
      %v1480 = vadd.f32 0.0, %v1479
      %v1481 = vpop.f32.mrf.mxu0
      %v1482 = vpop.f32.mrf.mxu0
      %v1483 = vadd.f32 0.0, %v1482
      %v1484 = vpop.f32.mrf.mxu0
      %1485 = vmatprep.mubr.bf16.mxu0 0
      %1486 = vmatmul.mubr.bf16.gmra.mxu0 %v1373
      %v1487 = vpop.f32.mrf.mxu0
      %v1488 = vadd.f32 0.0, %v1487
      %v1489 = vpop.f32.mrf.mxu0
      %v1490 = vpop.f32.mrf.mxu0
      %v1491 = vadd.f32 0.0, %v1490
      %v1492 = vpop.f32.mrf.mxu0
      %1493 = vmatprep.mubr.bf16.mxu0 0
      %1494 = vmatmul.mubr.bf16.gmra.mxu0 %v1376
      %v1495 = vpop.f32.mrf.mxu0
      %v1496 = vadd.f32 0.0, %v1495
      %v1497 = vpop.f32.mrf.mxu0
      %v1498 = vpop.f32.mrf.mxu0
      %v1499 = vadd.f32 0.0, %v1498
      %v1500 = vpop.f32.mrf.mxu0
      %1501 = vmatprep.mubr.bf16.mxu0 0
      %1502 = vmatmul.mubr.bf16.gmra.mxu0 %v1379
      %v1503 = vpop.f32.mrf.mxu0
      %v1504 = vadd.f32 0.0, %v1503
      %v1505 = vpop.f32.mrf.mxu0
      %v1506 = vpop.f32.mrf.mxu0
      %v1507 = vadd.f32 0.0, %v1506
      %v1508 = vpop.f32.mrf.mxu0
      %1509 = vmatprep.mubr.bf16.mxu0 0
      %1510 = vmatmul.mubr.bf16.gmra.mxu0 %v1382
      %v1511 = vpop.f32.mrf.mxu0
      %v1512 = vadd.f32 0.0, %v1511
      %v1513 = vpop.f32.mrf.mxu0
      %v1514 = vpop.f32.mrf.mxu0
      %v1515 = vadd.f32 0.0, %v1514
      %v1516 = vpop.f32.mrf.mxu0
      %1517 = vmatprep.mubr.bf16.mxu0 0
      %1518 = vmatmul.mubr.bf16.gmra.mxu0 %v1385
      %v1519 = vpop.f32.mrf.mxu0
      %v1520 = vadd.f32 0.0, %v1519
      %v1521 = vpop.f32.mrf.mxu0
      %v1522 = vpop.f32.mrf.mxu0
      %v1523 = vadd.f32 0.0, %v1522
      %v1524 = vpop.f32.mrf.mxu0
      %1525 = vmatprep.mubr.bf16.mxu0 0
      %1526 = vmatmul.mubr.bf16.gmra.mxu0 %v1388
      %v1527 = vpop.f32.mrf.mxu0
      %v1528 = vadd.f32 0.0, %v1527
      %v1529 = vpop.f32.mrf.mxu0
      %v1530 = vpop.f32.mrf.mxu0
      %v1531 = vadd.f32 0.0, %v1530
      %v1532 = vpop.f32.mrf.mxu0
      %1533 = vmatprep.mubr.bf16.mxu0 0
      %1534 = vmatmul.mubr.bf16.gmra.mxu0 %v1391
      %v1535 = vpop.f32.mrf.mxu0
      %v1536 = vadd.f32 0.0, %v1535
      %v1537 = vpop.f32.mrf.mxu0
      %v1538 = vpop.f32.mrf.mxu0
      %v1539 = vadd.f32 0.0, %v1538
      %v1540 = vpop.f32.mrf.mxu0
      %1541 = vmatprep.mubr.bf16.mxu0 0
      %1542 = vmatmul.mubr.bf16.gmra.mxu0 %v1394
      %v1543 = vpop.f32.mrf.mxu0
      %v1544 = vadd.f32 0.0, %v1543
      %v1545 = vpop.f32.mrf.mxu0
      %v1546 = vpop.f32.mrf.mxu0
      %v1547 = vadd.f32 0.0, %v1546
      %v1548 = vpop.f32.mrf.mxu0
      %1549 = vmatprep.mubr.bf16.mxu0 0
      %1550 = vmatmul.mubr.bf16.gmra.mxu0 %v1397
      %v1551 = vpop.f32.mrf.mxu0
      %v1552 = vadd.f32 0.0, %v1551
      %v1553 = vpop.f32.mrf.mxu0
      %v1554 = vpop.f32.mrf.mxu0
      %v1555 = vadd.f32 0.0, %v1554
      %v1556 = vpop.f32.mrf.mxu0
      %1557 = vmatprep.mubr.bf16.mxu0 0
      %1558 = vmatmul.mubr.bf16.gmra.mxu0 %v1400
      %v1559 = vpop.f32.mrf.mxu0
      %v1560 = vadd.f32 0.0, %v1559
      %v1561 = vpop.f32.mrf.mxu0
      %v1562 = vpop.f32.mrf.mxu0
      %v1563 = vadd.f32 0.0, %v1562
      %v1564 = vpop.f32.mrf.mxu0
      %1565 = vdwg.mxu0
      %v1566 = vadd.f32 %v1114, %v1440
      %v1567 = vadd.f32 %v1117, %v1443
      %v1568 = vadd.f32 %v1122, %v1448
      %v1569 = vadd.f32 %v1125, %v1451
      %v1570 = vadd.f32 %v1130, %v1456
      %v1571 = vadd.f32 %v1133, %v1459
      %v1572 = vadd.f32 %v1138, %v1464
      %v1573 = vadd.f32 %v1141, %v1467
      %v1574 = vadd.f32 %v1146, %v1472
      %v1575 = vadd.f32 %v1149, %v1475
      %v1576 = vadd.f32 %v1154, %v1480
      %v1577 = vadd.f32 %v1157, %v1483
      %v1578 = vadd.f32 %v1162, %v1488
      %v1579 = vadd.f32 %v1165, %v1491
      %v1580 = vadd.f32 %v1170, %v1496
      %v1581 = vadd.f32 %v1173, %v1499
      %v1582 = vadd.f32 %v1178, %v1504
      %v1583 = vadd.f32 %v1181, %v1507
      %v1584 = vadd.f32 %v1186, %v1512
      %v1585 = vadd.f32 %v1189, %v1515
      %v1586 = vadd.f32 %v1194, %v1520
      %v1587 = vadd.f32 %v1197, %v1523
      %v1588 = vadd.f32 %v1202, %v1528
      %v1589 = vadd.f32 %v1205, %v1531
      %v1590 = vadd.f32 %v1210, %v1536
      %v1591 = vadd.f32 %v1213, %v1539
      %v1592 = vadd.f32 %v1218, %v1544
      %v1593 = vadd.f32 %v1221, %v1547
      %v1594 = vadd.f32 %v1226, %v1552
      %v1595 = vadd.f32 %v1229, %v1555
      %v1596 = vadd.f32 %v1234, %v1560
      %v1597 = vadd.f32 %v1237, %v1563
      %v1598 = vld [vmem:[%s545] sm:$0xf]
      %v1599 = vld [vmem:[%s545 + $0x4] sm:$0xf]
      %v1600 = vld [vmem:[%s545 + $0x8] sm:$0xf]
      %v1601 = vld [vmem:[%s545 + $0xc] sm:$0xf]
      %v1602 = vld [vmem:[%s545 + $0x10] sm:$0xf]
      %v1603 = vld [vmem:[%s545 + $0x14] sm:$0xf]
      %v1604 = vld [vmem:[%s545 + $0x18] sm:$0xf]
      %v1605 = vld [vmem:[%s545 + $0x1c] sm:$0xf]
      %v1606 = vld [vmem:[%s545 + $0x20] sm:$0xf]
      %v1607 = vld [vmem:[%s545 + $0x24] sm:$0xf]
      %v1608 = vld [vmem:[%s545 + $0x28] sm:$0xf]
      %v1609 = vld [vmem:[%s545 + $0x2c] sm:$0xf]
      %v1610 = vld [vmem:[%s545 + $0x30] sm:$0xf]
      %v1611 = vld [vmem:[%s545 + $0x34] sm:$0xf]
      %v1612 = vld [vmem:[%s545 + $0x38] sm:$0xf]
      %v1613 = vld [vmem:[%s545 + $0x3c] sm:$0xf]
      %v1614 = vld [vmem:[%s545 + $0x40] sm:$0xf]
      %v1615 = vld [vmem:[%s545 + $0x44] sm:$0xf]
      %v1616 = vld [vmem:[%s545 + $0x48] sm:$0xf]
      %v1617 = vld [vmem:[%s545 + $0x4c] sm:$0xf]
      %v1618 = vld [vmem:[%s545 + $0x50] sm:$0xf]
      %v1619 = vld [vmem:[%s545 + $0x54] sm:$0xf]
      %v1620 = vld [vmem:[%s545 + $0x58] sm:$0xf]
      %v1621 = vld [vmem:[%s545 + $0x5c] sm:$0xf]
      %v1622 = vld [vmem:[%s545 + $0x60] sm:$0xf]
      %v1623 = vld [vmem:[%s545 + $0x64] sm:$0xf]
      %v1624 = vld [vmem:[%s545 + $0x68] sm:$0xf]
      %v1625 = vld [vmem:[%s545 + $0x6c] sm:$0xf]
      %v1626 = vld [vmem:[%s545 + $0x70] sm:$0xf]
      %v1627 = vld [vmem:[%s545 + $0x74] sm:$0xf]
      %v1628 = vld [vmem:[%s545 + $0x78] sm:$0xf]
      %v1629 = vld [vmem:[%s545 + $0x7c] sm:$0xf]
      %s1630 = scalar_lea.vmem %s9, 12
      %v1631 = vld [vmem:[%s1630] sm:$0xf]
      %v1664 = vunpack.c.l.b16 %v1598
      %v1665 = vunpack.c.l.b16 %v1599
      %v1666 = vunpack.c.l.b16 %v1600
      %v1667 = vunpack.c.l.b16 %v1601
      %v1668 = vunpack.c.l.b16 %v1602
      %v1669 = vunpack.c.l.b16 %v1603
      %v1670 = vunpack.c.l.b16 %v1604
      %v1671 = vunpack.c.l.b16 %v1605
      %v1672 = vunpack.c.l.b16 %v1606
      %v1673 = vunpack.c.l.b16 %v1607
      %v1674 = vunpack.c.l.b16 %v1608
      %v1675 = vunpack.c.l.b16 %v1609
      %v1676 = vunpack.c.l.b16 %v1610
      %v1677 = vunpack.c.l.b16 %v1611
      %v1678 = vunpack.c.l.b16 %v1612
      %v1679 = vunpack.c.l.b16 %v1613
      %v1680 = vunpack.c.l.b16 %v1614
      %v1681 = vunpack.c.l.b16 %v1615
      %v1682 = vunpack.c.l.b16 %v1616
      %v1683 = vunpack.c.l.b16 %v1617
      %v1684 = vunpack.c.l.b16 %v1618
      %v1685 = vunpack.c.l.b16 %v1619
      %v1686 = vunpack.c.l.b16 %v1620
      %v1687 = vunpack.c.l.b16 %v1621
      %v1688 = vunpack.c.l.b16 %v1622
      %v1689 = vunpack.c.l.b16 %v1623
      %v1690 = vunpack.c.l.b16 %v1624
      %v1691 = vunpack.c.l.b16 %v1625
      %v1692 = vunpack.c.l.b16 %v1626
      %v1693 = vunpack.c.l.b16 %v1627
      %v1694 = vunpack.c.l.b16 %v1628
      %v1695 = vunpack.c.l.b16 %v1629
      %v1696 = vpack.c.b16 %v1665, %v1664
      %v1697 = vpack.c.b16 %v1667, %v1666
      %v1698 = vpack.c.b16 %v1669, %v1668
      %v1699 = vpack.c.b16 %v1671, %v1670
      %v1700 = vpack.c.b16 %v1673, %v1672
      %v1701 = vpack.c.b16 %v1675, %v1674
      %v1702 = vpack.c.b16 %v1677, %v1676
      %v1703 = vpack.c.b16 %v1679, %v1678
      %v1704 = vpack.c.b16 %v1681, %v1680
      %v1705 = vpack.c.b16 %v1683, %v1682
      %v1706 = vpack.c.b16 %v1685, %v1684
      %v1707 = vpack.c.b16 %v1687, %v1686
      %v1708 = vpack.c.b16 %v1689, %v1688
      %v1709 = vpack.c.b16 %v1691, %v1690
      %v1710 = vpack.c.b16 %v1693, %v1692
      %v1711 = vpack.c.b16 %v1695, %v1694
      %v1713 = vsel %vm734, %v1696, 0
      %v1716 = vsel %vm734, %v1697, 0
      %v1719 = vsel %vm734, %v1698, 0
      %v1722 = vsel %vm734, %v1699, 0
      %v1725 = vsel %vm734, %v1700, 0
      %v1728 = vsel %vm734, %v1701, 0
      %v1731 = vsel %vm734, %v1702, 0
      %v1734 = vsel %vm734, %v1703, 0
      %v1737 = vsel %vm734, %v1704, 0
      %v1740 = vsel %vm734, %v1705, 0
      %v1743 = vsel %vm734, %v1706, 0
      %v1746 = vsel %vm734, %v1707, 0
      %v1749 = vsel %vm734, %v1708, 0
      %v1752 = vsel %vm734, %v1709, 0
      %v1755 = vsel %vm734, %v1710, 0
      %v1758 = vsel %vm734, %v1711, 0
      %v1761 = vsel %vm783, %v1631, 0
      %1763 = vmatprep.subr.bf16.mxu0 0
      %1764 = vmatpush1.bf16.msra.mxu0 0
      %1765 = vmatprep.subr.bf16.mxu0 0
      %1766 = vmatpush1.bf16.msra.mxu0 0
      %1767 = vmatprep.subr.bf16.mxu0 0
      %1768 = vmatpush1.bf16.msra.mxu0 0
      %1769 = vmatprep.subr.bf16.mxu0 0
      %1770 = vmatpush1.bf16.msra.mxu0 0
      %1771 = vmatprep.subr.bf16.mxu0 0
      %1772 = vmatpush1.bf16.msra.mxu0 0
      %1773 = vmatprep.subr.bf16.mxu0 0
      %1774 = vmatpush1.bf16.msra.mxu0 0
      %1775 = vmatprep.subr.bf16.mxu0 0
      %1776 = vmatpush1.bf16.msra.mxu0 0
      %1777 = vmatprep.subr.bf16.mxu0 0
      %1778 = vmatpush1.bf16.msra.mxu0 %v1761
      %1779 = vmatprep.subr.bf16.mxu0 0
      %1780 = vmatpush2.bf16.msra.mxu0 0
      %1781 = vmatprep.subr.bf16.mxu0 0
      %1782 = vmatpush2.bf16.msra.mxu0 0
      %1783 = vmatprep.subr.bf16.mxu0 0
      %1784 = vmatpush2.bf16.msra.mxu0 0
      %1785 = vmatprep.subr.bf16.mxu0 0
      %1786 = vmatpush2.bf16.msra.mxu0 0
      %1787 = vmatprep.subr.bf16.mxu0 0
      %1788 = vmatpush2.bf16.msra.mxu0 0
      %1789 = vmatprep.subr.bf16.mxu0 0
      %1790 = vmatpush2.bf16.msra.mxu0 0
      %1791 = vmatprep.subr.bf16.mxu0 0
      %1792 = vmatpush2.bf16.msra.mxu0 0
      %1793 = vmatprep.subr.bf16.mxu0 0
      %1794 = vmatpush2.bf16.msra.mxu0 0
      %1795 = vmatprep.mubr.bf16.mxu0 0
      %1796 = vmatmul.mubr.bf16.gmra.mxu0 %v1713
      %v1797 = vpop.f32.mrf.mxu0
      %v1798 = vadd.f32 0.0, %v1797
      %v1799 = vpop.f32.mrf.mxu0
      %v1800 = vpop.f32.mrf.mxu0
      %v1801 = vadd.f32 0.0, %v1800
      %v1802 = vpop.f32.mrf.mxu0
      %1803 = vmatprep.mubr.bf16.mxu0 0
      %1804 = vmatmul.mubr.bf16.gmra.mxu0 %v1716
      %v1805 = vpop.f32.mrf.mxu0
      %v1806 = vadd.f32 0.0, %v1805
      %v1807 = vpop.f32.mrf.mxu0
      %v1808 = vpop.f32.mrf.mxu0
      %v1809 = vadd.f32 0.0, %v1808
      %v1810 = vpop.f32.mrf.mxu0
      %1811 = vmatprep.mubr.bf16.mxu0 0
      %1812 = vmatmul.mubr.bf16.gmra.mxu0 %v1719
      %v1813 = vpop.f32.mrf.mxu0
      %v1814 = vadd.f32 0.0, %v1813
      %v1815 = vpop.f32.mrf.mxu0
      %v1816 = vpop.f32.mrf.mxu0
      %v1817 = vadd.f32 0.0, %v1816
      %v1818 = vpop.f32.mrf.mxu0
      %1819 = vmatprep.mubr.bf16.mxu0 0
      %1820 = vmatmul.mubr.bf16.gmra.mxu0 %v1722
      %v1821 = vpop.f32.mrf.mxu0
      %v1822 = vadd.f32 0.0, %v1821
      %v1823 = vpop.f32.mrf.mxu0
      %v1824 = vpop.f32.mrf.mxu0
      %v1825 = vadd.f32 0.0, %v1824
      %v1826 = vpop.f32.mrf.mxu0
      %1827 = vmatprep.mubr.bf16.mxu0 0
      %1828 = vmatmul.mubr.bf16.gmra.mxu0 %v1725
      %v1829 = vpop.f32.mrf.mxu0
      %v1830 = vadd.f32 0.0, %v1829
      %v1831 = vpop.f32.mrf.mxu0
      %v1832 = vpop.f32.mrf.mxu0
      %v1833 = vadd.f32 0.0, %v1832
      %v1834 = vpop.f32.mrf.mxu0
      %1835 = vmatprep.mubr.bf16.mxu0 0
      %1836 = vmatmul.mubr.bf16.gmra.mxu0 %v1728
      %v1837 = vpop.f32.mrf.mxu0
      %v1838 = vadd.f32 0.0, %v1837
      %v1839 = vpop.f32.mrf.mxu0
      %v1840 = vpop.f32.mrf.mxu0
      %v1841 = vadd.f32 0.0, %v1840
      %v1842 = vpop.f32.mrf.mxu0
      %1843 = vmatprep.mubr.bf16.mxu0 0
      %1844 = vmatmul.mubr.bf16.gmra.mxu0 %v1731
      %v1845 = vpop.f32.mrf.mxu0
      %v1846 = vadd.f32 0.0, %v1845
      %v1847 = vpop.f32.mrf.mxu0
      %v1848 = vpop.f32.mrf.mxu0
      %v1849 = vadd.f32 0.0, %v1848
      %v1850 = vpop.f32.mrf.mxu0
      %1851 = vmatprep.mubr.bf16.mxu0 0
      %1852 = vmatmul.mubr.bf16.gmra.mxu0 %v1734
      %v1853 = vpop.f32.mrf.mxu0
      %v1854 = vadd.f32 0.0, %v1853
      %v1855 = vpop.f32.mrf.mxu0
      %v1856 = vpop.f32.mrf.mxu0
      %v1857 = vadd.f32 0.0, %v1856
      %v1858 = vpop.f32.mrf.mxu0
      %1859 = vmatprep.mubr.bf16.mxu0 0
      %1860 = vmatmul.mubr.bf16.gmra.mxu0 %v1737
      %v1861 = vpop.f32.mrf.mxu0
      %v1862 = vadd.f32 0.0, %v1861
      %v1863 = vpop.f32.mrf.mxu0
      %v1864 = vpop.f32.mrf.mxu0
      %v1865 = vadd.f32 0.0, %v1864
      %v1866 = vpop.f32.mrf.mxu0
      %1867 = vmatprep.mubr.bf16.mxu0 0
      %1868 = vmatmul.mubr.bf16.gmra.mxu0 %v1740
      %v1869 = vpop.f32.mrf.mxu0
      %v1870 = vadd.f32 0.0, %v1869
      %v1871 = vpop.f32.mrf.mxu0
      %v1872 = vpop.f32.mrf.mxu0
      %v1873 = vadd.f32 0.0, %v1872
      %v1874 = vpop.f32.mrf.mxu0
      %1875 = vmatprep.mubr.bf16.mxu0 0
      %1876 = vmatmul.mubr.bf16.gmra.mxu0 %v1743
      %v1877 = vpop.f32.mrf.mxu0
      %v1878 = vadd.f32 0.0, %v1877
      %v1879 = vpop.f32.mrf.mxu0
      %v1880 = vpop.f32.mrf.mxu0
      %v1881 = vadd.f32 0.0, %v1880
      %v1882 = vpop.f32.mrf.mxu0
      %1883 = vmatprep.mubr.bf16.mxu0 0
      %1884 = vmatmul.mubr.bf16.gmra.mxu0 %v1746
      %v1885 = vpop.f32.mrf.mxu0
      %v1886 = vadd.f32 0.0, %v1885
      %v1887 = vpop.f32.mrf.mxu0
      %v1888 = vpop.f32.mrf.mxu0
      %v1889 = vadd.f32 0.0, %v1888
      %v1890 = vpop.f32.mrf.mxu0
      %1891 = vmatprep.mubr.bf16.mxu0 0
      %1892 = vmatmul.mubr.bf16.gmra.mxu0 %v1749
      %v1893 = vpop.f32.mrf.mxu0
      %v1894 = vadd.f32 0.0, %v1893
      %v1895 = vpop.f32.mrf.mxu0
      %v1896 = vpop.f32.mrf.mxu0
      %v1897 = vadd.f32 0.0, %v1896
      %v1898 = vpop.f32.mrf.mxu0
      %1899 = vmatprep.mubr.bf16.mxu0 0
      %1900 = vmatmul.mubr.bf16.gmra.mxu0 %v1752
      %v1901 = vpop.f32.mrf.mxu0
      %v1902 = vadd.f32 0.0, %v1901
      %v1903 = vpop.f32.mrf.mxu0
      %v1904 = vpop.f32.mrf.mxu0
      %v1905 = vadd.f32 0.0, %v1904
      %v1906 = vpop.f32.mrf.mxu0
      %1907 = vmatprep.mubr.bf16.mxu0 0
      %1908 = vmatmul.mubr.bf16.gmra.mxu0 %v1755
      %v1909 = vpop.f32.mrf.mxu0
      %v1910 = vadd.f32 0.0, %v1909
      %v1911 = vpop.f32.mrf.mxu0
      %v1912 = vpop.f32.mrf.mxu0
      %v1913 = vadd.f32 0.0, %v1912
      %v1914 = vpop.f32.mrf.mxu0
      %1915 = vmatprep.mubr.bf16.mxu0 0
      %1916 = vmatmul.mubr.bf16.gmra.mxu0 %v1758
      %v1917 = vpop.f32.mrf.mxu0
      %v1918 = vadd.f32 0.0, %v1917
      %v1919 = vpop.f32.mrf.mxu0
      %v1920 = vpop.f32.mrf.mxu0
      %v1921 = vadd.f32 0.0, %v1920
      %v1922 = vpop.f32.mrf.mxu0
      %1923 = vdwg.mxu0
      %v1924 = vadd.f32 %v1566, %v1798
      %v1925 = vadd.f32 %v1567, %v1801
      %v1926 = vadd.f32 %v1568, %v1806
      %v1927 = vadd.f32 %v1569, %v1809
      %v1928 = vadd.f32 %v1570, %v1814
      %v1929 = vadd.f32 %v1571, %v1817
      %v1930 = vadd.f32 %v1572, %v1822
      %v1931 = vadd.f32 %v1573, %v1825
      %v1932 = vadd.f32 %v1574, %v1830
      %v1933 = vadd.f32 %v1575, %v1833
      %v1934 = vadd.f32 %v1576, %v1838
      %v1935 = vadd.f32 %v1577, %v1841
      %v1936 = vadd.f32 %v1578, %v1846
      %v1937 = vadd.f32 %v1579, %v1849
      %v1938 = vadd.f32 %v1580, %v1854
      %v1939 = vadd.f32 %v1581, %v1857
      %v1940 = vadd.f32 %v1582, %v1862
      %v1941 = vadd.f32 %v1583, %v1865
      %v1942 = vadd.f32 %v1584, %v1870
      %v1943 = vadd.f32 %v1585, %v1873
      %v1944 = vadd.f32 %v1586, %v1878
      %v1945 = vadd.f32 %v1587, %v1881
      %v1946 = vadd.f32 %v1588, %v1886
      %v1947 = vadd.f32 %v1589, %v1889
      %v1948 = vadd.f32 %v1590, %v1894
      %v1949 = vadd.f32 %v1591, %v1897
      %v1950 = vadd.f32 %v1592, %v1902
      %v1951 = vadd.f32 %v1593, %v1905
      %v1952 = vadd.f32 %v1594, %v1910
      %v1953 = vadd.f32 %v1595, %v1913
      %v1954 = vadd.f32 %v1596, %v1918
      %v1955 = vadd.f32 %v1597, %v1921
      %v1956 = vld [vmem:[%s551] sm:$0xf]
      %v1957 = vld [vmem:[%s551 + $0x4] sm:$0xf]
      %v1958 = vld [vmem:[%s551 + $0x8] sm:$0xf]
      %v1959 = vld [vmem:[%s551 + $0xc] sm:$0xf]
      %v1960 = vld [vmem:[%s551 + $0x10] sm:$0xf]
      %v1961 = vld [vmem:[%s551 + $0x14] sm:$0xf]
      %v1962 = vld [vmem:[%s551 + $0x18] sm:$0xf]
      %v1963 = vld [vmem:[%s551 + $0x1c] sm:$0xf]
      %v1964 = vld [vmem:[%s551 + $0x20] sm:$0xf]
      %v1965 = vld [vmem:[%s551 + $0x24] sm:$0xf]
      %v1966 = vld [vmem:[%s551 + $0x28] sm:$0xf]
      %v1967 = vld [vmem:[%s551 + $0x2c] sm:$0xf]
      %v1968 = vld [vmem:[%s551 + $0x30] sm:$0xf]
      %v1969 = vld [vmem:[%s551 + $0x34] sm:$0xf]
      %v1970 = vld [vmem:[%s551 + $0x38] sm:$0xf]
      %v1971 = vld [vmem:[%s551 + $0x3c] sm:$0xf]
      %v1972 = vld [vmem:[%s551 + $0x40] sm:$0xf]
      %v1973 = vld [vmem:[%s551 + $0x44] sm:$0xf]
      %v1974 = vld [vmem:[%s551 + $0x48] sm:$0xf]
      %v1975 = vld [vmem:[%s551 + $0x4c] sm:$0xf]
      %v1976 = vld [vmem:[%s551 + $0x50] sm:$0xf]
      %v1977 = vld [vmem:[%s551 + $0x54] sm:$0xf]
      %v1978 = vld [vmem:[%s551 + $0x58] sm:$0xf]
      %v1979 = vld [vmem:[%s551 + $0x5c] sm:$0xf]
      %v1980 = vld [vmem:[%s551 + $0x60] sm:$0xf]
      %v1981 = vld [vmem:[%s551 + $0x64] sm:$0xf]
      %v1982 = vld [vmem:[%s551 + $0x68] sm:$0xf]
      %v1983 = vld [vmem:[%s551 + $0x6c] sm:$0xf]
      %v1984 = vld [vmem:[%s551 + $0x70] sm:$0xf]
      %v1985 = vld [vmem:[%s551 + $0x74] sm:$0xf]
      %v1986 = vld [vmem:[%s551 + $0x78] sm:$0xf]
      %v1987 = vld [vmem:[%s551 + $0x7c] sm:$0xf]
      %s1988 = scalar_lea.vmem %s9, 16
      %v1989 = vld [vmem:[%s1988] sm:$0xf]
      %v2022 = vunpack.c.l.b16 %v1956
      %v2023 = vunpack.c.l.b16 %v1957
      %v2024 = vunpack.c.l.b16 %v1958
      %v2025 = vunpack.c.l.b16 %v1959
      %v2026 = vunpack.c.l.b16 %v1960
      %v2027 = vunpack.c.l.b16 %v1961
      %v2028 = vunpack.c.l.b16 %v1962
      %v2029 = vunpack.c.l.b16 %v1963
      %v2030 = vunpack.c.l.b16 %v1964
      %v2031 = vunpack.c.l.b16 %v1965
      %v2032 = vunpack.c.l.b16 %v1966
      %v2033 = vunpack.c.l.b16 %v1967
      %v2034 = vunpack.c.l.b16 %v1968
      %v2035 = vunpack.c.l.b16 %v1969
      %v2036 = vunpack.c.l.b16 %v1970
      %v2037 = vunpack.c.l.b16 %v1971
      %v2038 = vunpack.c.l.b16 %v1972
      %v2039 = vunpack.c.l.b16 %v1973
      %v2040 = vunpack.c.l.b16 %v1974
      %v2041 = vunpack.c.l.b16 %v1975
      %v2042 = vunpack.c.l.b16 %v1976
      %v2043 = vunpack.c.l.b16 %v1977
      %v2044 = vunpack.c.l.b16 %v1978
      %v2045 = vunpack.c.l.b16 %v1979
      %v2046 = vunpack.c.l.b16 %v1980
      %v2047 = vunpack.c.l.b16 %v1981
      %v2048 = vunpack.c.l.b16 %v1982
      %v2049 = vunpack.c.l.b16 %v1983
      %v2050 = vunpack.c.l.b16 %v1984
      %v2051 = vunpack.c.l.b16 %v1985
      %v2052 = vunpack.c.l.b16 %v1986
      %v2053 = vunpack.c.l.b16 %v1987
      %v2054 = vpack.c.b16 %v2023, %v2022
      %v2055 = vpack.c.b16 %v2025, %v2024
      %v2056 = vpack.c.b16 %v2027, %v2026
      %v2057 = vpack.c.b16 %v2029, %v2028
      %v2058 = vpack.c.b16 %v2031, %v2030
      %v2059 = vpack.c.b16 %v2033, %v2032
      %v2060 = vpack.c.b16 %v2035, %v2034
      %v2061 = vpack.c.b16 %v2037, %v2036
      %v2062 = vpack.c.b16 %v2039, %v2038
      %v2063 = vpack.c.b16 %v2041, %v2040
      %v2064 = vpack.c.b16 %v2043, %v2042
      %v2065 = vpack.c.b16 %v2045, %v2044
      %v2066 = vpack.c.b16 %v2047, %v2046
      %v2067 = vpack.c.b16 %v2049, %v2048
      %v2068 = vpack.c.b16 %v2051, %v2050
      %v2069 = vpack.c.b16 %v2053, %v2052
      %v2071 = vsel %vm734, %v2054, 0
      %v2074 = vsel %vm734, %v2055, 0
      %v2077 = vsel %vm734, %v2056, 0
      %v2080 = vsel %vm734, %v2057, 0
      %v2083 = vsel %vm734, %v2058, 0
      %v2086 = vsel %vm734, %v2059, 0
      %v2089 = vsel %vm734, %v2060, 0
      %v2092 = vsel %vm734, %v2061, 0
      %v2095 = vsel %vm734, %v2062, 0
      %v2098 = vsel %vm734, %v2063, 0
      %v2101 = vsel %vm734, %v2064, 0
      %v2104 = vsel %vm734, %v2065, 0
      %v2107 = vsel %vm734, %v2066, 0
      %v2110 = vsel %vm734, %v2067, 0
      %v2113 = vsel %vm734, %v2068, 0
      %v2116 = vsel %vm734, %v2069, 0
      %v2119 = vsel %vm783, %v1989, 0
      %2121 = vmatprep.subr.bf16.mxu0 0
      %2122 = vmatpush1.bf16.msra.mxu0 0
      %2123 = vmatprep.subr.bf16.mxu0 0
      %2124 = vmatpush1.bf16.msra.mxu0 0
      %2125 = vmatprep.subr.bf16.mxu0 0
      %2126 = vmatpush1.bf16.msra.mxu0 0
      %2127 = vmatprep.subr.bf16.mxu0 0
      %2128 = vmatpush1.bf16.msra.mxu0 0
      %2129 = vmatprep.subr.bf16.mxu0 0
      %2130 = vmatpush1.bf16.msra.mxu0 0
      %2131 = vmatprep.subr.bf16.mxu0 0
      %2132 = vmatpush1.bf16.msra.mxu0 0
      %2133 = vmatprep.subr.bf16.mxu0 0
      %2134 = vmatpush1.bf16.msra.mxu0 0
      %2135 = vmatprep.subr.bf16.mxu0 0
      %2136 = vmatpush1.bf16.msra.mxu0 %v2119
      %2137 = vmatprep.subr.bf16.mxu0 0
      %2138 = vmatpush2.bf16.msra.mxu0 0
      %2139 = vmatprep.subr.bf16.mxu0 0
      %2140 = vmatpush2.bf16.msra.mxu0 0
      %2141 = vmatprep.subr.bf16.mxu0 0
      %2142 = vmatpush2.bf16.msra.mxu0 0
      %2143 = vmatprep.subr.bf16.mxu0 0
      %2144 = vmatpush2.bf16.msra.mxu0 0
      %2145 = vmatprep.subr.bf16.mxu0 0
      %2146 = vmatpush2.bf16.msra.mxu0 0
      %2147 = vmatprep.subr.bf16.mxu0 0
      %2148 = vmatpush2.bf16.msra.mxu0 0
      %2149 = vmatprep.subr.bf16.mxu0 0
      %2150 = vmatpush2.bf16.msra.mxu0 0
      %2151 = vmatprep.subr.bf16.mxu0 0
      %2152 = vmatpush2.bf16.msra.mxu0 0
      %2153 = vmatprep.mubr.bf16.mxu0 0
      %2154 = vmatmul.mubr.bf16.gmra.mxu0 %v2071
      %v2155 = vpop.f32.mrf.mxu0
      %v2156 = vadd.f32 0.0, %v2155
      %v2157 = vpop.f32.mrf.mxu0
      %v2158 = vpop.f32.mrf.mxu0
      %v2159 = vadd.f32 0.0, %v2158
      %v2160 = vpop.f32.mrf.mxu0
      %2161 = vmatprep.mubr.bf16.mxu0 0
      %2162 = vmatmul.mubr.bf16.gmra.mxu0 %v2074
      %v2163 = vpop.f32.mrf.mxu0
      %v2164 = vadd.f32 0.0, %v2163
      %v2165 = vpop.f32.mrf.mxu0
      %v2166 = vpop.f32.mrf.mxu0
      %v2167 = vadd.f32 0.0, %v2166
      %v2168 = vpop.f32.mrf.mxu0
      %2169 = vmatprep.mubr.bf16.mxu0 0
      %2170 = vmatmul.mubr.bf16.gmra.mxu0 %v2077
      %v2171 = vpop.f32.mrf.mxu0
      %v2172 = vadd.f32 0.0, %v2171
      %v2173 = vpop.f32.mrf.mxu0
      %v2174 = vpop.f32.mrf.mxu0
      %v2175 = vadd.f32 0.0, %v2174
      %v2176 = vpop.f32.mrf.mxu0
      %2177 = vmatprep.mubr.bf16.mxu0 0
      %2178 = vmatmul.mubr.bf16.gmra.mxu0 %v2080
      %v2179 = vpop.f32.mrf.mxu0
      %v2180 = vadd.f32 0.0, %v2179
      %v2181 = vpop.f32.mrf.mxu0
      %v2182 = vpop.f32.mrf.mxu0
      %v2183 = vadd.f32 0.0, %v2182
      %v2184 = vpop.f32.mrf.mxu0
      %2185 = vmatprep.mubr.bf16.mxu0 0
      %2186 = vmatmul.mubr.bf16.gmra.mxu0 %v2083
      %v2187 = vpop.f32.mrf.mxu0
      %v2188 = vadd.f32 0.0, %v2187
      %v2189 = vpop.f32.mrf.mxu0
      %v2190 = vpop.f32.mrf.mxu0
      %v2191 = vadd.f32 0.0, %v2190
      %v2192 = vpop.f32.mrf.mxu0
      %2193 = vmatprep.mubr.bf16.mxu0 0
      %2194 = vmatmul.mubr.bf16.gmra.mxu0 %v2086
      %v2195 = vpop.f32.mrf.mxu0
      %v2196 = vadd.f32 0.0, %v2195
      %v2197 = vpop.f32.mrf.mxu0
      %v2198 = vpop.f32.mrf.mxu0
      %v2199 = vadd.f32 0.0, %v2198
      %v2200 = vpop.f32.mrf.mxu0
      %2201 = vmatprep.mubr.bf16.mxu0 0
      %2202 = vmatmul.mubr.bf16.gmra.mxu0 %v2089
      %v2203 = vpop.f32.mrf.mxu0
      %v2204 = vadd.f32 0.0, %v2203
      %v2205 = vpop.f32.mrf.mxu0
      %v2206 = vpop.f32.mrf.mxu0
      %v2207 = vadd.f32 0.0, %v2206
      %v2208 = vpop.f32.mrf.mxu0
      %2209 = vmatprep.mubr.bf16.mxu0 0
      %2210 = vmatmul.mubr.bf16.gmra.mxu0 %v2092
      %v2211 = vpop.f32.mrf.mxu0
      %v2212 = vadd.f32 0.0, %v2211
      %v2213 = vpop.f32.mrf.mxu0
      %v2214 = vpop.f32.mrf.mxu0
      %v2215 = vadd.f32 0.0, %v2214
      %v2216 = vpop.f32.mrf.mxu0
      %2217 = vmatprep.mubr.bf16.mxu0 0
      %2218 = vmatmul.mubr.bf16.gmra.mxu0 %v2095
      %v2219 = vpop.f32.mrf.mxu0
      %v2220 = vadd.f32 0.0, %v2219
      %v2221 = vpop.f32.mrf.mxu0
      %v2222 = vpop.f32.mrf.mxu0
      %v2223 = vadd.f32 0.0, %v2222
      %v2224 = vpop.f32.mrf.mxu0
      %2225 = vmatprep.mubr.bf16.mxu0 0
      %2226 = vmatmul.mubr.bf16.gmra.mxu0 %v2098
      %v2227 = vpop.f32.mrf.mxu0
      %v2228 = vadd.f32 0.0, %v2227
      %v2229 = vpop.f32.mrf.mxu0
      %v2230 = vpop.f32.mrf.mxu0
      %v2231 = vadd.f32 0.0, %v2230
      %v2232 = vpop.f32.mrf.mxu0
      %2233 = vmatprep.mubr.bf16.mxu0 0
      %2234 = vmatmul.mubr.bf16.gmra.mxu0 %v2101
      %v2235 = vpop.f32.mrf.mxu0
      %v2236 = vadd.f32 0.0, %v2235
      %v2237 = vpop.f32.mrf.mxu0
      %v2238 = vpop.f32.mrf.mxu0
      %v2239 = vadd.f32 0.0, %v2238
      %v2240 = vpop.f32.mrf.mxu0
      %2241 = vmatprep.mubr.bf16.mxu0 0
      %2242 = vmatmul.mubr.bf16.gmra.mxu0 %v2104
      %v2243 = vpop.f32.mrf.mxu0
      %v2244 = vadd.f32 0.0, %v2243
      %v2245 = vpop.f32.mrf.mxu0
      %v2246 = vpop.f32.mrf.mxu0
      %v2247 = vadd.f32 0.0, %v2246
      %v2248 = vpop.f32.mrf.mxu0
      %2249 = vmatprep.mubr.bf16.mxu0 0
      %2250 = vmatmul.mubr.bf16.gmra.mxu0 %v2107
      %v2251 = vpop.f32.mrf.mxu0
      %v2252 = vadd.f32 0.0, %v2251
      %v2253 = vpop.f32.mrf.mxu0
      %v2254 = vpop.f32.mrf.mxu0
      %v2255 = vadd.f32 0.0, %v2254
      %v2256 = vpop.f32.mrf.mxu0
      %2257 = vmatprep.mubr.bf16.mxu0 0
      %2258 = vmatmul.mubr.bf16.gmra.mxu0 %v2110
      %v2259 = vpop.f32.mrf.mxu0
      %v2260 = vadd.f32 0.0, %v2259
      %v2261 = vpop.f32.mrf.mxu0
      %v2262 = vpop.f32.mrf.mxu0
      %v2263 = vadd.f32 0.0, %v2262
      %v2264 = vpop.f32.mrf.mxu0
      %2265 = vmatprep.mubr.bf16.mxu0 0
      %2266 = vmatmul.mubr.bf16.gmra.mxu0 %v2113
      %v2267 = vpop.f32.mrf.mxu0
      %v2268 = vadd.f32 0.0, %v2267
      %v2269 = vpop.f32.mrf.mxu0
      %v2270 = vpop.f32.mrf.mxu0
      %v2271 = vadd.f32 0.0, %v2270
      %v2272 = vpop.f32.mrf.mxu0
      %2273 = vmatprep.mubr.bf16.mxu0 0
      %2274 = vmatmul.mubr.bf16.gmra.mxu0 %v2116
      %v2275 = vpop.f32.mrf.mxu0
      %v2276 = vadd.f32 0.0, %v2275
      %v2277 = vpop.f32.mrf.mxu0
      %v2278 = vpop.f32.mrf.mxu0
      %v2279 = vadd.f32 0.0, %v2278
      %v2280 = vpop.f32.mrf.mxu0
      %2281 = vdwg.mxu0
      %v2282 = vadd.f32 %v1924, %v2156
      %v2283 = vadd.f32 %v1925, %v2159
      %v2284 = vadd.f32 %v1926, %v2164
      %v2285 = vadd.f32 %v1927, %v2167
      %v2286 = vadd.f32 %v1928, %v2172
      %v2287 = vadd.f32 %v1929, %v2175
      %v2288 = vadd.f32 %v1930, %v2180
      %v2289 = vadd.f32 %v1931, %v2183
      %v2290 = vadd.f32 %v1932, %v2188
      %v2291 = vadd.f32 %v1933, %v2191
      %v2292 = vadd.f32 %v1934, %v2196
      %v2293 = vadd.f32 %v1935, %v2199
      %v2294 = vadd.f32 %v1936, %v2204
      %v2295 = vadd.f32 %v1937, %v2207
      %v2296 = vadd.f32 %v1938, %v2212
      %v2297 = vadd.f32 %v1939, %v2215
      %v2298 = vadd.f32 %v1940, %v2220
      %v2299 = vadd.f32 %v1941, %v2223
      %v2300 = vadd.f32 %v1942, %v2228
      %v2301 = vadd.f32 %v1943, %v2231
      %v2302 = vadd.f32 %v1944, %v2236
      %v2303 = vadd.f32 %v1945, %v2239
      %v2304 = vadd.f32 %v1946, %v2244
      %v2305 = vadd.f32 %v1947, %v2247
      %v2306 = vadd.f32 %v1948, %v2252
      %v2307 = vadd.f32 %v1949, %v2255
      %v2308 = vadd.f32 %v1950, %v2260
      %v2309 = vadd.f32 %v1951, %v2263
      %v2310 = vadd.f32 %v1952, %v2268
      %v2311 = vadd.f32 %v1953, %v2271
      %v2312 = vadd.f32 %v1954, %v2276
      %v2313 = vadd.f32 %v1955, %v2279
      %v2314 = vld [vmem:[%s557] sm:$0xf]
      %v2315 = vld [vmem:[%s557 + $0x4] sm:$0xf]
      %v2316 = vld [vmem:[%s557 + $0x8] sm:$0xf]
      %v2317 = vld [vmem:[%s557 + $0xc] sm:$0xf]
      %v2318 = vld [vmem:[%s557 + $0x10] sm:$0xf]
      %v2319 = vld [vmem:[%s557 + $0x14] sm:$0xf]
      %v2320 = vld [vmem:[%s557 + $0x18] sm:$0xf]
      %v2321 = vld [vmem:[%s557 + $0x1c] sm:$0xf]
      %v2322 = vld [vmem:[%s557 + $0x20] sm:$0xf]
      %v2323 = vld [vmem:[%s557 + $0x24] sm:$0xf]
      %v2324 = vld [vmem:[%s557 + $0x28] sm:$0xf]
      %v2325 = vld [vmem:[%s557 + $0x2c] sm:$0xf]
      %v2326 = vld [vmem:[%s557 + $0x30] sm:$0xf]
      %v2327 = vld [vmem:[%s557 + $0x34] sm:$0xf]
      %v2328 = vld [vmem:[%s557 + $0x38] sm:$0xf]
      %v2329 = vld [vmem:[%s557 + $0x3c] sm:$0xf]
      %v2330 = vld [vmem:[%s557 + $0x40] sm:$0xf]
      %v2331 = vld [vmem:[%s557 + $0x44] sm:$0xf]
      %v2332 = vld [vmem:[%s557 + $0x48] sm:$0xf]
      %v2333 = vld [vmem:[%s557 + $0x4c] sm:$0xf]
      %v2334 = vld [vmem:[%s557 + $0x50] sm:$0xf]
      %v2335 = vld [vmem:[%s557 + $0x54] sm:$0xf]
      %v2336 = vld [vmem:[%s557 + $0x58] sm:$0xf]
      %v2337 = vld [vmem:[%s557 + $0x5c] sm:$0xf]
      %v2338 = vld [vmem:[%s557 + $0x60] sm:$0xf]
      %v2339 = vld [vmem:[%s557 + $0x64] sm:$0xf]
      %v2340 = vld [vmem:[%s557 + $0x68] sm:$0xf]
      %v2341 = vld [vmem:[%s557 + $0x6c] sm:$0xf]
      %v2342 = vld [vmem:[%s557 + $0x70] sm:$0xf]
      %v2343 = vld [vmem:[%s557 + $0x74] sm:$0xf]
      %v2344 = vld [vmem:[%s557 + $0x78] sm:$0xf]
      %v2345 = vld [vmem:[%s557 + $0x7c] sm:$0xf]
      %s2346 = scalar_lea.vmem %s9, 20
      %v2347 = vld [vmem:[%s2346] sm:$0xf]
      %v2380 = vunpack.c.l.b16 %v2314
      %v2381 = vunpack.c.l.b16 %v2315
      %v2382 = vunpack.c.l.b16 %v2316
      %v2383 = vunpack.c.l.b16 %v2317
      %v2384 = vunpack.c.l.b16 %v2318
      %v2385 = vunpack.c.l.b16 %v2319
      %v2386 = vunpack.c.l.b16 %v2320
      %v2387 = vunpack.c.l.b16 %v2321
      %v2388 = vunpack.c.l.b16 %v2322
      %v2389 = vunpack.c.l.b16 %v2323
      %v2390 = vunpack.c.l.b16 %v2324
      %v2391 = vunpack.c.l.b16 %v2325
      %v2392 = vunpack.c.l.b16 %v2326
      %v2393 = vunpack.c.l.b16 %v2327
      %v2394 = vunpack.c.l.b16 %v2328
      %v2395 = vunpack.c.l.b16 %v2329
      %v2396 = vunpack.c.l.b16 %v2330
      %v2397 = vunpack.c.l.b16 %v2331
      %v2398 = vunpack.c.l.b16 %v2332
      %v2399 = vunpack.c.l.b16 %v2333
      %v2400 = vunpack.c.l.b16 %v2334
      %v2401 = vunpack.c.l.b16 %v2335
      %v2402 = vunpack.c.l.b16 %v2336
      %v2403 = vunpack.c.l.b16 %v2337
      %v2404 = vunpack.c.l.b16 %v2338
      %v2405 = vunpack.c.l.b16 %v2339
      %v2406 = vunpack.c.l.b16 %v2340
      %v2407 = vunpack.c.l.b16 %v2341
      %v2408 = vunpack.c.l.b16 %v2342
      %v2409 = vunpack.c.l.b16 %v2343
      %v2410 = vunpack.c.l.b16 %v2344
      %v2411 = vunpack.c.l.b16 %v2345
      %v2412 = vpack.c.b16 %v2381, %v2380
      %v2413 = vpack.c.b16 %v2383, %v2382
      %v2414 = vpack.c.b16 %v2385, %v2384
      %v2415 = vpack.c.b16 %v2387, %v2386
      %v2416 = vpack.c.b16 %v2389, %v2388
      %v2417 = vpack.c.b16 %v2391, %v2390
      %v2418 = vpack.c.b16 %v2393, %v2392
      %v2419 = vpack.c.b16 %v2395, %v2394
      %v2420 = vpack.c.b16 %v2397, %v2396
      %v2421 = vpack.c.b16 %v2399, %v2398
      %v2422 = vpack.c.b16 %v2401, %v2400
      %v2423 = vpack.c.b16 %v2403, %v2402
      %v2424 = vpack.c.b16 %v2405, %v2404
      %v2425 = vpack.c.b16 %v2407, %v2406
      %v2426 = vpack.c.b16 %v2409, %v2408
      %v2427 = vpack.c.b16 %v2411, %v2410
      %v2429 = vsel %vm734, %v2412, 0
      %v2432 = vsel %vm734, %v2413, 0
      %v2435 = vsel %vm734, %v2414, 0
      %v2438 = vsel %vm734, %v2415, 0
      %v2441 = vsel %vm734, %v2416, 0
      %v2444 = vsel %vm734, %v2417, 0
      %v2447 = vsel %vm734, %v2418, 0
      %v2450 = vsel %vm734, %v2419, 0
      %v2453 = vsel %vm734, %v2420, 0
      %v2456 = vsel %vm734, %v2421, 0
      %v2459 = vsel %vm734, %v2422, 0
      %v2462 = vsel %vm734, %v2423, 0
      %v2465 = vsel %vm734, %v2424, 0
      %v2468 = vsel %vm734, %v2425, 0
      %v2471 = vsel %vm734, %v2426, 0
      %v2474 = vsel %vm734, %v2427, 0
      %v2477 = vsel %vm783, %v2347, 0
      %2479 = vmatprep.subr.bf16.mxu0 0
      %2480 = vmatpush1.bf16.msra.mxu0 0
      %2481 = vmatprep.subr.bf16.mxu0 0
      %2482 = vmatpush1.bf16.msra.mxu0 0
      %2483 = vmatprep.subr.bf16.mxu0 0
      %2484 = vmatpush1.bf16.msra.mxu0 0
      %2485 = vmatprep.subr.bf16.mxu0 0
      %2486 = vmatpush1.bf16.msra.mxu0 0
      %2487 = vmatprep.subr.bf16.mxu0 0
      %2488 = vmatpush1.bf16.msra.mxu0 0
      %2489 = vmatprep.subr.bf16.mxu0 0
      %2490 = vmatpush1.bf16.msra.mxu0 0
      %2491 = vmatprep.subr.bf16.mxu0 0
      %2492 = vmatpush1.bf16.msra.mxu0 0
      %2493 = vmatprep.subr.bf16.mxu0 0
      %2494 = vmatpush1.bf16.msra.mxu0 %v2477
      %2495 = vmatprep.subr.bf16.mxu0 0
      %2496 = vmatpush2.bf16.msra.mxu0 0
      %2497 = vmatprep.subr.bf16.mxu0 0
      %2498 = vmatpush2.bf16.msra.mxu0 0
      %2499 = vmatprep.subr.bf16.mxu0 0
      %2500 = vmatpush2.bf16.msra.mxu0 0
      %2501 = vmatprep.subr.bf16.mxu0 0
      %2502 = vmatpush2.bf16.msra.mxu0 0
      %2503 = vmatprep.subr.bf16.mxu0 0
      %2504 = vmatpush2.bf16.msra.mxu0 0
      %2505 = vmatprep.subr.bf16.mxu0 0
      %2506 = vmatpush2.bf16.msra.mxu0 0
      %2507 = vmatprep.subr.bf16.mxu0 0
      %2508 = vmatpush2.bf16.msra.mxu0 0
      %2509 = vmatprep.subr.bf16.mxu0 0
      %2510 = vmatpush2.bf16.msra.mxu0 0
      %2511 = vmatprep.mubr.bf16.mxu0 0
      %2512 = vmatmul.mubr.bf16.gmra.mxu0 %v2429
      %v2513 = vpop.f32.mrf.mxu0
      %v2514 = vadd.f32 0.0, %v2513
      %v2515 = vpop.f32.mrf.mxu0
      %v2516 = vpop.f32.mrf.mxu0
      %v2517 = vadd.f32 0.0, %v2516
      %v2518 = vpop.f32.mrf.mxu0
      %2519 = vmatprep.mubr.bf16.mxu0 0
      %2520 = vmatmul.mubr.bf16.gmra.mxu0 %v2432
      %v2521 = vpop.f32.mrf.mxu0
      %v2522 = vadd.f32 0.0, %v2521
      %v2523 = vpop.f32.mrf.mxu0
      %v2524 = vpop.f32.mrf.mxu0
      %v2525 = vadd.f32 0.0, %v2524
      %v2526 = vpop.f32.mrf.mxu0
      %2527 = vmatprep.mubr.bf16.mxu0 0
      %2528 = vmatmul.mubr.bf16.gmra.mxu0 %v2435
      %v2529 = vpop.f32.mrf.mxu0
      %v2530 = vadd.f32 0.0, %v2529
      %v2531 = vpop.f32.mrf.mxu0
      %v2532 = vpop.f32.mrf.mxu0
      %v2533 = vadd.f32 0.0, %v2532
      %v2534 = vpop.f32.mrf.mxu0
      %2535 = vmatprep.mubr.bf16.mxu0 0
      %2536 = vmatmul.mubr.bf16.gmra.mxu0 %v2438
      %v2537 = vpop.f32.mrf.mxu0
      %v2538 = vadd.f32 0.0, %v2537
      %v2539 = vpop.f32.mrf.mxu0
      %v2540 = vpop.f32.mrf.mxu0
      %v2541 = vadd.f32 0.0, %v2540
      %v2542 = vpop.f32.mrf.mxu0
      %2543 = vmatprep.mubr.bf16.mxu0 0
      %2544 = vmatmul.mubr.bf16.gmra.mxu0 %v2441
      %v2545 = vpop.f32.mrf.mxu0
      %v2546 = vadd.f32 0.0, %v2545
      %v2547 = vpop.f32.mrf.mxu0
      %v2548 = vpop.f32.mrf.mxu0
      %v2549 = vadd.f32 0.0, %v2548
      %v2550 = vpop.f32.mrf.mxu0
      %2551 = vmatprep.mubr.bf16.mxu0 0
      %2552 = vmatmul.mubr.bf16.gmra.mxu0 %v2444
      %v2553 = vpop.f32.mrf.mxu0
      %v2554 = vadd.f32 0.0, %v2553
      %v2555 = vpop.f32.mrf.mxu0
      %v2556 = vpop.f32.mrf.mxu0
      %v2557 = vadd.f32 0.0, %v2556
      %v2558 = vpop.f32.mrf.mxu0
      %2559 = vmatprep.mubr.bf16.mxu0 0
      %2560 = vmatmul.mubr.bf16.gmra.mxu0 %v2447
      %v2561 = vpop.f32.mrf.mxu0
      %v2562 = vadd.f32 0.0, %v2561
      %v2563 = vpop.f32.mrf.mxu0
      %v2564 = vpop.f32.mrf.mxu0
      %v2565 = vadd.f32 0.0, %v2564
      %v2566 = vpop.f32.mrf.mxu0
      %2567 = vmatprep.mubr.bf16.mxu0 0
      %2568 = vmatmul.mubr.bf16.gmra.mxu0 %v2450
      %v2569 = vpop.f32.mrf.mxu0
      %v2570 = vadd.f32 0.0, %v2569
      %v2571 = vpop.f32.mrf.mxu0
      %v2572 = vpop.f32.mrf.mxu0
      %v2573 = vadd.f32 0.0, %v2572
      %v2574 = vpop.f32.mrf.mxu0
      %2575 = vmatprep.mubr.bf16.mxu0 0
      %2576 = vmatmul.mubr.bf16.gmra.mxu0 %v2453
      %v2577 = vpop.f32.mrf.mxu0
      %v2578 = vadd.f32 0.0, %v2577
      %v2579 = vpop.f32.mrf.mxu0
      %v2580 = vpop.f32.mrf.mxu0
      %v2581 = vadd.f32 0.0, %v2580
      %v2582 = vpop.f32.mrf.mxu0
      %2583 = vmatprep.mubr.bf16.mxu0 0
      %2584 = vmatmul.mubr.bf16.gmra.mxu0 %v2456
      %v2585 = vpop.f32.mrf.mxu0
      %v2586 = vadd.f32 0.0, %v2585
      %v2587 = vpop.f32.mrf.mxu0
      %v2588 = vpop.f32.mrf.mxu0
      %v2589 = vadd.f32 0.0, %v2588
      %v2590 = vpop.f32.mrf.mxu0
      %2591 = vmatprep.mubr.bf16.mxu0 0
      %2592 = vmatmul.mubr.bf16.gmra.mxu0 %v2459
      %v2593 = vpop.f32.mrf.mxu0
      %v2594 = vadd.f32 0.0, %v2593
      %v2595 = vpop.f32.mrf.mxu0
      %v2596 = vpop.f32.mrf.mxu0
      %v2597 = vadd.f32 0.0, %v2596
      %v2598 = vpop.f32.mrf.mxu0
      %2599 = vmatprep.mubr.bf16.mxu0 0
      %2600 = vmatmul.mubr.bf16.gmra.mxu0 %v2462
      %v2601 = vpop.f32.mrf.mxu0
      %v2602 = vadd.f32 0.0, %v2601
      %v2603 = vpop.f32.mrf.mxu0
      %v2604 = vpop.f32.mrf.mxu0
      %v2605 = vadd.f32 0.0, %v2604
      %v2606 = vpop.f32.mrf.mxu0
      %2607 = vmatprep.mubr.bf16.mxu0 0
      %2608 = vmatmul.mubr.bf16.gmra.mxu0 %v2465
      %v2609 = vpop.f32.mrf.mxu0
      %v2610 = vadd.f32 0.0, %v2609
      %v2611 = vpop.f32.mrf.mxu0
      %v2612 = vpop.f32.mrf.mxu0
      %v2613 = vadd.f32 0.0, %v2612
      %v2614 = vpop.f32.mrf.mxu0
      %2615 = vmatprep.mubr.bf16.mxu0 0
      %2616 = vmatmul.mubr.bf16.gmra.mxu0 %v2468
      %v2617 = vpop.f32.mrf.mxu0
      %v2618 = vadd.f32 0.0, %v2617
      %v2619 = vpop.f32.mrf.mxu0
      %v2620 = vpop.f32.mrf.mxu0
      %v2621 = vadd.f32 0.0, %v2620
      %v2622 = vpop.f32.mrf.mxu0
      %2623 = vmatprep.mubr.bf16.mxu0 0
      %2624 = vmatmul.mubr.bf16.gmra.mxu0 %v2471
      %v2625 = vpop.f32.mrf.mxu0
      %v2626 = vadd.f32 0.0, %v2625
      %v2627 = vpop.f32.mrf.mxu0
      %v2628 = vpop.f32.mrf.mxu0
      %v2629 = vadd.f32 0.0, %v2628
      %v2630 = vpop.f32.mrf.mxu0
      %2631 = vmatprep.mubr.bf16.mxu0 0
      %2632 = vmatmul.mubr.bf16.gmra.mxu0 %v2474
      %v2633 = vpop.f32.mrf.mxu0
      %v2634 = vadd.f32 0.0, %v2633
      %v2635 = vpop.f32.mrf.mxu0
      %v2636 = vpop.f32.mrf.mxu0
      %v2637 = vadd.f32 0.0, %v2636
      %v2638 = vpop.f32.mrf.mxu0
      %2639 = vdwg.mxu0
      %v2640 = vadd.f32 %v2282, %v2514
      %v2641 = vadd.f32 %v2283, %v2517
      %v2642 = vadd.f32 %v2284, %v2522
      %v2643 = vadd.f32 %v2285, %v2525
      %v2644 = vadd.f32 %v2286, %v2530
      %v2645 = vadd.f32 %v2287, %v2533
      %v2646 = vadd.f32 %v2288, %v2538
      %v2647 = vadd.f32 %v2289, %v2541
      %v2648 = vadd.f32 %v2290, %v2546
      %v2649 = vadd.f32 %v2291, %v2549
      %v2650 = vadd.f32 %v2292, %v2554
      %v2651 = vadd.f32 %v2293, %v2557
      %v2652 = vadd.f32 %v2294, %v2562
      %v2653 = vadd.f32 %v2295, %v2565
      %v2654 = vadd.f32 %v2296, %v2570
      %v2655 = vadd.f32 %v2297, %v2573
      %v2656 = vadd.f32 %v2298, %v2578
      %v2657 = vadd.f32 %v2299, %v2581
      %v2658 = vadd.f32 %v2300, %v2586
      %v2659 = vadd.f32 %v2301, %v2589
      %v2660 = vadd.f32 %v2302, %v2594
      %v2661 = vadd.f32 %v2303, %v2597
      %v2662 = vadd.f32 %v2304, %v2602
      %v2663 = vadd.f32 %v2305, %v2605
      %v2664 = vadd.f32 %v2306, %v2610
      %v2665 = vadd.f32 %v2307, %v2613
      %v2666 = vadd.f32 %v2308, %v2618
      %v2667 = vadd.f32 %v2309, %v2621
      %v2668 = vadd.f32 %v2310, %v2626
      %v2669 = vadd.f32 %v2311, %v2629
      %v2670 = vadd.f32 %v2312, %v2634
      %v2671 = vadd.f32 %v2313, %v2637
      %v2672 = vld [vmem:[%s563] sm:$0xf]
      %v2673 = vld [vmem:[%s563 + $0x4] sm:$0xf]
      %v2674 = vld [vmem:[%s563 + $0x8] sm:$0xf]
      %v2675 = vld [vmem:[%s563 + $0xc] sm:$0xf]
      %v2676 = vld [vmem:[%s563 + $0x10] sm:$0xf]
      %v2677 = vld [vmem:[%s563 + $0x14] sm:$0xf]
      %v2678 = vld [vmem:[%s563 + $0x18] sm:$0xf]
      %v2679 = vld [vmem:[%s563 + $0x1c] sm:$0xf]
      %v2680 = vld [vmem:[%s563 + $0x20] sm:$0xf]
      %v2681 = vld [vmem:[%s563 + $0x24] sm:$0xf]
      %v2682 = vld [vmem:[%s563 + $0x28] sm:$0xf]
      %v2683 = vld [vmem:[%s563 + $0x2c] sm:$0xf]
      %v2684 = vld [vmem:[%s563 + $0x30] sm:$0xf]
      %v2685 = vld [vmem:[%s563 + $0x34] sm:$0xf]
      %v2686 = vld [vmem:[%s563 + $0x38] sm:$0xf]
      %v2687 = vld [vmem:[%s563 + $0x3c] sm:$0xf]
      %v2688 = vld [vmem:[%s563 + $0x40] sm:$0xf]
      %v2689 = vld [vmem:[%s563 + $0x44] sm:$0xf]
      %v2690 = vld [vmem:[%s563 + $0x48] sm:$0xf]
      %v2691 = vld [vmem:[%s563 + $0x4c] sm:$0xf]
      %v2692 = vld [vmem:[%s563 + $0x50] sm:$0xf]
      %v2693 = vld [vmem:[%s563 + $0x54] sm:$0xf]
      %v2694 = vld [vmem:[%s563 + $0x58] sm:$0xf]
      %v2695 = vld [vmem:[%s563 + $0x5c] sm:$0xf]
      %v2696 = vld [vmem:[%s563 + $0x60] sm:$0xf]
      %v2697 = vld [vmem:[%s563 + $0x64] sm:$0xf]
      %v2698 = vld [vmem:[%s563 + $0x68] sm:$0xf]
      %v2699 = vld [vmem:[%s563 + $0x6c] sm:$0xf]
      %v2700 = vld [vmem:[%s563 + $0x70] sm:$0xf]
      %v2701 = vld [vmem:[%s563 + $0x74] sm:$0xf]
      %v2702 = vld [vmem:[%s563 + $0x78] sm:$0xf]
      %v2703 = vld [vmem:[%s563 + $0x7c] sm:$0xf]
      %s2704 = scalar_lea.vmem %s9, 24
      %v2705 = vld [vmem:[%s2704] sm:$0xf]
      %v2738 = vunpack.c.l.b16 %v2672
      %v2739 = vunpack.c.l.b16 %v2673
      %v2740 = vunpack.c.l.b16 %v2674
      %v2741 = vunpack.c.l.b16 %v2675
      %v2742 = vunpack.c.l.b16 %v2676
      %v2743 = vunpack.c.l.b16 %v2677
      %v2744 = vunpack.c.l.b16 %v2678
      %v2745 = vunpack.c.l.b16 %v2679
      %v2746 = vunpack.c.l.b16 %v2680
      %v2747 = vunpack.c.l.b16 %v2681
      %v2748 = vunpack.c.l.b16 %v2682
      %v2749 = vunpack.c.l.b16 %v2683
      %v2750 = vunpack.c.l.b16 %v2684
      %v2751 = vunpack.c.l.b16 %v2685
      %v2752 = vunpack.c.l.b16 %v2686
      %v2753 = vunpack.c.l.b16 %v2687
      %v2754 = vunpack.c.l.b16 %v2688
      %v2755 = vunpack.c.l.b16 %v2689
      %v2756 = vunpack.c.l.b16 %v2690
      %v2757 = vunpack.c.l.b16 %v2691
      %v2758 = vunpack.c.l.b16 %v2692
      %v2759 = vunpack.c.l.b16 %v2693
      %v2760 = vunpack.c.l.b16 %v2694
      %v2761 = vunpack.c.l.b16 %v2695
      %v2762 = vunpack.c.l.b16 %v2696
      %v2763 = vunpack.c.l.b16 %v2697
      %v2764 = vunpack.c.l.b16 %v2698
      %v2765 = vunpack.c.l.b16 %v2699
      %v2766 = vunpack.c.l.b16 %v2700
      %v2767 = vunpack.c.l.b16 %v2701
      %v2768 = vunpack.c.l.b16 %v2702
      %v2769 = vunpack.c.l.b16 %v2703
      %v2770 = vpack.c.b16 %v2739, %v2738
      %v2771 = vpack.c.b16 %v2741, %v2740
      %v2772 = vpack.c.b16 %v2743, %v2742
      %v2773 = vpack.c.b16 %v2745, %v2744
      %v2774 = vpack.c.b16 %v2747, %v2746
      %v2775 = vpack.c.b16 %v2749, %v2748
      %v2776 = vpack.c.b16 %v2751, %v2750
      %v2777 = vpack.c.b16 %v2753, %v2752
      %v2778 = vpack.c.b16 %v2755, %v2754
      %v2779 = vpack.c.b16 %v2757, %v2756
      %v2780 = vpack.c.b16 %v2759, %v2758
      %v2781 = vpack.c.b16 %v2761, %v2760
      %v2782 = vpack.c.b16 %v2763, %v2762
      %v2783 = vpack.c.b16 %v2765, %v2764
      %v2784 = vpack.c.b16 %v2767, %v2766
      %v2785 = vpack.c.b16 %v2769, %v2768
      %v2787 = vsel %vm734, %v2770, 0
      %v2790 = vsel %vm734, %v2771, 0
      %v2793 = vsel %vm734, %v2772, 0
      %v2796 = vsel %vm734, %v2773, 0
      %v2799 = vsel %vm734, %v2774, 0
      %v2802 = vsel %vm734, %v2775, 0
      %v2805 = vsel %vm734, %v2776, 0
      %v2808 = vsel %vm734, %v2777, 0
      %v2811 = vsel %vm734, %v2778, 0
      %v2814 = vsel %vm734, %v2779, 0
      %v2817 = vsel %vm734, %v2780, 0
      %v2820 = vsel %vm734, %v2781, 0
      %v2823 = vsel %vm734, %v2782, 0
      %v2826 = vsel %vm734, %v2783, 0
      %v2829 = vsel %vm734, %v2784, 0
      %v2832 = vsel %vm734, %v2785, 0
      %v2835 = vsel %vm783, %v2705, 0
      %2837 = vmatprep.subr.bf16.mxu0 0
      %2838 = vmatpush1.bf16.msra.mxu0 0
      %2839 = vmatprep.subr.bf16.mxu0 0
      %2840 = vmatpush1.bf16.msra.mxu0 0
      %2841 = vmatprep.subr.bf16.mxu0 0
      %2842 = vmatpush1.bf16.msra.mxu0 0
      %2843 = vmatprep.subr.bf16.mxu0 0
      %2844 = vmatpush1.bf16.msra.mxu0 0
      %2845 = vmatprep.subr.bf16.mxu0 0
      %2846 = vmatpush1.bf16.msra.mxu0 0
      %2847 = vmatprep.subr.bf16.mxu0 0
      %2848 = vmatpush1.bf16.msra.mxu0 0
      %2849 = vmatprep.subr.bf16.mxu0 0
      %2850 = vmatpush1.bf16.msra.mxu0 0
      %2851 = vmatprep.subr.bf16.mxu0 0
      %2852 = vmatpush1.bf16.msra.mxu0 %v2835
      %2853 = vmatprep.subr.bf16.mxu0 0
      %2854 = vmatpush2.bf16.msra.mxu0 0
      %2855 = vmatprep.subr.bf16.mxu0 0
      %2856 = vmatpush2.bf16.msra.mxu0 0
      %2857 = vmatprep.subr.bf16.mxu0 0
      %2858 = vmatpush2.bf16.msra.mxu0 0
      %2859 = vmatprep.subr.bf16.mxu0 0
      %2860 = vmatpush2.bf16.msra.mxu0 0
      %2861 = vmatprep.subr.bf16.mxu0 0
      %2862 = vmatpush2.bf16.msra.mxu0 0
      %2863 = vmatprep.subr.bf16.mxu0 0
      %2864 = vmatpush2.bf16.msra.mxu0 0
      %2865 = vmatprep.subr.bf16.mxu0 0
      %2866 = vmatpush2.bf16.msra.mxu0 0
      %2867 = vmatprep.subr.bf16.mxu0 0
      %2868 = vmatpush2.bf16.msra.mxu0 0
      %2869 = vmatprep.mubr.bf16.mxu0 0
      %2870 = vmatmul.mubr.bf16.gmra.mxu0 %v2787
      %v2871 = vpop.f32.mrf.mxu0
      %v2872 = vadd.f32 0.0, %v2871
      %v2873 = vpop.f32.mrf.mxu0
      %v2874 = vpop.f32.mrf.mxu0
      %v2875 = vadd.f32 0.0, %v2874
      %v2876 = vpop.f32.mrf.mxu0
      %2877 = vmatprep.mubr.bf16.mxu0 0
      %2878 = vmatmul.mubr.bf16.gmra.mxu0 %v2790
      %v2879 = vpop.f32.mrf.mxu0
      %v2880 = vadd.f32 0.0, %v2879
      %v2881 = vpop.f32.mrf.mxu0
      %v2882 = vpop.f32.mrf.mxu0
      %v2883 = vadd.f32 0.0, %v2882
      %v2884 = vpop.f32.mrf.mxu0
      %2885 = vmatprep.mubr.bf16.mxu0 0
      %2886 = vmatmul.mubr.bf16.gmra.mxu0 %v2793
      %v2887 = vpop.f32.mrf.mxu0
      %v2888 = vadd.f32 0.0, %v2887
      %v2889 = vpop.f32.mrf.mxu0
      %v2890 = vpop.f32.mrf.mxu0
      %v2891 = vadd.f32 0.0, %v2890
      %v2892 = vpop.f32.mrf.mxu0
      %2893 = vmatprep.mubr.bf16.mxu0 0
      %2894 = vmatmul.mubr.bf16.gmra.mxu0 %v2796
      %v2895 = vpop.f32.mrf.mxu0
      %v2896 = vadd.f32 0.0, %v2895
      %v2897 = vpop.f32.mrf.mxu0
      %v2898 = vpop.f32.mrf.mxu0
      %v2899 = vadd.f32 0.0, %v2898
      %v2900 = vpop.f32.mrf.mxu0
      %2901 = vmatprep.mubr.bf16.mxu0 0
      %2902 = vmatmul.mubr.bf16.gmra.mxu0 %v2799
      %v2903 = vpop.f32.mrf.mxu0
      %v2904 = vadd.f32 0.0, %v2903
      %v2905 = vpop.f32.mrf.mxu0
      %v2906 = vpop.f32.mrf.mxu0
      %v2907 = vadd.f32 0.0, %v2906
      %v2908 = vpop.f32.mrf.mxu0
      %2909 = vmatprep.mubr.bf16.mxu0 0
      %2910 = vmatmul.mubr.bf16.gmra.mxu0 %v2802
      %v2911 = vpop.f32.mrf.mxu0
      %v2912 = vadd.f32 0.0, %v2911
      %v2913 = vpop.f32.mrf.mxu0
      %v2914 = vpop.f32.mrf.mxu0
      %v2915 = vadd.f32 0.0, %v2914
      %v2916 = vpop.f32.mrf.mxu0
      %2917 = vmatprep.mubr.bf16.mxu0 0
      %2918 = vmatmul.mubr.bf16.gmra.mxu0 %v2805
      %v2919 = vpop.f32.mrf.mxu0
      %v2920 = vadd.f32 0.0, %v2919
      %v2921 = vpop.f32.mrf.mxu0
      %v2922 = vpop.f32.mrf.mxu0
      %v2923 = vadd.f32 0.0, %v2922
      %v2924 = vpop.f32.mrf.mxu0
      %2925 = vmatprep.mubr.bf16.mxu0 0
      %2926 = vmatmul.mubr.bf16.gmra.mxu0 %v2808
      %v2927 = vpop.f32.mrf.mxu0
      %v2928 = vadd.f32 0.0, %v2927
      %v2929 = vpop.f32.mrf.mxu0
      %v2930 = vpop.f32.mrf.mxu0
      %v2931 = vadd.f32 0.0, %v2930
      %v2932 = vpop.f32.mrf.mxu0
      %2933 = vmatprep.mubr.bf16.mxu0 0
      %2934 = vmatmul.mubr.bf16.gmra.mxu0 %v2811
      %v2935 = vpop.f32.mrf.mxu0
      %v2936 = vadd.f32 0.0, %v2935
      %v2937 = vpop.f32.mrf.mxu0
      %v2938 = vpop.f32.mrf.mxu0
      %v2939 = vadd.f32 0.0, %v2938
      %v2940 = vpop.f32.mrf.mxu0
      %2941 = vmatprep.mubr.bf16.mxu0 0
      %2942 = vmatmul.mubr.bf16.gmra.mxu0 %v2814
      %v2943 = vpop.f32.mrf.mxu0
      %v2944 = vadd.f32 0.0, %v2943
      %v2945 = vpop.f32.mrf.mxu0
      %v2946 = vpop.f32.mrf.mxu0
      %v2947 = vadd.f32 0.0, %v2946
      %v2948 = vpop.f32.mrf.mxu0
      %2949 = vmatprep.mubr.bf16.mxu0 0
      %2950 = vmatmul.mubr.bf16.gmra.mxu0 %v2817
      %v2951 = vpop.f32.mrf.mxu0
      %v2952 = vadd.f32 0.0, %v2951
      %v2953 = vpop.f32.mrf.mxu0
      %v2954 = vpop.f32.mrf.mxu0
      %v2955 = vadd.f32 0.0, %v2954
      %v2956 = vpop.f32.mrf.mxu0
      %2957 = vmatprep.mubr.bf16.mxu0 0
      %2958 = vmatmul.mubr.bf16.gmra.mxu0 %v2820
      %v2959 = vpop.f32.mrf.mxu0
      %v2960 = vadd.f32 0.0, %v2959
      %v2961 = vpop.f32.mrf.mxu0
      %v2962 = vpop.f32.mrf.mxu0
      %v2963 = vadd.f32 0.0, %v2962
      %v2964 = vpop.f32.mrf.mxu0
      %2965 = vmatprep.mubr.bf16.mxu0 0
      %2966 = vmatmul.mubr.bf16.gmra.mxu0 %v2823
      %v2967 = vpop.f32.mrf.mxu0
      %v2968 = vadd.f32 0.0, %v2967
      %v2969 = vpop.f32.mrf.mxu0
      %v2970 = vpop.f32.mrf.mxu0
      %v2971 = vadd.f32 0.0, %v2970
      %v2972 = vpop.f32.mrf.mxu0
      %2973 = vmatprep.mubr.bf16.mxu0 0
      %2974 = vmatmul.mubr.bf16.gmra.mxu0 %v2826
      %v2975 = vpop.f32.mrf.mxu0
      %v2976 = vadd.f32 0.0, %v2975
      %v2977 = vpop.f32.mrf.mxu0
      %v2978 = vpop.f32.mrf.mxu0
      %v2979 = vadd.f32 0.0, %v2978
      %v2980 = vpop.f32.mrf.mxu0
      %2981 = vmatprep.mubr.bf16.mxu0 0
      %2982 = vmatmul.mubr.bf16.gmra.mxu0 %v2829
      %v2983 = vpop.f32.mrf.mxu0
      %v2984 = vadd.f32 0.0, %v2983
      %v2985 = vpop.f32.mrf.mxu0
      %v2986 = vpop.f32.mrf.mxu0
      %v2987 = vadd.f32 0.0, %v2986
      %v2988 = vpop.f32.mrf.mxu0
      %2989 = vmatprep.mubr.bf16.mxu0 0
      %2990 = vmatmul.mubr.bf16.gmra.mxu0 %v2832
      %v2991 = vpop.f32.mrf.mxu0
      %v2992 = vadd.f32 0.0, %v2991
      %v2993 = vpop.f32.mrf.mxu0
      %v2994 = vpop.f32.mrf.mxu0
      %v2995 = vadd.f32 0.0, %v2994
      %v2996 = vpop.f32.mrf.mxu0
      %2997 = vdwg.mxu0
      %v2998 = vadd.f32 %v2640, %v2872
      %v2999 = vadd.f32 %v2641, %v2875
      %v3000 = vadd.f32 %v2642, %v2880
      %v3001 = vadd.f32 %v2643, %v2883
      %v3002 = vadd.f32 %v2644, %v2888
      %v3003 = vadd.f32 %v2645, %v2891
      %v3004 = vadd.f32 %v2646, %v2896
      %v3005 = vadd.f32 %v2647, %v2899
      %v3006 = vadd.f32 %v2648, %v2904
      %v3007 = vadd.f32 %v2649, %v2907
      %v3008 = vadd.f32 %v2650, %v2912
      %v3009 = vadd.f32 %v2651, %v2915
      %v3010 = vadd.f32 %v2652, %v2920
      %v3011 = vadd.f32 %v2653, %v2923
      %v3012 = vadd.f32 %v2654, %v2928
      %v3013 = vadd.f32 %v2655, %v2931
      %v3014 = vadd.f32 %v2656, %v2936
      %v3015 = vadd.f32 %v2657, %v2939
      %v3016 = vadd.f32 %v2658, %v2944
      %v3017 = vadd.f32 %v2659, %v2947
      %v3018 = vadd.f32 %v2660, %v2952
      %v3019 = vadd.f32 %v2661, %v2955
      %v3020 = vadd.f32 %v2662, %v2960
      %v3021 = vadd.f32 %v2663, %v2963
      %v3022 = vadd.f32 %v2664, %v2968
      %v3023 = vadd.f32 %v2665, %v2971
      %v3024 = vadd.f32 %v2666, %v2976
      %v3025 = vadd.f32 %v2667, %v2979
      %v3026 = vadd.f32 %v2668, %v2984
      %v3027 = vadd.f32 %v2669, %v2987
      %v3028 = vadd.f32 %v2670, %v2992
      %v3029 = vadd.f32 %v2671, %v2995
      %v3030 = vld [vmem:[%s569] sm:$0xf]
      %v3031 = vld [vmem:[%s569 + $0x4] sm:$0xf]
      %v3032 = vld [vmem:[%s569 + $0x8] sm:$0xf]
      %v3033 = vld [vmem:[%s569 + $0xc] sm:$0xf]
      %v3034 = vld [vmem:[%s569 + $0x10] sm:$0xf]
      %v3035 = vld [vmem:[%s569 + $0x14] sm:$0xf]
      %v3036 = vld [vmem:[%s569 + $0x18] sm:$0xf]
      %v3037 = vld [vmem:[%s569 + $0x1c] sm:$0xf]
      %v3038 = vld [vmem:[%s569 + $0x20] sm:$0xf]
      %v3039 = vld [vmem:[%s569 + $0x24] sm:$0xf]
      %v3040 = vld [vmem:[%s569 + $0x28] sm:$0xf]
      %v3041 = vld [vmem:[%s569 + $0x2c] sm:$0xf]
      %v3042 = vld [vmem:[%s569 + $0x30] sm:$0xf]
      %v3043 = vld [vmem:[%s569 + $0x34] sm:$0xf]
      %v3044 = vld [vmem:[%s569 + $0x38] sm:$0xf]
      %v3045 = vld [vmem:[%s569 + $0x3c] sm:$0xf]
      %v3046 = vld [vmem:[%s569 + $0x40] sm:$0xf]
      %v3047 = vld [vmem:[%s569 + $0x44] sm:$0xf]
      %v3048 = vld [vmem:[%s569 + $0x48] sm:$0xf]
      %v3049 = vld [vmem:[%s569 + $0x4c] sm:$0xf]
      %v3050 = vld [vmem:[%s569 + $0x50] sm:$0xf]
      %v3051 = vld [vmem:[%s569 + $0x54] sm:$0xf]
      %v3052 = vld [vmem:[%s569 + $0x58] sm:$0xf]
      %v3053 = vld [vmem:[%s569 + $0x5c] sm:$0xf]
      %v3054 = vld [vmem:[%s569 + $0x60] sm:$0xf]
      %v3055 = vld [vmem:[%s569 + $0x64] sm:$0xf]
      %v3056 = vld [vmem:[%s569 + $0x68] sm:$0xf]
      %v3057 = vld [vmem:[%s569 + $0x6c] sm:$0xf]
      %v3058 = vld [vmem:[%s569 + $0x70] sm:$0xf]
      %v3059 = vld [vmem:[%s569 + $0x74] sm:$0xf]
      %v3060 = vld [vmem:[%s569 + $0x78] sm:$0xf]
      %v3061 = vld [vmem:[%s569 + $0x7c] sm:$0xf]
      %s3062 = scalar_lea.vmem %s9, 28
      %v3063 = vld [vmem:[%s3062] sm:$0xf]
      %v3096 = vunpack.c.l.b16 %v3030
      %v3097 = vunpack.c.l.b16 %v3031
      %v3098 = vunpack.c.l.b16 %v3032
      %v3099 = vunpack.c.l.b16 %v3033
      %v3100 = vunpack.c.l.b16 %v3034
      %v3101 = vunpack.c.l.b16 %v3035
      %v3102 = vunpack.c.l.b16 %v3036
      %v3103 = vunpack.c.l.b16 %v3037
      %v3104 = vunpack.c.l.b16 %v3038
      %v3105 = vunpack.c.l.b16 %v3039
      %v3106 = vunpack.c.l.b16 %v3040
      %v3107 = vunpack.c.l.b16 %v3041
      %v3108 = vunpack.c.l.b16 %v3042
      %v3109 = vunpack.c.l.b16 %v3043
      %v3110 = vunpack.c.l.b16 %v3044
      %v3111 = vunpack.c.l.b16 %v3045
      %v3112 = vunpack.c.l.b16 %v3046
      %v3113 = vunpack.c.l.b16 %v3047
      %v3114 = vunpack.c.l.b16 %v3048
      %v3115 = vunpack.c.l.b16 %v3049
      %v3116 = vunpack.c.l.b16 %v3050
      %v3117 = vunpack.c.l.b16 %v3051
      %v3118 = vunpack.c.l.b16 %v3052
      %v3119 = vunpack.c.l.b16 %v3053
      %v3120 = vunpack.c.l.b16 %v3054
      %v3121 = vunpack.c.l.b16 %v3055
      %v3122 = vunpack.c.l.b16 %v3056
      %v3123 = vunpack.c.l.b16 %v3057
      %v3124 = vunpack.c.l.b16 %v3058
      %v3125 = vunpack.c.l.b16 %v3059
      %v3126 = vunpack.c.l.b16 %v3060
      %v3127 = vunpack.c.l.b16 %v3061
      %v3128 = vpack.c.b16 %v3097, %v3096
      %v3129 = vpack.c.b16 %v3099, %v3098
      %v3130 = vpack.c.b16 %v3101, %v3100
      %v3131 = vpack.c.b16 %v3103, %v3102
      %v3132 = vpack.c.b16 %v3105, %v3104
      %v3133 = vpack.c.b16 %v3107, %v3106
      %v3134 = vpack.c.b16 %v3109, %v3108
      %v3135 = vpack.c.b16 %v3111, %v3110
      %v3136 = vpack.c.b16 %v3113, %v3112
      %v3137 = vpack.c.b16 %v3115, %v3114
      %v3138 = vpack.c.b16 %v3117, %v3116
      %v3139 = vpack.c.b16 %v3119, %v3118
      %v3140 = vpack.c.b16 %v3121, %v3120
      %v3141 = vpack.c.b16 %v3123, %v3122
      %v3142 = vpack.c.b16 %v3125, %v3124
      %v3143 = vpack.c.b16 %v3127, %v3126
      %v3145 = vsel %vm734, %v3128, 0
      %v3148 = vsel %vm734, %v3129, 0
      %v3151 = vsel %vm734, %v3130, 0
      %v3154 = vsel %vm734, %v3131, 0
      %v3157 = vsel %vm734, %v3132, 0
      %v3160 = vsel %vm734, %v3133, 0
      %v3163 = vsel %vm734, %v3134, 0
      %v3166 = vsel %vm734, %v3135, 0
      %v3169 = vsel %vm734, %v3136, 0
      %v3172 = vsel %vm734, %v3137, 0
      %v3175 = vsel %vm734, %v3138, 0
      %v3178 = vsel %vm734, %v3139, 0
      %v3181 = vsel %vm734, %v3140, 0
      %v3184 = vsel %vm734, %v3141, 0
      %v3187 = vsel %vm734, %v3142, 0
      %v3190 = vsel %vm734, %v3143, 0
      %v3193 = vsel %vm783, %v3063, 0
      %3195 = vmatprep.subr.bf16.mxu0 0
      %3196 = vmatpush1.bf16.msra.mxu0 0
      %3197 = vmatprep.subr.bf16.mxu0 0
      %3198 = vmatpush1.bf16.msra.mxu0 0
      %3199 = vmatprep.subr.bf16.mxu0 0
      %3200 = vmatpush1.bf16.msra.mxu0 0
      %3201 = vmatprep.subr.bf16.mxu0 0
      %3202 = vmatpush1.bf16.msra.mxu0 0
      %3203 = vmatprep.subr.bf16.mxu0 0
      %3204 = vmatpush1.bf16.msra.mxu0 0
      %3205 = vmatprep.subr.bf16.mxu0 0
      %3206 = vmatpush1.bf16.msra.mxu0 0
      %3207 = vmatprep.subr.bf16.mxu0 0
      %3208 = vmatpush1.bf16.msra.mxu0 0
      %3209 = vmatprep.subr.bf16.mxu0 0
      %3210 = vmatpush1.bf16.msra.mxu0 %v3193
      %3211 = vmatprep.subr.bf16.mxu0 0
      %3212 = vmatpush2.bf16.msra.mxu0 0
      %3213 = vmatprep.subr.bf16.mxu0 0
      %3214 = vmatpush2.bf16.msra.mxu0 0
      %3215 = vmatprep.subr.bf16.mxu0 0
      %3216 = vmatpush2.bf16.msra.mxu0 0
      %3217 = vmatprep.subr.bf16.mxu0 0
      %3218 = vmatpush2.bf16.msra.mxu0 0
      %3219 = vmatprep.subr.bf16.mxu0 0
      %3220 = vmatpush2.bf16.msra.mxu0 0
      %3221 = vmatprep.subr.bf16.mxu0 0
      %3222 = vmatpush2.bf16.msra.mxu0 0
      %3223 = vmatprep.subr.bf16.mxu0 0
      %3224 = vmatpush2.bf16.msra.mxu0 0
      %3225 = vmatprep.subr.bf16.mxu0 0
      %3226 = vmatpush2.bf16.msra.mxu0 0
      %3227 = vmatprep.mubr.bf16.mxu0 0
      %3228 = vmatmul.mubr.bf16.gmra.mxu0 %v3145
      %v3229 = vpop.f32.mrf.mxu0
      %v3230 = vadd.f32 0.0, %v3229
      %v3231 = vpop.f32.mrf.mxu0
      %v3232 = vpop.f32.mrf.mxu0
      %v3233 = vadd.f32 0.0, %v3232
      %v3234 = vpop.f32.mrf.mxu0
      %3235 = vmatprep.mubr.bf16.mxu0 0
      %3236 = vmatmul.mubr.bf16.gmra.mxu0 %v3148
      %v3237 = vpop.f32.mrf.mxu0
      %v3238 = vadd.f32 0.0, %v3237
      %v3239 = vpop.f32.mrf.mxu0
      %v3240 = vpop.f32.mrf.mxu0
      %v3241 = vadd.f32 0.0, %v3240
      %v3242 = vpop.f32.mrf.mxu0
      %3243 = vmatprep.mubr.bf16.mxu0 0
      %3244 = vmatmul.mubr.bf16.gmra.mxu0 %v3151
      %v3245 = vpop.f32.mrf.mxu0
      %v3246 = vadd.f32 0.0, %v3245
      %v3247 = vpop.f32.mrf.mxu0
      %v3248 = vpop.f32.mrf.mxu0
      %v3249 = vadd.f32 0.0, %v3248
      %v3250 = vpop.f32.mrf.mxu0
      %3251 = vmatprep.mubr.bf16.mxu0 0
      %3252 = vmatmul.mubr.bf16.gmra.mxu0 %v3154
      %v3253 = vpop.f32.mrf.mxu0
      %v3254 = vadd.f32 0.0, %v3253
      %v3255 = vpop.f32.mrf.mxu0
      %v3256 = vpop.f32.mrf.mxu0
      %v3257 = vadd.f32 0.0, %v3256
      %v3258 = vpop.f32.mrf.mxu0
      %3259 = vmatprep.mubr.bf16.mxu0 0
      %3260 = vmatmul.mubr.bf16.gmra.mxu0 %v3157
      %v3261 = vpop.f32.mrf.mxu0
      %v3262 = vadd.f32 0.0, %v3261
      %v3263 = vpop.f32.mrf.mxu0
      %v3264 = vpop.f32.mrf.mxu0
      %v3265 = vadd.f32 0.0, %v3264
      %v3266 = vpop.f32.mrf.mxu0
      %3267 = vmatprep.mubr.bf16.mxu0 0
      %3268 = vmatmul.mubr.bf16.gmra.mxu0 %v3160
      %v3269 = vpop.f32.mrf.mxu0
      %v3270 = vadd.f32 0.0, %v3269
      %v3271 = vpop.f32.mrf.mxu0
      %v3272 = vpop.f32.mrf.mxu0
      %v3273 = vadd.f32 0.0, %v3272
      %v3274 = vpop.f32.mrf.mxu0
      %3275 = vmatprep.mubr.bf16.mxu0 0
      %3276 = vmatmul.mubr.bf16.gmra.mxu0 %v3163
      %v3277 = vpop.f32.mrf.mxu0
      %v3278 = vadd.f32 0.0, %v3277
      %v3279 = vpop.f32.mrf.mxu0
      %v3280 = vpop.f32.mrf.mxu0
      %v3281 = vadd.f32 0.0, %v3280
      %v3282 = vpop.f32.mrf.mxu0
      %3283 = vmatprep.mubr.bf16.mxu0 0
      %3284 = vmatmul.mubr.bf16.gmra.mxu0 %v3166
      %v3285 = vpop.f32.mrf.mxu0
      %v3286 = vadd.f32 0.0, %v3285
      %v3287 = vpop.f32.mrf.mxu0
      %v3288 = vpop.f32.mrf.mxu0
      %v3289 = vadd.f32 0.0, %v3288
      %v3290 = vpop.f32.mrf.mxu0
      %3291 = vmatprep.mubr.bf16.mxu0 0
      %3292 = vmatmul.mubr.bf16.gmra.mxu0 %v3169
      %v3293 = vpop.f32.mrf.mxu0
      %v3294 = vadd.f32 0.0, %v3293
      %v3295 = vpop.f32.mrf.mxu0
      %v3296 = vpop.f32.mrf.mxu0
      %v3297 = vadd.f32 0.0, %v3296
      %v3298 = vpop.f32.mrf.mxu0
      %3299 = vmatprep.mubr.bf16.mxu0 0
      %3300 = vmatmul.mubr.bf16.gmra.mxu0 %v3172
      %v3301 = vpop.f32.mrf.mxu0
      %v3302 = vadd.f32 0.0, %v3301
      %v3303 = vpop.f32.mrf.mxu0
      %v3304 = vpop.f32.mrf.mxu0
      %v3305 = vadd.f32 0.0, %v3304
      %v3306 = vpop.f32.mrf.mxu0
      %3307 = vmatprep.mubr.bf16.mxu0 0
      %3308 = vmatmul.mubr.bf16.gmra.mxu0 %v3175
      %v3309 = vpop.f32.mrf.mxu0
      %v3310 = vadd.f32 0.0, %v3309
      %v3311 = vpop.f32.mrf.mxu0
      %v3312 = vpop.f32.mrf.mxu0
      %v3313 = vadd.f32 0.0, %v3312
      %v3314 = vpop.f32.mrf.mxu0
      %3315 = vmatprep.mubr.bf16.mxu0 0
      %3316 = vmatmul.mubr.bf16.gmra.mxu0 %v3178
      %v3317 = vpop.f32.mrf.mxu0
      %v3318 = vadd.f32 0.0, %v3317
      %v3319 = vpop.f32.mrf.mxu0
      %v3320 = vpop.f32.mrf.mxu0
      %v3321 = vadd.f32 0.0, %v3320
      %v3322 = vpop.f32.mrf.mxu0
      %3323 = vmatprep.mubr.bf16.mxu0 0
      %3324 = vmatmul.mubr.bf16.gmra.mxu0 %v3181
      %v3325 = vpop.f32.mrf.mxu0
      %v3326 = vadd.f32 0.0, %v3325
      %v3327 = vpop.f32.mrf.mxu0
      %v3328 = vpop.f32.mrf.mxu0
      %v3329 = vadd.f32 0.0, %v3328
      %v3330 = vpop.f32.mrf.mxu0
      %3331 = vmatprep.mubr.bf16.mxu0 0
      %3332 = vmatmul.mubr.bf16.gmra.mxu0 %v3184
      %v3333 = vpop.f32.mrf.mxu0
      %v3334 = vadd.f32 0.0, %v3333
      %v3335 = vpop.f32.mrf.mxu0
      %v3336 = vpop.f32.mrf.mxu0
      %v3337 = vadd.f32 0.0, %v3336
      %v3338 = vpop.f32.mrf.mxu0
      %3339 = vmatprep.mubr.bf16.mxu0 0
      %3340 = vmatmul.mubr.bf16.gmra.mxu0 %v3187
      %v3341 = vpop.f32.mrf.mxu0
      %v3342 = vadd.f32 0.0, %v3341
      %v3343 = vpop.f32.mrf.mxu0
      %v3344 = vpop.f32.mrf.mxu0
      %v3345 = vadd.f32 0.0, %v3344
      %v3346 = vpop.f32.mrf.mxu0
      %3347 = vmatprep.mubr.bf16.mxu0 0
      %3348 = vmatmul.mubr.bf16.gmra.mxu0 %v3190
      %v3349 = vpop.f32.mrf.mxu0
      %v3350 = vadd.f32 0.0, %v3349
      %v3351 = vpop.f32.mrf.mxu0
      %v3352 = vpop.f32.mrf.mxu0
      %v3353 = vadd.f32 0.0, %v3352
      %v3354 = vpop.f32.mrf.mxu0
      %3355 = vdwg.mxu0
      %v3356 = vadd.f32 %v2998, %v3230
      %v3357 = vadd.f32 %v2999, %v3233
      %v3358 = vadd.f32 %v3000, %v3238
      %v3359 = vadd.f32 %v3001, %v3241
      %v3360 = vadd.f32 %v3002, %v3246
      %v3361 = vadd.f32 %v3003, %v3249
      %v3362 = vadd.f32 %v3004, %v3254
      %v3363 = vadd.f32 %v3005, %v3257
      %v3364 = vadd.f32 %v3006, %v3262
      %v3365 = vadd.f32 %v3007, %v3265
      %v3366 = vadd.f32 %v3008, %v3270
      %v3367 = vadd.f32 %v3009, %v3273
      %v3368 = vadd.f32 %v3010, %v3278
      %v3369 = vadd.f32 %v3011, %v3281
      %v3370 = vadd.f32 %v3012, %v3286
      %v3371 = vadd.f32 %v3013, %v3289
      %v3372 = vadd.f32 %v3014, %v3294
      %v3373 = vadd.f32 %v3015, %v3297
      %v3374 = vadd.f32 %v3016, %v3302
      %v3375 = vadd.f32 %v3017, %v3305
      %v3376 = vadd.f32 %v3018, %v3310
      %v3377 = vadd.f32 %v3019, %v3313
      %v3378 = vadd.f32 %v3020, %v3318
      %v3379 = vadd.f32 %v3021, %v3321
      %v3380 = vadd.f32 %v3022, %v3326
      %v3381 = vadd.f32 %v3023, %v3329
      %v3382 = vadd.f32 %v3024, %v3334
      %v3383 = vadd.f32 %v3025, %v3337
      %v3384 = vadd.f32 %v3026, %v3342
      %v3385 = vadd.f32 %v3027, %v3345
      %v3386 = vadd.f32 %v3028, %v3350
      %v3387 = vadd.f32 %v3029, %v3353
      %v3388 = vld [vmem:[%s575] sm:$0xf]
      %v3389 = vld [vmem:[%s575 + $0x4] sm:$0xf]
      %v3390 = vld [vmem:[%s575 + $0x8] sm:$0xf]
      %v3391 = vld [vmem:[%s575 + $0xc] sm:$0xf]
      %v3392 = vld [vmem:[%s575 + $0x10] sm:$0xf]
      %v3393 = vld [vmem:[%s575 + $0x14] sm:$0xf]
      %v3394 = vld [vmem:[%s575 + $0x18] sm:$0xf]
      %v3395 = vld [vmem:[%s575 + $0x1c] sm:$0xf]
      %v3396 = vld [vmem:[%s575 + $0x20] sm:$0xf]
      %v3397 = vld [vmem:[%s575 + $0x24] sm:$0xf]
      %v3398 = vld [vmem:[%s575 + $0x28] sm:$0xf]
      %v3399 = vld [vmem:[%s575 + $0x2c] sm:$0xf]
      %v3400 = vld [vmem:[%s575 + $0x30] sm:$0xf]
      %v3401 = vld [vmem:[%s575 + $0x34] sm:$0xf]
      %v3402 = vld [vmem:[%s575 + $0x38] sm:$0xf]
      %v3403 = vld [vmem:[%s575 + $0x3c] sm:$0xf]
      %v3404 = vld [vmem:[%s575 + $0x40] sm:$0xf]
      %v3405 = vld [vmem:[%s575 + $0x44] sm:$0xf]
      %v3406 = vld [vmem:[%s575 + $0x48] sm:$0xf]
      %v3407 = vld [vmem:[%s575 + $0x4c] sm:$0xf]
      %v3408 = vld [vmem:[%s575 + $0x50] sm:$0xf]
      %v3409 = vld [vmem:[%s575 + $0x54] sm:$0xf]
      %v3410 = vld [vmem:[%s575 + $0x58] sm:$0xf]
      %v3411 = vld [vmem:[%s575 + $0x5c] sm:$0xf]
      %v3412 = vld [vmem:[%s575 + $0x60] sm:$0xf]
      %v3413 = vld [vmem:[%s575 + $0x64] sm:$0xf]
      %v3414 = vld [vmem:[%s575 + $0x68] sm:$0xf]
      %v3415 = vld [vmem:[%s575 + $0x6c] sm:$0xf]
      %v3416 = vld [vmem:[%s575 + $0x70] sm:$0xf]
      %v3417 = vld [vmem:[%s575 + $0x74] sm:$0xf]
      %v3418 = vld [vmem:[%s575 + $0x78] sm:$0xf]
      %v3419 = vld [vmem:[%s575 + $0x7c] sm:$0xf]
      %s3420 = scalar_lea.vmem %s9, 32
      %v3421 = vld [vmem:[%s3420] sm:$0xf]
      %v3454 = vunpack.c.l.b16 %v3388
      %v3455 = vunpack.c.l.b16 %v3389
      %v3456 = vunpack.c.l.b16 %v3390
      %v3457 = vunpack.c.l.b16 %v3391
      %v3458 = vunpack.c.l.b16 %v3392
      %v3459 = vunpack.c.l.b16 %v3393
      %v3460 = vunpack.c.l.b16 %v3394
      %v3461 = vunpack.c.l.b16 %v3395
      %v3462 = vunpack.c.l.b16 %v3396
      %v3463 = vunpack.c.l.b16 %v3397
      %v3464 = vunpack.c.l.b16 %v3398
      %v3465 = vunpack.c.l.b16 %v3399
      %v3466 = vunpack.c.l.b16 %v3400
      %v3467 = vunpack.c.l.b16 %v3401
      %v3468 = vunpack.c.l.b16 %v3402
      %v3469 = vunpack.c.l.b16 %v3403
      %v3470 = vunpack.c.l.b16 %v3404
      %v3471 = vunpack.c.l.b16 %v3405
      %v3472 = vunpack.c.l.b16 %v3406
      %v3473 = vunpack.c.l.b16 %v3407
      %v3474 = vunpack.c.l.b16 %v3408
      %v3475 = vunpack.c.l.b16 %v3409
      %v3476 = vunpack.c.l.b16 %v3410
      %v3477 = vunpack.c.l.b16 %v3411
      %v3478 = vunpack.c.l.b16 %v3412
      %v3479 = vunpack.c.l.b16 %v3413
      %v3480 = vunpack.c.l.b16 %v3414
      %v3481 = vunpack.c.l.b16 %v3415
      %v3482 = vunpack.c.l.b16 %v3416
      %v3483 = vunpack.c.l.b16 %v3417
      %v3484 = vunpack.c.l.b16 %v3418
      %v3485 = vunpack.c.l.b16 %v3419
      %v3486 = vpack.c.b16 %v3455, %v3454
      %v3487 = vpack.c.b16 %v3457, %v3456
      %v3488 = vpack.c.b16 %v3459, %v3458
      %v3489 = vpack.c.b16 %v3461, %v3460
      %v3490 = vpack.c.b16 %v3463, %v3462
      %v3491 = vpack.c.b16 %v3465, %v3464
      %v3492 = vpack.c.b16 %v3467, %v3466
      %v3493 = vpack.c.b16 %v3469, %v3468
      %v3494 = vpack.c.b16 %v3471, %v3470
      %v3495 = vpack.c.b16 %v3473, %v3472
      %v3496 = vpack.c.b16 %v3475, %v3474
      %v3497 = vpack.c.b16 %v3477, %v3476
      %v3498 = vpack.c.b16 %v3479, %v3478
      %v3499 = vpack.c.b16 %v3481, %v3480
      %v3500 = vpack.c.b16 %v3483, %v3482
      %v3501 = vpack.c.b16 %v3485, %v3484
      %v3503 = vsel %vm734, %v3486, 0
      %v3506 = vsel %vm734, %v3487, 0
      %v3509 = vsel %vm734, %v3488, 0
      %v3512 = vsel %vm734, %v3489, 0
      %v3515 = vsel %vm734, %v3490, 0
      %v3518 = vsel %vm734, %v3491, 0
      %v3521 = vsel %vm734, %v3492, 0
      %v3524 = vsel %vm734, %v3493, 0
      %v3527 = vsel %vm734, %v3494, 0
      %v3530 = vsel %vm734, %v3495, 0
      %v3533 = vsel %vm734, %v3496, 0
      %v3536 = vsel %vm734, %v3497, 0
      %v3539 = vsel %vm734, %v3498, 0
      %v3542 = vsel %vm734, %v3499, 0
      %v3545 = vsel %vm734, %v3500, 0
      %v3548 = vsel %vm734, %v3501, 0
      %v3551 = vsel %vm783, %v3421, 0
      %3553 = vmatprep.subr.bf16.mxu0 0
      %3554 = vmatpush1.bf16.msra.mxu0 0
      %3555 = vmatprep.subr.bf16.mxu0 0
      %3556 = vmatpush1.bf16.msra.mxu0 0
      %3557 = vmatprep.subr.bf16.mxu0 0
      %3558 = vmatpush1.bf16.msra.mxu0 0
      %3559 = vmatprep.subr.bf16.mxu0 0
      %3560 = vmatpush1.bf16.msra.mxu0 0
      %3561 = vmatprep.subr.bf16.mxu0 0
      %3562 = vmatpush1.bf16.msra.mxu0 0
      %3563 = vmatprep.subr.bf16.mxu0 0
      %3564 = vmatpush1.bf16.msra.mxu0 0
      %3565 = vmatprep.subr.bf16.mxu0 0
      %3566 = vmatpush1.bf16.msra.mxu0 0
      %3567 = vmatprep.subr.bf16.mxu0 0
      %3568 = vmatpush1.bf16.msra.mxu0 %v3551
      %3569 = vmatprep.subr.bf16.mxu0 0
      %3570 = vmatpush2.bf16.msra.mxu0 0
      %3571 = vmatprep.subr.bf16.mxu0 0
      %3572 = vmatpush2.bf16.msra.mxu0 0
      %3573 = vmatprep.subr.bf16.mxu0 0
      %3574 = vmatpush2.bf16.msra.mxu0 0
      %3575 = vmatprep.subr.bf16.mxu0 0
      %3576 = vmatpush2.bf16.msra.mxu0 0
      %3577 = vmatprep.subr.bf16.mxu0 0
      %3578 = vmatpush2.bf16.msra.mxu0 0
      %3579 = vmatprep.subr.bf16.mxu0 0
      %3580 = vmatpush2.bf16.msra.mxu0 0
      %3581 = vmatprep.subr.bf16.mxu0 0
      %3582 = vmatpush2.bf16.msra.mxu0 0
      %3583 = vmatprep.subr.bf16.mxu0 0
      %3584 = vmatpush2.bf16.msra.mxu0 0
      %3585 = vmatprep.mubr.bf16.mxu0 0
      %3586 = vmatmul.mubr.bf16.gmra.mxu0 %v3503
      %v3587 = vpop.f32.mrf.mxu0
      %v3588 = vadd.f32 0.0, %v3587
      %v3589 = vpop.f32.mrf.mxu0
      %v3590 = vpop.f32.mrf.mxu0
      %v3591 = vadd.f32 0.0, %v3590
      %v3592 = vpop.f32.mrf.mxu0
      %3593 = vmatprep.mubr.bf16.mxu0 0
      %3594 = vmatmul.mubr.bf16.gmra.mxu0 %v3506
      %v3595 = vpop.f32.mrf.mxu0
      %v3596 = vadd.f32 0.0, %v3595
      %v3597 = vpop.f32.mrf.mxu0
      %v3598 = vpop.f32.mrf.mxu0
      %v3599 = vadd.f32 0.0, %v3598
      %v3600 = vpop.f32.mrf.mxu0
      %3601 = vmatprep.mubr.bf16.mxu0 0
      %3602 = vmatmul.mubr.bf16.gmra.mxu0 %v3509
      %v3603 = vpop.f32.mrf.mxu0
      %v3604 = vadd.f32 0.0, %v3603
      %v3605 = vpop.f32.mrf.mxu0
      %v3606 = vpop.f32.mrf.mxu0
      %v3607 = vadd.f32 0.0, %v3606
      %v3608 = vpop.f32.mrf.mxu0
      %3609 = vmatprep.mubr.bf16.mxu0 0
      %3610 = vmatmul.mubr.bf16.gmra.mxu0 %v3512
      %v3611 = vpop.f32.mrf.mxu0
      %v3612 = vadd.f32 0.0, %v3611
      %v3613 = vpop.f32.mrf.mxu0
      %v3614 = vpop.f32.mrf.mxu0
      %v3615 = vadd.f32 0.0, %v3614
      %v3616 = vpop.f32.mrf.mxu0
      %3617 = vmatprep.mubr.bf16.mxu0 0
      %3618 = vmatmul.mubr.bf16.gmra.mxu0 %v3515
      %v3619 = vpop.f32.mrf.mxu0
      %v3620 = vadd.f32 0.0, %v3619
      %v3621 = vpop.f32.mrf.mxu0
      %v3622 = vpop.f32.mrf.mxu0
      %v3623 = vadd.f32 0.0, %v3622
      %v3624 = vpop.f32.mrf.mxu0
      %3625 = vmatprep.mubr.bf16.mxu0 0
      %3626 = vmatmul.mubr.bf16.gmra.mxu0 %v3518
      %v3627 = vpop.f32.mrf.mxu0
      %v3628 = vadd.f32 0.0, %v3627
      %v3629 = vpop.f32.mrf.mxu0
      %v3630 = vpop.f32.mrf.mxu0
      %v3631 = vadd.f32 0.0, %v3630
      %v3632 = vpop.f32.mrf.mxu0
      %3633 = vmatprep.mubr.bf16.mxu0 0
      %3634 = vmatmul.mubr.bf16.gmra.mxu0 %v3521
      %v3635 = vpop.f32.mrf.mxu0
      %v3636 = vadd.f32 0.0, %v3635
      %v3637 = vpop.f32.mrf.mxu0
      %v3638 = vpop.f32.mrf.mxu0
      %v3639 = vadd.f32 0.0, %v3638
      %v3640 = vpop.f32.mrf.mxu0
      %3641 = vmatprep.mubr.bf16.mxu0 0
      %3642 = vmatmul.mubr.bf16.gmra.mxu0 %v3524
      %v3643 = vpop.f32.mrf.mxu0
      %v3644 = vadd.f32 0.0, %v3643
      %v3645 = vpop.f32.mrf.mxu0
      %v3646 = vpop.f32.mrf.mxu0
      %v3647 = vadd.f32 0.0, %v3646
      %v3648 = vpop.f32.mrf.mxu0
      %3649 = vmatprep.mubr.bf16.mxu0 0
      %3650 = vmatmul.mubr.bf16.gmra.mxu0 %v3527
      %v3651 = vpop.f32.mrf.mxu0
      %v3652 = vadd.f32 0.0, %v3651
      %v3653 = vpop.f32.mrf.mxu0
      %v3654 = vpop.f32.mrf.mxu0
      %v3655 = vadd.f32 0.0, %v3654
      %v3656 = vpop.f32.mrf.mxu0
      %3657 = vmatprep.mubr.bf16.mxu0 0
      %3658 = vmatmul.mubr.bf16.gmra.mxu0 %v3530
      %v3659 = vpop.f32.mrf.mxu0
      %v3660 = vadd.f32 0.0, %v3659
      %v3661 = vpop.f32.mrf.mxu0
      %v3662 = vpop.f32.mrf.mxu0
      %v3663 = vadd.f32 0.0, %v3662
      %v3664 = vpop.f32.mrf.mxu0
      %3665 = vmatprep.mubr.bf16.mxu0 0
      %3666 = vmatmul.mubr.bf16.gmra.mxu0 %v3533
      %v3667 = vpop.f32.mrf.mxu0
      %v3668 = vadd.f32 0.0, %v3667
      %v3669 = vpop.f32.mrf.mxu0
      %v3670 = vpop.f32.mrf.mxu0
      %v3671 = vadd.f32 0.0, %v3670
      %v3672 = vpop.f32.mrf.mxu0
      %3673 = vmatprep.mubr.bf16.mxu0 0
      %3674 = vmatmul.mubr.bf16.gmra.mxu0 %v3536
      %v3675 = vpop.f32.mrf.mxu0
      %v3676 = vadd.f32 0.0, %v3675
      %v3677 = vpop.f32.mrf.mxu0
      %v3678 = vpop.f32.mrf.mxu0
      %v3679 = vadd.f32 0.0, %v3678
      %v3680 = vpop.f32.mrf.mxu0
      %3681 = vmatprep.mubr.bf16.mxu0 0
      %3682 = vmatmul.mubr.bf16.gmra.mxu0 %v3539
      %v3683 = vpop.f32.mrf.mxu0
      %v3684 = vadd.f32 0.0, %v3683
      %v3685 = vpop.f32.mrf.mxu0
      %v3686 = vpop.f32.mrf.mxu0
      %v3687 = vadd.f32 0.0, %v3686
      %v3688 = vpop.f32.mrf.mxu0
      %3689 = vmatprep.mubr.bf16.mxu0 0
      %3690 = vmatmul.mubr.bf16.gmra.mxu0 %v3542
      %v3691 = vpop.f32.mrf.mxu0
      %v3692 = vadd.f32 0.0, %v3691
      %v3693 = vpop.f32.mrf.mxu0
      %v3694 = vpop.f32.mrf.mxu0
      %v3695 = vadd.f32 0.0, %v3694
      %v3696 = vpop.f32.mrf.mxu0
      %3697 = vmatprep.mubr.bf16.mxu0 0
      %3698 = vmatmul.mubr.bf16.gmra.mxu0 %v3545
      %v3699 = vpop.f32.mrf.mxu0
      %v3700 = vadd.f32 0.0, %v3699
      %v3701 = vpop.f32.mrf.mxu0
      %v3702 = vpop.f32.mrf.mxu0
      %v3703 = vadd.f32 0.0, %v3702
      %v3704 = vpop.f32.mrf.mxu0
      %3705 = vmatprep.mubr.bf16.mxu0 0
      %3706 = vmatmul.mubr.bf16.gmra.mxu0 %v3548
      %v3707 = vpop.f32.mrf.mxu0
      %v3708 = vadd.f32 0.0, %v3707
      %v3709 = vpop.f32.mrf.mxu0
      %v3710 = vpop.f32.mrf.mxu0
      %v3711 = vadd.f32 0.0, %v3710
      %v3712 = vpop.f32.mrf.mxu0
      %3713 = vdwg.mxu0
      %v3714 = vadd.f32 %v3356, %v3588
      %v3715 = vadd.f32 %v3357, %v3591
      %v3716 = vadd.f32 %v3358, %v3596
      %v3717 = vadd.f32 %v3359, %v3599
      %v3718 = vadd.f32 %v3360, %v3604
      %v3719 = vadd.f32 %v3361, %v3607
      %v3720 = vadd.f32 %v3362, %v3612
      %v3721 = vadd.f32 %v3363, %v3615
      %v3722 = vadd.f32 %v3364, %v3620
      %v3723 = vadd.f32 %v3365, %v3623
      %v3724 = vadd.f32 %v3366, %v3628
      %v3725 = vadd.f32 %v3367, %v3631
      %v3726 = vadd.f32 %v3368, %v3636
      %v3727 = vadd.f32 %v3369, %v3639
      %v3728 = vadd.f32 %v3370, %v3644
      %v3729 = vadd.f32 %v3371, %v3647
      %v3730 = vadd.f32 %v3372, %v3652
      %v3731 = vadd.f32 %v3373, %v3655
      %v3732 = vadd.f32 %v3374, %v3660
      %v3733 = vadd.f32 %v3375, %v3663
      %v3734 = vadd.f32 %v3376, %v3668
      %v3735 = vadd.f32 %v3377, %v3671
      %v3736 = vadd.f32 %v3378, %v3676
      %v3737 = vadd.f32 %v3379, %v3679
      %v3738 = vadd.f32 %v3380, %v3684
      %v3739 = vadd.f32 %v3381, %v3687
      %v3740 = vadd.f32 %v3382, %v3692
      %v3741 = vadd.f32 %v3383, %v3695
      %v3742 = vadd.f32 %v3384, %v3700
      %v3743 = vadd.f32 %v3385, %v3703
      %v3744 = vadd.f32 %v3386, %v3708
      %v3745 = vadd.f32 %v3387, %v3711
      %v3746 = vld [vmem:[%s10] sm:$0x1]
      %v3748 = vlaneseq
      %v3749 = vshrl.u32 %v3748, 7
      %v3750 = vsub.s32 0, %v3749
      %v3751 = vrot.slane %v3746, %v3750
      %v3753 = vadd.f32 %v3714, %v3751
      %v3754 = vadd.f32 %v3715, %v3751
      %v3755 = vadd.f32 %v3716, %v3751
      %v3756 = vadd.f32 %v3717, %v3751
      %v3757 = vadd.f32 %v3718, %v3751
      %v3758 = vadd.f32 %v3719, %v3751
      %v3759 = vadd.f32 %v3720, %v3751
      %v3760 = vadd.f32 %v3721, %v3751
      %v3761 = vadd.f32 %v3722, %v3751
      %v3762 = vadd.f32 %v3723, %v3751
      %v3763 = vadd.f32 %v3724, %v3751
      %v3764 = vadd.f32 %v3725, %v3751
      %v3765 = vadd.f32 %v3726, %v3751
      %v3766 = vadd.f32 %v3727, %v3751
      %v3767 = vadd.f32 %v3728, %v3751
      %v3768 = vadd.f32 %v3729, %v3751
      %v3769 = vadd.f32 %v3730, %v3751
      %v3770 = vadd.f32 %v3731, %v3751
      %v3771 = vadd.f32 %v3732, %v3751
      %v3772 = vadd.f32 %v3733, %v3751
      %v3773 = vadd.f32 %v3734, %v3751
      %v3774 = vadd.f32 %v3735, %v3751
      %v3775 = vadd.f32 %v3736, %v3751
      %v3776 = vadd.f32 %v3737, %v3751
      %v3777 = vadd.f32 %v3738, %v3751
      %v3778 = vadd.f32 %v3739, %v3751
      %v3779 = vadd.f32 %v3740, %v3751
      %v3780 = vadd.f32 %v3741, %v3751
      %v3781 = vadd.f32 %v3742, %v3751
      %v3782 = vadd.f32 %v3743, %v3751
      %v3783 = vadd.f32 %v3744, %v3751
      %v3784 = vadd.f32 %v3745, %v3751
      %v3785 = vmax.f32 %v3753, 0.0
      %v3786 = vmax.f32 %v3754, 0.0
      %v3787 = vmax.f32 %v3755, 0.0
      %v3788 = vmax.f32 %v3756, 0.0
      %v3789 = vmax.f32 %v3757, 0.0
      %v3790 = vmax.f32 %v3758, 0.0
      %v3791 = vmax.f32 %v3759, 0.0
      %v3792 = vmax.f32 %v3760, 0.0
      %v3793 = vmax.f32 %v3761, 0.0
      %v3794 = vmax.f32 %v3762, 0.0
      %v3795 = vmax.f32 %v3763, 0.0
      %v3796 = vmax.f32 %v3764, 0.0
      %v3797 = vmax.f32 %v3765, 0.0
      %v3798 = vmax.f32 %v3766, 0.0
      %v3799 = vmax.f32 %v3767, 0.0
      %v3800 = vmax.f32 %v3768, 0.0
      %v3801 = vmax.f32 %v3769, 0.0
      %v3802 = vmax.f32 %v3770, 0.0
      %v3803 = vmax.f32 %v3771, 0.0
      %v3804 = vmax.f32 %v3772, 0.0
      %v3805 = vmax.f32 %v3773, 0.0
      %v3806 = vmax.f32 %v3774, 0.0
      %v3807 = vmax.f32 %v3775, 0.0
      %v3808 = vmax.f32 %v3776, 0.0
      %v3809 = vmax.f32 %v3777, 0.0
      %v3810 = vmax.f32 %v3778, 0.0
      %v3811 = vmax.f32 %v3779, 0.0
      %v3812 = vmax.f32 %v3780, 0.0
      %v3813 = vmax.f32 %v3781, 0.0
      %v3814 = vmax.f32 %v3782, 0.0
      %v3815 = vmax.f32 %v3783, 0.0
      %v3816 = vmax.f32 %v3784, 0.0
      %v3817 = vpack.c.bf16 %v3786, %v3785
      %v3818 = vpack.c.bf16 %v3788, %v3787
      %v3819 = vpack.c.bf16 %v3790, %v3789
      %v3820 = vpack.c.bf16 %v3792, %v3791
      %v3821 = vpack.c.bf16 %v3794, %v3793
      %v3822 = vpack.c.bf16 %v3796, %v3795
      %v3823 = vpack.c.bf16 %v3798, %v3797
      %v3824 = vpack.c.bf16 %v3800, %v3799
      %v3825 = vpack.c.bf16 %v3802, %v3801
      %v3826 = vpack.c.bf16 %v3804, %v3803
      %v3827 = vpack.c.bf16 %v3806, %v3805
      %v3828 = vpack.c.bf16 %v3808, %v3807
      %v3829 = vpack.c.bf16 %v3810, %v3809
      %v3830 = vpack.c.bf16 %v3812, %v3811
      %v3831 = vpack.c.bf16 %v3814, %v3813
      %v3832 = vpack.c.bf16 %v3816, %v3815
      %v3849 = vunpack.c.l.b16 %v3817
      %v3850 = vunpack.c.h.b16 %v3817
      %v3851 = vunpack.c.l.b16 %v3818
      %v3852 = vunpack.c.h.b16 %v3818
      %v3853 = vunpack.c.l.b16 %v3819
      %v3854 = vunpack.c.h.b16 %v3819
      %v3855 = vunpack.c.l.b16 %v3820
      %v3856 = vunpack.c.h.b16 %v3820
      %v3857 = vunpack.c.l.b16 %v3821
      %v3858 = vunpack.c.h.b16 %v3821
      %v3859 = vunpack.c.l.b16 %v3822
      %v3860 = vunpack.c.h.b16 %v3822
      %v3861 = vunpack.c.l.b16 %v3823
      %v3862 = vunpack.c.h.b16 %v3823
      %v3863 = vunpack.c.l.b16 %v3824
      %v3864 = vunpack.c.h.b16 %v3824
      %v3865 = vunpack.c.l.b16 %v3825
      %v3866 = vunpack.c.h.b16 %v3825
      %v3867 = vunpack.c.l.b16 %v3826
      %v3868 = vunpack.c.h.b16 %v3826
      %v3869 = vunpack.c.l.b16 %v3827
      %v3870 = vunpack.c.h.b16 %v3827
      %v3871 = vunpack.c.l.b16 %v3828
      %v3872 = vunpack.c.h.b16 %v3828
      %v3873 = vunpack.c.l.b16 %v3829
      %v3874 = vunpack.c.h.b16 %v3829
      %v3875 = vunpack.c.l.b16 %v3830
      %v3876 = vunpack.c.h.b16 %v3830
      %v3877 = vunpack.c.l.b16 %v3831
      %v3878 = vunpack.c.h.b16 %v3831
      %v3879 = vunpack.c.l.b16 %v3832
      %v3880 = vunpack.c.h.b16 %v3832
      %v3881 = vpack.c.b16 %v3849, %v3849
      %v3882 = vpack.c.b16 %v3850, %v3850
      %v3883 = vpack.c.b16 %v3851, %v3851
      %v3884 = vpack.c.b16 %v3852, %v3852
      %v3885 = vpack.c.b16 %v3853, %v3853
      %v3886 = vpack.c.b16 %v3854, %v3854
      %v3887 = vpack.c.b16 %v3855, %v3855
      %v3888 = vpack.c.b16 %v3856, %v3856
      %v3889 = vpack.c.b16 %v3857, %v3857
      %v3890 = vpack.c.b16 %v3858, %v3858
      %v3891 = vpack.c.b16 %v3859, %v3859
      %v3892 = vpack.c.b16 %v3860, %v3860
      %v3893 = vpack.c.b16 %v3861, %v3861
      %v3894 = vpack.c.b16 %v3862, %v3862
      %v3895 = vpack.c.b16 %v3863, %v3863
      %v3896 = vpack.c.b16 %v3864, %v3864
      %v3897 = vpack.c.b16 %v3865, %v3865
      %v3898 = vpack.c.b16 %v3866, %v3866
      %v3899 = vpack.c.b16 %v3867, %v3867
      %v3900 = vpack.c.b16 %v3868, %v3868
      %v3901 = vpack.c.b16 %v3869, %v3869
      %v3902 = vpack.c.b16 %v3870, %v3870
      %v3903 = vpack.c.b16 %v3871, %v3871
      %v3904 = vpack.c.b16 %v3872, %v3872
      %v3905 = vpack.c.b16 %v3873, %v3873
      %v3906 = vpack.c.b16 %v3874, %v3874
      %v3907 = vpack.c.b16 %v3875, %v3875
      %v3908 = vpack.c.b16 %v3876, %v3876
      %v3909 = vpack.c.b16 %v3877, %v3877
      %v3910 = vpack.c.b16 %v3878, %v3878
      %v3911 = vpack.c.b16 %v3879, %v3879
      %v3912 = vpack.c.b16 %v3880, %v3880
      %vm3945 = vcmask 257024
      %3946 = vst.msk [vmem:[%s584] sm:$0xf] %vm3945, %v3881
      %3947 = vst.msk [vmem:[%s584 + $0x4] sm:$0xf] %vm3945, %v3882
      %3948 = vst.msk [vmem:[%s584 + $0x8] sm:$0xf] %vm3945, %v3883
      %3949 = vst.msk [vmem:[%s584 + $0xc] sm:$0xf] %vm3945, %v3884
      %3950 = vst.msk [vmem:[%s584 + $0x10] sm:$0xf] %vm3945, %v3885
      %3951 = vst.msk [vmem:[%s584 + $0x14] sm:$0xf] %vm3945, %v3886
      %3952 = vst.msk [vmem:[%s584 + $0x18] sm:$0xf] %vm3945, %v3887
      %3953 = vst.msk [vmem:[%s584 + $0x1c] sm:$0xf] %vm3945, %v3888
      %3954 = vst.msk [vmem:[%s584 + $0x20] sm:$0xf] %vm3945, %v3889
      %3955 = vst.msk [vmem:[%s584 + $0x24] sm:$0xf] %vm3945, %v3890
      %3956 = vst.msk [vmem:[%s584 + $0x28] sm:$0xf] %vm3945, %v3891
      %3957 = vst.msk [vmem:[%s584 + $0x2c] sm:$0xf] %vm3945, %v3892
      %3958 = vst.msk [vmem:[%s584 + $0x30] sm:$0xf] %vm3945, %v3893
      %3959 = vst.msk [vmem:[%s584 + $0x34] sm:$0xf] %vm3945, %v3894
      %3960 = vst.msk [vmem:[%s584 + $0x38] sm:$0xf] %vm3945, %v3895
      %3961 = vst.msk [vmem:[%s584 + $0x3c] sm:$0xf] %vm3945, %v3896
      %3962 = vst.msk [vmem:[%s584 + $0x40] sm:$0xf] %vm3945, %v3897
      %3963 = vst.msk [vmem:[%s584 + $0x44] sm:$0xf] %vm3945, %v3898
      %3964 = vst.msk [vmem:[%s584 + $0x48] sm:$0xf] %vm3945, %v3899
      %3965 = vst.msk [vmem:[%s584 + $0x4c] sm:$0xf] %vm3945, %v3900
      %3966 = vst.msk [vmem:[%s584 + $0x50] sm:$0xf] %vm3945, %v3901
      %3967 = vst.msk [vmem:[%s584 + $0x54] sm:$0xf] %vm3945, %v3902
      %3968 = vst.msk [vmem:[%s584 + $0x58] sm:$0xf] %vm3945, %v3903
      %3969 = vst.msk [vmem:[%s584 + $0x5c] sm:$0xf] %vm3945, %v3904
      %3970 = vst.msk [vmem:[%s584 + $0x60] sm:$0xf] %vm3945, %v3905
      %3971 = vst.msk [vmem:[%s584 + $0x64] sm:$0xf] %vm3945, %v3906
      %3972 = vst.msk [vmem:[%s584 + $0x68] sm:$0xf] %vm3945, %v3907
      %3973 = vst.msk [vmem:[%s584 + $0x6c] sm:$0xf] %vm3945, %v3908
      %3974 = vst.msk [vmem:[%s584 + $0x70] sm:$0xf] %vm3945, %v3909
      %3975 = vst.msk [vmem:[%s584 + $0x74] sm:$0xf] %vm3945, %v3910
      %3976 = vst.msk [vmem:[%s584 + $0x78] sm:$0xf] %vm3945, %v3911
      %3977 = vst.msk [vmem:[%s584 + $0x7c] sm:$0xf] %vm3945, %v3912
      %s3978 = smul.u32 32, %s26
      %p3979 = scmp.lt.s32.totalorder %s3978, 351
      %s3980 = scalar_select %p3979, %s3978, 351
      %p3981 = scmp.lt.s32.totalorder %s27, 0
      %s3982 = scalar_select %p3981, %s27, 0
      %s3983 = sadd.s32 %s3982, %s3980
      %s3984 = smul.addr %s3983, 4
      %s3985 = scalar_lea.vmem %s11, %s3984
      // Predicated region
      $region65: #{_conv_taps.1} parent=63 // pred_check
        %p3986 = pneg %p330
      $region66: #{_conv_taps.1} parent=63 // pred_check_branch
        %3988 = sbr.rel (%p3986) target = $region68
      $region67: #{_conv_taps.1} parent=63 // pred_region
        %s3989 = smul.u32 32, %s26
      $region68: #{_conv_taps.1} parent=63 // pred_fallthru
        _
    $region64: #{_conv_taps.1} parent=5 // pred_fallthru
      _
    %p3990 = scmp.le.s32.totalorder 2, %s17
    // Predicated region
    $region69: #{_conv_taps.1} parent=5 // pred_check
      %p3991 = pneg %p3990
    $region70: #{_conv_taps.1} parent=5 // pred_check_branch
      %3993 = sbr.rel (%p3991) target = $region72
    $region71: #{_conv_taps.1} parent=5 // pred_region
      %s3994 = ssub.s32 %s17, 2
      // Predicated region
      $region73: #{_conv_taps.1} parent=71 // pred_check
        %p3995 = pneg %p336
      $region74: #{_conv_taps.1} parent=71 // pred_check_branch
        %3997 = sbr.rel (%p3995) target = $region76
      $region75: #{_conv_taps.1} parent=71 // pred_region
        %s3998 = smul.u32 32, %s28
        %p3999 = scmp.lt.s32.totalorder %s3998, 351
        %s4000 = scalar_select %p3999, %s3998, 351
        %p4001 = scmp.lt.s32.totalorder %s29, 0
        %s4002 = scalar_select %p4001, %s29, 0
        %s4003 = sadd.s32 %s4002, %s4000
        %s4004 = smul.addr %s4003, 4
        %s4005 = scalar_lea.vmem %s11, %s4004
      $region76: #{_conv_taps.1} parent=71 // pred_fallthru
        _
    $region72: #{_conv_taps.1} parent=5 // pred_fallthru
      _
  $region6: #{_conv_taps.1} parent=0 // loop_footer
    %s21 = sadd.s32 1, %s17
  $region7: #{_conv_taps.1} parent=0 // loop_footer_branch
    %16 = sbr.rel target = $region3
  $region8: #{_conv_taps.1} parent=0 // loop_exit
    _

</llo_original>
